<compile_context>
chip_gen: v5e
topology: v5e:2x2
jax: 0.10.0
libtpu: 0.0.40
codegen_flags: <defaults>
</compile_context>

<pallas_src>
import functools

import jax
import jax.numpy as jnp
import numpy as np
from jax.experimental import pallas as pl
from jax.experimental.pallas import tpu as pltpu


def _make_convlstm_kernel(k, tile_rows, w_img, nh, kpad):
    """Builds the kernel closure for a static (filter, tile, width, pad) config."""
    m = tile_rows * w_img          # rows of the im2col matrix handled per grid step

    def kernel(xh_ref, c_ref, w_ref, out_ref, acc_ref):
        # xh_ref : (1, (H+2p)*W, KPAD) bf16  wrapper-built kw-im2col columns of the
        #          padded [x|h] image; constant index map over the row-tile axis,
        #          so it is DMA'd once per batch element and stays VMEM-resident.
        # c_ref  : (1, M, NH)  f32           c_t rows of this row tile.
        # w_ref  : (K, KPAD, 4*NH) bf16      fused conv_x|conv_h weights grouped by
        #          kernel row kh; rows ordered (kw, [x-ch, h-ch]), zero-padded to
        #          KPAD; g-gate columns pre-scaled by 2 (tanh(x) = 2*sigmoid(2x)-1).
        # out_ref: (1, M, 2*NH) f32          [h_new | c_new], split by the wrapper.
        # acc_ref: (M, 4*NH) f32 VMEM scratch gate accumulator.
        ri = pl.program_id(1)
        row0 = pl.multiple_of(ri * tile_rows, tile_rows)

        # K MXU matmuls, one per kernel row kh, each with lane-dense K = KPAD.
        for kh in range(k):
            start = pl.multiple_of((row0 + kh) * w_img, w_img)
            lhs = xh_ref[0, pl.ds(start, m), :]                   # (M, KPAD) bf16
            part = jnp.dot(lhs, w_ref[kh],
                           preferred_element_type=jnp.float32)    # (M, 4*NH) f32
            if kh == 0:
                acc_ref[...] = part
            else:
                acc_ref[...] += part

        gates = acc_ref[...]                                      # (M, 4*NH) f32
        # One full-width (128-lane) sigmoid; g lanes carry 2x-scaled pre-activations
        # so g_t = tanh(.) = 2*sigmoid(2*.) - 1. No masked dual-transcendental path.
        sig = 1.0 / (1.0 + jnp.exp(-gates))
        i_t = sig[:, 0 * nh:1 * nh]
        f_t = sig[:, 1 * nh:2 * nh]
        g_t = 2.0 * sig[:, 2 * nh:3 * nh] - 1.0
        o_t = sig[:, 3 * nh:4 * nh]

        c_prev = c_ref[0]
        c_new = f_t * c_prev + i_t * g_t
        h_new = o_t * g_t   # exact PyTorch forward: o_t * g_t (not tanh(c_new)), no forget bias

        # Single lane-denser store: [h_new | c_new] -> (M, 2*NH).
        out_ref[0] = jnp.concatenate([h_new, c_new], axis=-1)

    return kernel


@functools.partial(jax.jit, static_argnames=("filter_size", "tile_rows"))
def convlstm_cell_forward(x_t, h_t, c_t, w_x, w_h, filter_size, tile_rows=None):
    """PyTorch-equivalent ConvLSTMCell.forward (stride=1, layer_norm=False, no bias).

    x_t: (B, Cin, H, W); h_t, c_t: (B, NH, H, W)   -- NCHW like the PyTorch module.
    w_x: (K, K, Cin, 4*NH); w_h: (K, K, NH, 4*NH)  -- HWIO weights, gate order (i,f,g,o).
    Returns (h_new, c_new) in NCHW.
    """
    b, cin, h_img, w_img = x_t.shape
    nh = c_t.shape[1]
    k = filter_size
    p = k // 2
    cxh = cin + nh
    kcols = k * cxh
    kpad = -(-kcols // 128) * 128     # lane-pad contraction dim to a multiple of 128

    # Whole image per grid step by default (M = H*W): fewest, fattest steps.
    # grid = (B, 1) keeps one batch element per step so v7x's 2 TCs both get work.
    if tile_rows is None or h_img % tile_rows != 0:
        tile_rows = h_img
    m = tile_rows * w_img
    assert m % 8 == 0, "tile_rows * W must be a multiple of 8 (sublane tiling)"
    n_row_tiles = h_img // tile_rows

    # ---- wrapper-side glue (pure XLA) ---------------------------------------
    # NCHW -> NHWC, fuse x|h along channels, bf16 cast, spatial zero-pad.
    xh = jnp.concatenate([jnp.transpose(x_t, (0, 2, 3, 1)),
                          jnp.transpose(h_t, (0, 2, 3, 1))],
                         axis=-1).astype(jnp.bfloat16)                  # (B,H,W,CXH)
    xh_pad = jnp.pad(xh, ((0, 0), (p, p), (p, p), (0, 0)))              # (B,H+2p,W+2p,CXH)
    # kw-shift im2col here (K shifted slices concat along channels) so the kernel
    # loads one contiguous lane-dense (M, KPAD) slab per kh. Column index = kw*CXH + c,
    # which matches the fused-weight row ordering below.
    xh_cols = jnp.concatenate([xh_pad[:, :, kw:kw + w_img, :] for kw in range(k)],
                              axis=-1)                                   # (B,H+2p,W,K*CXH)
    xh_cols = jnp.pad(xh_cols, ((0, 0), (0, 0), (0, 0), (0, kpad - kcols)))
    xh_flat = xh_cols.reshape(b, (h_img + 2 * p) * w_img, kpad)

    c_flat = jnp.transpose(c_t, (0, 2, 3, 1)).reshape(b, h_img * w_img, nh)

    # Fused weights: concat conv_x/conv_h along input channels, group rows by kh
    # (row index = kw*CXH + c, in lockstep with xh_cols), pre-scale g-gate columns
    # by 2 (single-sigmoid activation trick), zero-pad rows to KPAD, cast bf16.
    w_all = jnp.concatenate([w_x, w_h], axis=2)                          # (K,K,CXH,4NH)
    w_all = w_all.at[..., 2 * nh:3 * nh].multiply(2.0)
    w_all = w_all.reshape(k, kcols, 4 * nh)
    w_all = jnp.pad(w_all, ((0, 0), (0, kpad - kcols), (0, 0))).astype(jnp.bfloat16)

    # TODO(synk): for much larger H*W, halo-tile xh_flat (row tiles + 2p halo) instead
    # of keeping the whole padded image VMEM-resident; switch when ~2x the per-element
    # block (double-buffer) exceeds a few MiB — v7x has only 64 MiB physical VMEM.

    kernel = _make_convlstm_kernel(k, tile_rows, w_img, nh, kpad)

    out = pl.pallas_call(
        kernel,
        out_shape=jax.ShapeDtypeStruct((b, h_img * w_img, 2 * nh), jnp.float32),
        grid=(b, n_row_tiles),
        in_specs=[
            # Whole kw-im2col'd padded [x|h] image of one batch element; constant
            # over the row-tile axis -> DMA'd once per batch element.
            pl.BlockSpec(((1, (h_img + 2 * p) * w_img, kpad)),
                         lambda bi, ri: (bi, 0, 0)),
            pl.BlockSpec((1, m, nh), lambda bi, ri: (bi, ri, 0)),
            # Fused weights: constant index map -> fetched once, VMEM-resident.
            pl.BlockSpec((k, kpad, 4 * nh), lambda bi, ri: (0, 0, 0)),
        ],
        out_specs=pl.BlockSpec((1, m, 2 * nh), lambda bi, ri: (bi, ri, 0)),
        scratch_shapes=[pltpu.VMEM((m, 4 * nh), jnp.float32)],
        compiler_params=pltpu.CompilerParams(
            # Both grid axes independent -> megacore-shardable (v7x: one image per TC).
            dimension_semantics=("parallel", "parallel"),
            vmem_limit_bytes=32 * 1024 * 1024),
    )(xh_flat, c_flat, w_all)

    h_new = out[..., :nh].reshape(b, h_img, w_img, nh)
    c_new = out[..., nh:].reshape(b, h_img, w_img, nh)
    return (jnp.transpose(h_new, (0, 3, 1, 2)),
            jnp.transpose(c_new, (0, 3, 1, 2)))


def _reference_forward(x_t, h_t, c_t, w_x, w_h, cast_bf16=False):
    """Pure-JAX reference mirroring the PyTorch forward (for validation)."""
    if cast_bf16:
        q = lambda a: a.astype(jnp.bfloat16).astype(jnp.float32)
        x_t, h_t, w_x, w_h = q(x_t), q(h_t), q(w_x), q(w_h)
    dn = ("NHWC", "HWIO", "NHWC")
    xh = jnp.transpose(x_t, (0, 2, 3, 1))
    hh = jnp.transpose(h_t, (0, 2, 3, 1))
    ch = jnp.transpose(c_t, (0, 2, 3, 1))
    nh = c_t.shape[1]
    xc = jax.lax.conv_general_dilated(xh, w_x, (1, 1), "SAME", dimension_numbers=dn,
                                      precision=jax.lax.Precision.HIGHEST)
    hc = jax.lax.conv_general_dilated(hh, w_h, (1, 1), "SAME", dimension_numbers=dn,
                                      precision=jax.lax.Precision.HIGHEST)
    g = xc + hc
    i_t = jax.nn.sigmoid(g[..., 0 * nh:1 * nh])
    f_t = jax.nn.sigmoid(g[..., 1 * nh:2 * nh])
    g_t = jnp.tanh(g[..., 2 * nh:3 * nh])
    o_t = jax.nn.sigmoid(g[..., 3 * nh:4 * nh])
    c_new = f_t * ch + i_t * g_t
    h_new = o_t * g_t
    return (jnp.transpose(h_new, (0, 3, 1, 2)),
            jnp.transpose(c_new, (0, 3, 1, 2)))


if __name__ == "__main__":
    B, Cin, NH, H, W, K = 2, 4, 32, 16, 16, 5

    key = jax.random.PRNGKey(0)
    k1, k2, k3, k4, k5 = jax.random.split(key, 5)
    x_t = jax.random.normal(k1, (B, Cin, H, W), jnp.float32)
    h_t = jax.random.normal(k2, (B, NH, H, W), jnp.float32)
    c_t = jax.random.normal(k3, (B, NH, H, W), jnp.float32)
    # Deterministic synthetic conv weights (HWIO), bias-free as in the module.
    w_x = 0.1 * jax.random.normal(k4, (K, K, Cin, 4 * NH), jnp.float32)
    w_h = 0.1 * jax.random.normal(k5, (K, K, NH, 4 * NH), jnp.float32)

    h_new, c_new = convlstm_cell_forward(x_t, h_t, c_t, w_x, w_h, filter_size=K)
    jax.block_until_ready((h_new, c_new))
    assert h_new.shape == (B, NH, H, W) and c_new.shape == (B, NH, H, W)

    # Strict check: reference computed on the same bf16-rounded x/h/weights the
    # kernel consumes (isolates kernel math from the deliberate bf16 quantization).
    h_q, c_q = _reference_forward(x_t, h_t, c_t, w_x, w_h, cast_bf16=True)
    np.testing.assert_allclose(np.asarray(h_new), np.asarray(h_q), rtol=5e-3, atol=5e-3)
    np.testing.assert_allclose(np.asarray(c_new), np.asarray(c_q), rtol=5e-3, atol=5e-3)

    # Loose check vs. the full-f32 reference: budget for bf16 input quantization.
    h_f, c_f = _reference_forward(x_t, h_t, c_t, w_x, w_h, cast_bf16=False)
    np.testing.assert_allclose(np.asarray(h_new), np.asarray(h_f), rtol=5e-2, atol=5e-2)
    np.testing.assert_allclose(np.asarray(c_new), np.asarray(c_f), rtol=5e-2, atol=5e-2)

    print("KERNEL_OK")
</pallas_src>

<mosaic_0001>
module attributes {stable_mosaic.version = 11 : i64} {
  func.func @kernel(%arg0: i32, %arg1: i32, %arg2: memref<1x320x256xbf16, #tpu.memory_space<vmem>>, %arg3: memref<1x256x32xf32, #tpu.memory_space<vmem>>, %arg4: memref<5x256x128xbf16, #tpu.memory_space<vmem>>, %arg5: memref<1x256x64xf32, #tpu.memory_space<vmem>>, %arg6: memref<256x128xf32, #tpu.memory_space<vmem>>) attributes {dimension_semantics = [#tpu.dimension_semantics<parallel>, #tpu.dimension_semantics<parallel>], iteration_bounds = array<i64: 2, 1>, scalar_prefetch = 0 : i64, scratch_operands = 1 : i64, tpu.core_type = #tpu.core_type<tc>, window_params = [{transform_indices = @transform_0, window_bounds = array<i64: 1, 320, 256>}, {transform_indices = @transform_1, window_bounds = array<i64: 1, 256, 32>}, {pipeline_mode = #tpu.pipeline_mode<synchronous>, transform_indices = @transform_2, window_bounds = array<i64: 5, 256, 128>}, {transform_indices = @transform_3, window_bounds = array<i64: 1, 256, 64>}]} {
    %c16_i32 = arith.constant 16 : i32
    %0 = arith.muli %arg1, %c16_i32 : i32
    %1 = tpu.assume_multiple %0, 16 : i32
    %c0_i32 = arith.constant 0 : i32
    %2 = arith.addi %1, %c0_i32 : i32
    %c16_i32_0 = arith.constant 16 : i32
    %3 = arith.muli %2, %c16_i32_0 : i32
    %4 = tpu.assume_multiple %3, 16 : i32
    %c0 = arith.constant 0 : index
    %5 = arith.index_cast %4 : i32 to index
    %c0_1 = arith.constant 0 : index
    %6 = vector.load %arg2[%c0, %5, %c0_1] : memref<1x320x256xbf16, #tpu.memory_space<vmem>>, vector<1x256x256xbf16>
    %7 = vector.shape_cast %6 : vector<1x256x256xbf16> to vector<256x256xbf16>
    %c0_2 = arith.constant 0 : index
    %c0_3 = arith.constant 0 : index
    %c0_4 = arith.constant 0 : index
    %8 = vector.load %arg4[%c0_2, %c0_3, %c0_4] : memref<5x256x128xbf16, #tpu.memory_space<vmem>>, vector<1x256x128xbf16>
    %9 = vector.shape_cast %8 : vector<1x256x128xbf16> to vector<256x128xbf16>
    %cst = arith.constant dense<0.000000e+00> : vector<256x128xf32>
    %10 = tpu.matmul %7, %9, %cst {dimension_numbers = #tpu.dot_dimension_numbers<[1], [0], [0], [1], [0, 0, 1, 1], [], []>} : vector<256x256xbf16>, vector<256x128xbf16>, vector<256x128xf32> -> vector<256x128xf32>
    %c0_5 = arith.constant 0 : index
    %c0_6 = arith.constant 0 : index
    %11 = vector.load %arg6[%c0_5, %c0_6] : memref<256x128xf32, #tpu.memory_space<vmem>>, vector<256x128xf32>
    tpu.vector_store %arg6[%c0_5, %c0_6], %10 {strides = array<i32>} : memref<256x128xf32, #tpu.memory_space<vmem>>, vector<256x128xf32>,
    %c1_i32 = arith.constant 1 : i32
    %12 = arith.addi %1, %c1_i32 : i32
    %c16_i32_7 = arith.constant 16 : i32
    %13 = arith.muli %12, %c16_i32_7 : i32
    %14 = tpu.assume_multiple %13, 16 : i32
    %c0_8 = arith.constant 0 : index
    %15 = arith.index_cast %14 : i32 to index
    %c0_9 = arith.constant 0 : index
    %16 = vector.load %arg2[%c0_8, %15, %c0_9] : memref<1x320x256xbf16, #tpu.memory_space<vmem>>, vector<1x256x256xbf16>
    %17 = vector.shape_cast %16 : vector<1x256x256xbf16> to vector<256x256xbf16>
    %c1 = arith.constant 1 : index
    %c0_10 = arith.constant 0 : index
    %c0_11 = arith.constant 0 : index
    %18 = vector.load %arg4[%c1, %c0_10, %c0_11] : memref<5x256x128xbf16, #tpu.memory_space<vmem>>, vector<1x256x128xbf16>
    %19 = vector.shape_cast %18 : vector<1x256x128xbf16> to vector<256x128xbf16>
    %cst_12 = arith.constant dense<0.000000e+00> : vector<256x128xf32>
    %20 = tpu.matmul %17, %19, %cst_12 {dimension_numbers = #tpu.dot_dimension_numbers<[1], [0], [0], [1], [0, 0, 1, 1], [], []>} : vector<256x256xbf16>, vector<256x128xbf16>, vector<256x128xf32> -> vector<256x128xf32>
    %c0_13 = arith.constant 0 : index
    %c0_14 = arith.constant 0 : index
    %21 = vector.load %arg6[%c0_13, %c0_14] : memref<256x128xf32, #tpu.memory_space<vmem>>, vector<256x128xf32>
    %22 = arith.addf %21, %20 : vector<256x128xf32>
    %c0_15 = arith.constant 0 : index
    %c0_16 = arith.constant 0 : index
    %23 = vector.load %arg6[%c0_15, %c0_16] : memref<256x128xf32, #tpu.memory_space<vmem>>, vector<256x128xf32>
    tpu.vector_store %arg6[%c0_15, %c0_16], %22 {strides = array<i32>} : memref<256x128xf32, #tpu.memory_space<vmem>>, vector<256x128xf32>,
    %c2_i32 = arith.constant 2 : i32
    %24 = arith.addi %1, %c2_i32 : i32
    %c16_i32_17 = arith.constant 16 : i32
    %25 = arith.muli %24, %c16_i32_17 : i32
    %26 = tpu.assume_multiple %25, 16 : i32
    %c0_18 = arith.constant 0 : index
    %27 = arith.index_cast %26 : i32 to index
    %c0_19 = arith.constant 0 : index
    %28 = vector.load %arg2[%c0_18, %27, %c0_19] : memref<1x320x256xbf16, #tpu.memory_space<vmem>>, vector<1x256x256xbf16>
    %29 = vector.shape_cast %28 : vector<1x256x256xbf16> to vector<256x256xbf16>
    %c2 = arith.constant 2 : index
    %c0_20 = arith.constant 0 : index
    %c0_21 = arith.constant 0 : index
    %30 = vector.load %arg4[%c2, %c0_20, %c0_21] : memref<5x256x128xbf16, #tpu.memory_space<vmem>>, vector<1x256x128xbf16>
    %31 = vector.shape_cast %30 : vector<1x256x128xbf16> to vector<256x128xbf16>
    %cst_22 = arith.constant dense<0.000000e+00> : vector<256x128xf32>
    %32 = tpu.matmul %29, %31, %cst_22 {dimension_numbers = #tpu.dot_dimension_numbers<[1], [0], [0], [1], [0, 0, 1, 1], [], []>} : vector<256x256xbf16>, vector<256x128xbf16>, vector<256x128xf32> -> vector<256x128xf32>
    %c0_23 = arith.constant 0 : index
    %c0_24 = arith.constant 0 : index
    %33 = vector.load %arg6[%c0_23, %c0_24] : memref<256x128xf32, #tpu.memory_space<vmem>>, vector<256x128xf32>
    %34 = arith.addf %33, %32 : vector<256x128xf32>
    %c0_25 = arith.constant 0 : index
    %c0_26 = arith.constant 0 : index
    %35 = vector.load %arg6[%c0_25, %c0_26] : memref<256x128xf32, #tpu.memory_space<vmem>>, vector<256x128xf32>
    tpu.vector_store %arg6[%c0_25, %c0_26], %34 {strides = array<i32>} : memref<256x128xf32, #tpu.memory_space<vmem>>, vector<256x128xf32>,
    %c3_i32 = arith.constant 3 : i32
    %36 = arith.addi %1, %c3_i32 : i32
    %c16_i32_27 = arith.constant 16 : i32
    %37 = arith.muli %36, %c16_i32_27 : i32
    %38 = tpu.assume_multiple %37, 16 : i32
    %c0_28 = arith.constant 0 : index
    %39 = arith.index_cast %38 : i32 to index
    %c0_29 = arith.constant 0 : index
    %40 = vector.load %arg2[%c0_28, %39, %c0_29] : memref<1x320x256xbf16, #tpu.memory_space<vmem>>, vector<1x256x256xbf16>
    %41 = vector.shape_cast %40 : vector<1x256x256xbf16> to vector<256x256xbf16>
    %c3 = arith.constant 3 : index
    %c0_30 = arith.constant 0 : index
    %c0_31 = arith.constant 0 : index
    %42 = vector.load %arg4[%c3, %c0_30, %c0_31] : memref<5x256x128xbf16, #tpu.memory_space<vmem>>, vector<1x256x128xbf16>
    %43 = vector.shape_cast %42 : vector<1x256x128xbf16> to vector<256x128xbf16>
    %cst_32 = arith.constant dense<0.000000e+00> : vector<256x128xf32>
    %44 = tpu.matmul %41, %43, %cst_32 {dimension_numbers = #tpu.dot_dimension_numbers<[1], [0], [0], [1], [0, 0, 1, 1], [], []>} : vector<256x256xbf16>, vector<256x128xbf16>, vector<256x128xf32> -> vector<256x128xf32>
    %c0_33 = arith.constant 0 : index
    %c0_34 = arith.constant 0 : index
    %45 = vector.load %arg6[%c0_33, %c0_34] : memref<256x128xf32, #tpu.memory_space<vmem>>, vector<256x128xf32>
    %46 = arith.addf %45, %44 : vector<256x128xf32>
    %c0_35 = arith.constant 0 : index
    %c0_36 = arith.constant 0 : index
    %47 = vector.load %arg6[%c0_35, %c0_36] : memref<256x128xf32, #tpu.memory_space<vmem>>, vector<256x128xf32>
    tpu.vector_store %arg6[%c0_35, %c0_36], %46 {strides = array<i32>} : memref<256x128xf32, #tpu.memory_space<vmem>>, vector<256x128xf32>,
    %c4_i32 = arith.constant 4 : i32
    %48 = arith.addi %1, %c4_i32 : i32
    %c16_i32_37 = arith.constant 16 : i32
    %49 = arith.muli %48, %c16_i32_37 : i32
    %50 = tpu.assume_multiple %49, 16 : i32
    %c0_38 = arith.constant 0 : index
    %51 = arith.index_cast %50 : i32 to index
    %c0_39 = arith.constant 0 : index
    %52 = vector.load %arg2[%c0_38, %51, %c0_39] : memref<1x320x256xbf16, #tpu.memory_space<vmem>>, vector<1x256x256xbf16>
    %53 = vector.shape_cast %52 : vector<1x256x256xbf16> to vector<256x256xbf16>
    %c4 = arith.constant 4 : index
    %c0_40 = arith.constant 0 : index
    %c0_41 = arith.constant 0 : index
    %54 = vector.load %arg4[%c4, %c0_40, %c0_41] : memref<5x256x128xbf16, #tpu.memory_space<vmem>>, vector<1x256x128xbf16>
    %55 = vector.shape_cast %54 : vector<1x256x128xbf16> to vector<256x128xbf16>
    %cst_42 = arith.constant dense<0.000000e+00> : vector<256x128xf32>
    %56 = tpu.matmul %53, %55, %cst_42 {dimension_numbers = #tpu.dot_dimension_numbers<[1], [0], [0], [1], [0, 0, 1, 1], [], []>} : vector<256x256xbf16>, vector<256x128xbf16>, vector<256x128xf32> -> vector<256x128xf32>
    %c0_43 = arith.constant 0 : index
    %c0_44 = arith.constant 0 : index
    %57 = vector.load %arg6[%c0_43, %c0_44] : memref<256x128xf32, #tpu.memory_space<vmem>>, vector<256x128xf32>
    %58 = arith.addf %57, %56 : vector<256x128xf32>
    %c0_45 = arith.constant 0 : index
    %c0_46 = arith.constant 0 : index
    %59 = vector.load %arg6[%c0_45, %c0_46] : memref<256x128xf32, #tpu.memory_space<vmem>>, vector<256x128xf32>
    tpu.vector_store %arg6[%c0_45, %c0_46], %58 {strides = array<i32>} : memref<256x128xf32, #tpu.memory_space<vmem>>, vector<256x128xf32>,
    %c0_47 = arith.constant 0 : index
    %c0_48 = arith.constant 0 : index
    %60 = vector.load %arg6[%c0_47, %c0_48] : memref<256x128xf32, #tpu.memory_space<vmem>>, vector<256x128xf32>
    %cst_49 = arith.constant 0.000000e+00 : f32
    %61 = vector.broadcast %cst_49 : f32 to vector<256x128xf32>
    %62 = arith.subf %61, %60 : vector<256x128xf32>
    %63 = math.exp %62 : vector<256x128xf32>
    %cst_50 = arith.constant 1.000000e+00 : f32
    %64 = vector.broadcast %cst_50 : f32 to vector<256x128xf32>
    %65 = arith.addf %64, %63 : vector<256x128xf32>
    %cst_51 = arith.constant 1.000000e+00 : f32
    %66 = vector.broadcast %cst_51 : f32 to vector<256x128xf32>
    %67 = arith.divf %66, %65 : vector<256x128xf32>
    %68 = vector.extract_strided_slice %67 {offsets = [0, 0], sizes = [256, 32], strides = [1, 1]} : vector<256x128xf32> to vector<256x32xf32>
    %69 = vector.extract_strided_slice %67 {offsets = [0, 32], sizes = [256, 32], strides = [1, 1]} : vector<256x128xf32> to vector<256x32xf32>
    %70 = vector.extract_strided_slice %67 {offsets = [0, 64], sizes = [256, 32], strides = [1, 1]} : vector<256x128xf32> to vector<256x32xf32>
    %cst_52 = arith.constant 2.000000e+00 : f32
    %71 = vector.broadcast %cst_52 : f32 to vector<256x32xf32>
    %72 = arith.mulf %71, %70 : vector<256x32xf32>
    %cst_53 = arith.constant 1.000000e+00 : f32
    %73 = vector.broadcast %cst_53 : f32 to vector<256x32xf32>
    %74 = arith.subf %72, %73 : vector<256x32xf32>
    %75 = vector.extract_strided_slice %67 {offsets = [0, 96], sizes = [256, 32], strides = [1, 1]} : vector<256x128xf32> to vector<256x32xf32>
    %c0_54 = arith.constant 0 : index
    %c0_55 = arith.constant 0 : index
    %c0_56 = arith.constant 0 : index
    %76 = vector.load %arg3[%c0_54, %c0_55, %c0_56] : memref<1x256x32xf32, #tpu.memory_space<vmem>>, vector<1x256x32xf32>
    %77 = vector.shape_cast %76 : vector<1x256x32xf32> to vector<256x32xf32>
    %78 = arith.mulf %69, %77 : vector<256x32xf32>
    %79 = arith.mulf %68, %74 : vector<256x32xf32>
    %80 = arith.addf %78, %79 : vector<256x32xf32>
    %81 = arith.mulf %75, %74 : vector<256x32xf32>
    %82 = tpu.concatenate %81, %80 in 1 : vector<256x32xf32>, vector<256x32xf32> -> vector<256x64xf32>
    %c0_57 = arith.constant 0 : index
    %c0_58 = arith.constant 0 : index
    %c0_59 = arith.constant 0 : index
    %83 = vector.load %arg5[%c0_57, %c0_58, %c0_59] : memref<1x256x64xf32, #tpu.memory_space<vmem>>, vector<1x256x64xf32>
    %84 = vector.shape_cast %83 : vector<1x256x64xf32> to vector<256x64xf32>
    %85 = vector.shape_cast %82 : vector<256x64xf32> to vector<1x256x64xf32>
    tpu.vector_store %arg5[%c0_57, %c0_58, %c0_59], %85 {strides = array<i32>} : memref<1x256x64xf32, #tpu.memory_space<vmem>>, vector<1x256x64xf32>,
    return
  }
  func.func @transform_0(%arg0: i32, %arg1: i32) -> (i32, i32, i32) {
    %c0_i32 = arith.constant 0 : i32
    %c0_i32_0 = arith.constant 0 : i32
    %c0_i32_1 = arith.constant 0 : i32
    return %arg0, %c0_i32, %c0_i32_0 : i32, i32, i32
  }
  func.func @transform_1(%arg0: i32, %arg1: i32) -> (i32, i32, i32) {
    %c0_i32 = arith.constant 0 : i32
    %c0_i32_0 = arith.constant 0 : i32
    return %arg0, %arg1, %c0_i32 : i32, i32, i32
  }
  func.func @transform_2(%arg0: i32, %arg1: i32) -> (i32, i32, i32) {
    %c0_i32 = arith.constant 0 : i32
    %c0_i32_0 = arith.constant 0 : i32
    %c0_i32_1 = arith.constant 0 : i32
    %c0_i32_2 = arith.constant 0 : i32
    return %c0_i32, %c0_i32_0, %c0_i32_1 : i32, i32, i32
  }
  func.func @transform_3(%arg0: i32, %arg1: i32) -> (i32, i32, i32) {
    %c0_i32 = arith.constant 0 : i32
    %c0_i32_0 = arith.constant 0 : i32
    return %arg0, %arg1, %c0_i32 : i32, i32, i32
  }
}

</mosaic_0001>

<llo_original>
// kernel: convlstm_cell_forward.1
$region0: #{convlstm_cell_forward.1}
  #allocation0 [shape = 'u32[]', space=smem, size = 0x4, offset = 0x4, fixed_abs, tag = 'smem constant byte address 0x4 - core index']
  #allocation1 [shape = 'u32[72,128]{1,0:T(1,128)}', space=vmem, size = 0x9000, scoped, tag = 'internal scratch']
  #allocation2 [shape = 'f32[256,128]{1,0:T(8,128)}', space=vmem, size = 0x20000, scoped, tag = 'scratch operand']
  %s0 = inlined_call_operand.vmem [shape: bf16[2,320,256], index: 0, kind: input, shape index: {}]
  %s1 = inlined_call_operand.vmem [shape: f32[2,256,32], index: 1, kind: input, shape index: {}]
  %s2 = inlined_call_operand.vmem [shape: bf16[5,256,128], index: 2, kind: input, shape index: {}]
  %s3 = inlined_call_operand.vmem [shape: f32[2,256,64], index: 3, kind: output, shape index: {}]
  %s4 = sld [smem:[#allocation0]]
  $region45: #{convlstm_cell_forward.1} parent=0
    _
  %s6 = ssub.s32 1, %s4
  %s7 = scalar_select 0, %s6, %s4
  loop: start=0, step=1, limit=4
  $region2: #{convlstm_cell_forward.1} parent=0 // loop_pre_header
    _
  $region3: #{convlstm_cell_forward.1} parent=0 // loop_header
    %s9 = sphi 0, %s13
    %p10 = scmp.ge.s32.totalorder %s9, 4
    %s16 = sphi 0, %s28
    %s17 = sphi 0, %s24
    %s18 = sphi 0, %s16
    %s19 = sphi 0, %s17
    %s20 = sphi 0, %s18
    %s21 = sphi 0, %s19
    %s31 = sphi 0, %s33
    %s34 = sphi 0, %s31
    %s35 = sphi 0, %s34
    %s51 = sphi 0, %s35
    %s59 = sphi 0, %s61
    %s62 = sphi 0, %s59
    %s63 = sphi 0, %s62
    %s79 = sphi 0, %s63
    %s83 = sphi 0, %s83
    %s85 = sphi 0, %s83
    %s86 = sphi 0, %s85
    %s100 = sphi 0, %s86
    %s108 = sphi 0, %s110
    %s111 = sphi 0, %s108
    %s112 = sphi 0, %s111
    %s128 = sphi 0, %s112
  $region4: #{convlstm_cell_forward.1} parent=0 // loop_header_branch
    %12 = sbr.rel (%p10) target = $region8
  $region5: #{convlstm_cell_forward.1} parent=0 // loop_body
    %s14 = ssub.s32 %s9, 1
    %s15 = ssub.s32 %s9, 2
    %s22 = sadd.s32 1, %s17
    %p23 = scmp.ge.s32.totalorder %s22, 1
    %s24 = scalar_select %p23, 0, %s22
    %s25 = sadd.s32 1, %s16
    %s26 = scalar_select %p23, %s25, %s16
    %p27 = scmp.ge.s32.totalorder %s26, 2
    %s28 = scalar_select %p27, 0, %s26
    %s29 = ssub.s32 %s16, %s28
    %p30 = scmp.eq.s32.totalorder %s29, 0
    %s32 = sadd.s32 %s31, 1
    %s33 = scalar_select %p30, %s31, %s32
    %p36 = pneg %p30
    %p37 = scmp.eq.s32.totalorder %s9, 1
    %p38 = por %p36, %p37
    %p39 = scmp.ne.s32.totalorder %s31, %s34
    %p40 = scmp.eq.s32.totalorder %s9, 0
    %p41 = por %p39, %p40
    %p42 = scmp.ne.s32.totalorder %s31, %s34
    %p43 = scmp.eq.s32.totalorder %s14, 1
    %p44 = por %p42, %p43
    %p45 = scmp.ne.s32.totalorder %s34, %s35
    %p46 = scmp.eq.s32.totalorder %s14, 0
    %p47 = por %p45, %p46
    %p48 = scmp.ne.s32.totalorder %s34, %s35
    %p49 = scmp.eq.s32.totalorder %s15, 1
    %p50 = por %p48, %p49
    %p52 = scmp.ne.s32.totalorder %s35, %s51
    %p53 = scmp.eq.s32.totalorder %s15, 0
    %p54 = por %p52, %p53
    %s55 = ssub.s32 %s16, %s28
    %s56 = ssub.s32 %s17, %s24
    %s57 = sor.u32 %s55, %s56
    %p58 = scmp.eq.s32.totalorder %s57, 0
    %s60 = sadd.s32 %s59, 1
    %s61 = scalar_select %p58, %s59, %s60
    %p64 = pneg %p58
    %p65 = scmp.eq.s32.totalorder %s9, 1
    %p66 = por %p64, %p65
    %p67 = scmp.ne.s32.totalorder %s59, %s62
    %p68 = scmp.eq.s32.totalorder %s9, 0
    %p69 = por %p67, %p68
    %p70 = scmp.ne.s32.totalorder %s59, %s62
    %p71 = scmp.eq.s32.totalorder %s14, 1
    %p72 = por %p70, %p71
    %p73 = scmp.ne.s32.totalorder %s62, %s63
    %p74 = scmp.eq.s32.totalorder %s14, 0
    %p75 = por %p73, %p74
    %p76 = scmp.ne.s32.totalorder %s62, %s63
    %p77 = scmp.eq.s32.totalorder %s15, 1
    %p78 = por %p76, %p77
    %p80 = scmp.ne.s32.totalorder %s63, %s79
    %p81 = scmp.eq.s32.totalorder %s15, 0
    %p82 = por %p80, %p81
    %s84 = sadd.s32 %s83, 1
    %p87 = scmp.eq.s32.totalorder %s9, 1
    %p88 = scmp.ne.s32.totalorder %s83, %s85
    %p89 = scmp.eq.s32.totalorder %s9, 0
    %p90 = por %p88, %p89
    %p91 = scmp.ne.s32.totalorder %s83, %s85
    %p92 = scmp.eq.s32.totalorder %s14, 1
    %p93 = por %p91, %p92
    %p94 = scmp.ne.s32.totalorder %s85, %s86
    %p95 = scmp.eq.s32.totalorder %s14, 0
    %p96 = por %p94, %p95
    %p97 = scmp.ne.s32.totalorder %s85, %s86
    %p98 = scmp.eq.s32.totalorder %s15, 1
    %p99 = por %p97, %p98
    %p101 = scmp.ne.s32.totalorder %s86, %s100
    %p102 = scmp.eq.s32.totalorder %s15, 0
    %p103 = por %p101, %p102
    %s104 = ssub.s32 %s16, %s28
    %s105 = ssub.s32 %s17, %s24
    %s106 = sor.u32 %s104, %s105
    %p107 = scmp.eq.s32.totalorder %s106, 0
    %s109 = sadd.s32 %s108, 1
    %s110 = scalar_select %p107, %s108, %s109
    %p113 = pneg %p107
    %p114 = scmp.eq.s32.totalorder %s9, 1
    %p115 = por %p113, %p114
    %p116 = scmp.ne.s32.totalorder %s108, %s111
    %p117 = scmp.eq.s32.totalorder %s9, 0
    %p118 = por %p116, %p117
    %p119 = scmp.ne.s32.totalorder %s108, %s111
    %p120 = scmp.eq.s32.totalorder %s14, 1
    %p121 = por %p119, %p120
    %p122 = scmp.ne.s32.totalorder %s111, %s112
    %p123 = scmp.eq.s32.totalorder %s14, 0
    %p124 = por %p122, %p123
    %p125 = scmp.ne.s32.totalorder %s111, %s112
    %p126 = scmp.eq.s32.totalorder %s15, 1
    %p127 = por %p125, %p126
    %p129 = scmp.ne.s32.totalorder %s112, %s128
    %p130 = scmp.eq.s32.totalorder %s15, 0
    %p131 = por %p129, %p130
    %p132 = scmp.le.s32.totalorder 1, %s9
    %p133 = scmp.lt.s32.totalorder %s9, 3
    %p134 = pnand %p132, %p133
    %p135 = pneg %p134
    // Predicated region
    $region9: #{convlstm_cell_forward.1} parent=5 // pred_check
      _
    $region10: #{convlstm_cell_forward.1} parent=5 // pred_check_branch
      %137 = sbr.rel (%p134) target = $region12
    $region11: #{convlstm_cell_forward.1} parent=5 // pred_region
      %s138 = ssub.s32 %s9, 1
      // Predicated region
      $region13: #{convlstm_cell_forward.1} parent=11 // pred_check
        %p139 = pneg %p96
      $region14: #{convlstm_cell_forward.1} parent=11 // pred_check_branch
        %141 = sbr.rel (%p139) target = $region16
      $region15: #{convlstm_cell_forward.1} parent=11 // pred_region
        _
      $region16: #{convlstm_cell_forward.1} parent=11 // pred_fallthru
        _
    $region12: #{convlstm_cell_forward.1} parent=5 // pred_fallthru
      _
    %p142 = scmp.lt.s32.totalorder %s9, 2
    // Predicated region
    $region17: #{convlstm_cell_forward.1} parent=5 // pred_check
      %p143 = pneg %p142
    $region18: #{convlstm_cell_forward.1} parent=5 // pred_check_branch
      %145 = sbr.rel (%p143) target = $region20
    $region19: #{convlstm_cell_forward.1} parent=5 // pred_region
      // Predicated region
      $region21: #{convlstm_cell_forward.1} parent=19 // pred_check
        %p146 = pneg %p41
      $region22: #{convlstm_cell_forward.1} parent=19 // pred_check_branch
        %148 = sbr.rel (%p146) target = $region24
      $region23: #{convlstm_cell_forward.1} parent=19 // pred_region
        %p149 = scmp.lt.s32.totalorder %s16, 1
        %s150 = scalar_select %p149, %s16, 1
        %s151 = smul.addr %s150, 80
        %s152 = smul.addr %s151, 4
        %s153 = scalar_lea.vmem %s0, %s152
      $region24: #{convlstm_cell_forward.1} parent=19 // pred_fallthru
        _
      // Predicated region
      $region25: #{convlstm_cell_forward.1} parent=19 // pred_check
        %p154 = pneg %p69
      $region26: #{convlstm_cell_forward.1} parent=19 // pred_check_branch
        %156 = sbr.rel (%p154) target = $region28
      $region27: #{convlstm_cell_forward.1} parent=19 // pred_region
        %s157 = smul.u32 32, %s17
        %p158 = scmp.lt.s32.totalorder %s16, 1
        %s159 = scalar_select %p158, %s16, 1
        %p160 = scmp.lt.s32.totalorder %s157, 31
        %s161 = scalar_select %p160, %s157, 31
        %s162 = smul.addr %s159, 32
        %s163 = sadd.s32 %s161, %s162
        %s164 = smul.addr %s163, 8
        %s165 = scalar_lea.vmem %s1, %s164
        %s166 = smul.u32 32, %s17
      $region28: #{convlstm_cell_forward.1} parent=19 // pred_fallthru
        _
    $region20: #{convlstm_cell_forward.1} parent=5 // pred_fallthru
      _
    %p167 = scmp.le.s32.totalorder 1, %s9
    %p168 = scmp.lt.s32.totalorder %s9, 3
    %p169 = pnand %p167, %p168
    %p170 = pneg %p169
    // Predicated region
    $region29: #{convlstm_cell_forward.1} parent=5 // pred_check
      _
    $region30: #{convlstm_cell_forward.1} parent=5 // pred_check_branch
      %172 = sbr.rel (%p169) target = $region32
    $region31: #{convlstm_cell_forward.1} parent=5 // pred_region
      %s173 = ssub.s32 %s9, 1
      %p174 = scmp.lt.s32.totalorder %s18, 1
      %s175 = scalar_select %p174, %s18, 1
      %s176 = smul.addr %s175, 80
      %s177 = smul.addr %s176, 4
      %s178 = scalar_lea.vmem %s0, %s177
      %p179 = pneg %p47
      %p180 = pneg %p44
      %s181 = smul.u32 32, %s19
      %p182 = scmp.lt.s32.totalorder %s18, 1
      %s183 = scalar_select %p182, %s18, 1
      %p184 = scmp.lt.s32.totalorder %s181, 31
      %s185 = scalar_select %p184, %s181, 31
      %s186 = smul.addr %s183, 32
      %s187 = sadd.s32 %s185, %s186
      %s188 = smul.addr %s187, 8
      %s189 = scalar_lea.vmem %s1, %s188
      %p190 = pneg %p75
      %p191 = pneg %p72
      %p192 = pneg %p96
      %p193 = pneg %p93
      %p194 = pneg %p124
      %p195 = pneg %p121
      %s196 = smul.u32 32, %s19
      %p197 = scmp.lt.s32.totalorder %s18, 1
      %s198 = scalar_select %p197, %s18, 1
      %p199 = scmp.lt.s32.totalorder %s196, 31
      %s200 = scalar_select %p199, %s196, 31
      %s201 = smul.addr %s198, 32
      %s202 = sadd.s32 %s200, %s201
      %s203 = smul.addr %s202, 8
      %s204 = scalar_lea.vmem %s3, %s203
      %p205 = scmp.lt.s32.totalorder %s18, 1
      %s206 = scalar_select %p205, %s18, 1
      %s207 = smul.addr %s206, 80
      %s208 = smul.addr %s207, 4
      %s209 = scalar_lea.vmem %s0, %s208
      %s210 = smul.u32 32, %s19
      %p211 = scmp.lt.s32.totalorder %s18, 1
      %s212 = scalar_select %p211, %s18, 1
      %p213 = scmp.lt.s32.totalorder %s210, 31
      %s214 = scalar_select %p213, %s210, 31
      %s215 = smul.addr %s212, 32
      %s216 = sadd.s32 %s214, %s215
      %s217 = smul.addr %s216, 8
      %s218 = scalar_lea.vmem %s1, %s217
      %s219 = smul.u32 32, %s19
      %s220 = smul.u32 32, %s19
      %p221 = scmp.lt.s32.totalorder %s18, 1
      %s222 = scalar_select %p221, %s18, 1
      %p223 = scmp.lt.s32.totalorder %s220, 31
      %s224 = scalar_select %p223, %s220, 31
      %s225 = smul.addr %s222, 32
      %s226 = sadd.s32 %s224, %s225
      %s227 = smul.addr %s226, 8
      %s228 = scalar_lea.vmem %s3, %s227
      %s229 = smul.u32 32, %s19
      %s230 = smul.u32 %s19, 16
      %s231 = smul.u32 %s230, 16
      %s232 = sshra.s32 %s231, 3
      %s233 = sand.u32 %s231, 7
      %s234 = smul.u32 %s232, 2
      %s235 = smul.addr %s234, 4
      %s236 = scalar_lea.vmem %s209, %s235
      %v237 = vld [vmem:[%s236] sm:$0xff]
      %v238 = vld [vmem:[%s236 + $0x8] sm:$0xff]
      %v239 = vld [vmem:[%s236 + $0x10] sm:$0xff]
      %v240 = vld [vmem:[%s236 + $0x18] sm:$0xff]
      %v241 = vld [vmem:[%s236 + $0x20] sm:$0xff]
      %v242 = vld [vmem:[%s236 + $0x28] sm:$0xff]
      %v243 = vld [vmem:[%s236 + $0x30] sm:$0xff]
      %v244 = vld [vmem:[%s236 + $0x38] sm:$0xff]
      %v245 = vld [vmem:[%s236 + $0x40] sm:$0xff]
      %v246 = vld [vmem:[%s236 + $0x48] sm:$0xff]
      %v247 = vld [vmem:[%s236 + $0x50] sm:$0xff]
      %v248 = vld [vmem:[%s236 + $0x58] sm:$0xff]
      %v249 = vld [vmem:[%s236 + $0x60] sm:$0xff]
      %v250 = vld [vmem:[%s236 + $0x68] sm:$0xff]
      %v251 = vld [vmem:[%s236 + $0x70] sm:$0xff]
      %v252 = vld [vmem:[%s236 + $0x78] sm:$0xff]
      %v253 = vld [vmem:[%s236 + $0x80] sm:$0xff]
      %v254 = vld [vmem:[%s236 + $0x88] sm:$0xff]
      %v255 = vld [vmem:[%s236 + $0x90] sm:$0xff]
      %v256 = vld [vmem:[%s236 + $0x98] sm:$0xff]
      %v257 = vld [vmem:[%s236 + $0xa0] sm:$0xff]
      %v258 = vld [vmem:[%s236 + $0xa8] sm:$0xff]
      %v259 = vld [vmem:[%s236 + $0xb0] sm:$0xff]
      %v260 = vld [vmem:[%s236 + $0xb8] sm:$0xff]
      %v261 = vld [vmem:[%s236 + $0xc0] sm:$0xff]
      %v262 = vld [vmem:[%s236 + $0xc8] sm:$0xff]
      %v263 = vld [vmem:[%s236 + $0xd0] sm:$0xff]
      %v264 = vld [vmem:[%s236 + $0xd8] sm:$0xff]
      %v265 = vld [vmem:[%s236 + $0xe0] sm:$0xff]
      %v266 = vld [vmem:[%s236 + $0xe8] sm:$0xff]
      %v267 = vld [vmem:[%s236 + $0xf0] sm:$0xff]
      %v268 = vld [vmem:[%s236 + $0xf8] sm:$0xff]
      %v269 = vld [vmem:[%s2] sm:$0xf]
      %v270 = vld [vmem:[%s2 + $0x4] sm:$0xf]
      %v271 = vld [vmem:[%s2 + $0x8] sm:$0xf]
      %v272 = vld [vmem:[%s2 + $0xc] sm:$0xf]
      %v273 = vld [vmem:[%s2 + $0x10] sm:$0xf]
      %v274 = vld [vmem:[%s2 + $0x14] sm:$0xf]
      %v275 = vld [vmem:[%s2 + $0x18] sm:$0xf]
      %v276 = vld [vmem:[%s2 + $0x1c] sm:$0xf]
      %v277 = vld [vmem:[%s2 + $0x20] sm:$0xf]
      %v278 = vld [vmem:[%s2 + $0x24] sm:$0xf]
      %v279 = vld [vmem:[%s2 + $0x28] sm:$0xf]
      %v280 = vld [vmem:[%s2 + $0x2c] sm:$0xf]
      %v281 = vld [vmem:[%s2 + $0x30] sm:$0xf]
      %v282 = vld [vmem:[%s2 + $0x34] sm:$0xf]
      %v283 = vld [vmem:[%s2 + $0x38] sm:$0xf]
      %v284 = vld [vmem:[%s2 + $0x3c] sm:$0xf]
      %v285 = vld [vmem:[%s2 + $0x40] sm:$0xf]
      %v286 = vld [vmem:[%s2 + $0x44] sm:$0xf]
      %v287 = vld [vmem:[%s2 + $0x48] sm:$0xf]
      %v288 = vld [vmem:[%s2 + $0x4c] sm:$0xf]
      %v289 = vld [vmem:[%s2 + $0x50] sm:$0xf]
      %v290 = vld [vmem:[%s2 + $0x54] sm:$0xf]
      %v291 = vld [vmem:[%s2 + $0x58] sm:$0xf]
      %v292 = vld [vmem:[%s2 + $0x5c] sm:$0xf]
      %v293 = vld [vmem:[%s2 + $0x60] sm:$0xf]
      %v294 = vld [vmem:[%s2 + $0x64] sm:$0xf]
      %v295 = vld [vmem:[%s2 + $0x68] sm:$0xf]
      %v296 = vld [vmem:[%s2 + $0x6c] sm:$0xf]
      %v297 = vld [vmem:[%s2 + $0x70] sm:$0xf]
      %v298 = vld [vmem:[%s2 + $0x74] sm:$0xf]
      %v299 = vld [vmem:[%s2 + $0x78] sm:$0xf]
      %v300 = vld [vmem:[%s2 + $0x7c] sm:$0xf]
      %v333 = vunpack.c.l.b16 %v237
      %v334 = vunpack.c.h.b16 %v237
      %v335 = vunpack.c.l.b16 %v238
      %v336 = vunpack.c.h.b16 %v238
      %v337 = vunpack.c.l.b16 %v239
      %v338 = vunpack.c.h.b16 %v239
      %v339 = vunpack.c.l.b16 %v240
      %v340 = vunpack.c.h.b16 %v240
      %v341 = vunpack.c.l.b16 %v241
      %v342 = vunpack.c.h.b16 %v241
      %v343 = vunpack.c.l.b16 %v242
      %v344 = vunpack.c.h.b16 %v242
      %v345 = vunpack.c.l.b16 %v243
      %v346 = vunpack.c.h.b16 %v243
      %v347 = vunpack.c.l.b16 %v244
      %v348 = vunpack.c.h.b16 %v244
      %v349 = vunpack.c.l.b16 %v245
      %v350 = vunpack.c.h.b16 %v245
      %v351 = vunpack.c.l.b16 %v246
      %v352 = vunpack.c.h.b16 %v246
      %v353 = vunpack.c.l.b16 %v247
      %v354 = vunpack.c.h.b16 %v247
      %v355 = vunpack.c.l.b16 %v248
      %v356 = vunpack.c.h.b16 %v248
      %v357 = vunpack.c.l.b16 %v249
      %v358 = vunpack.c.h.b16 %v249
      %v359 = vunpack.c.l.b16 %v250
      %v360 = vunpack.c.h.b16 %v250
      %v361 = vunpack.c.l.b16 %v251
      %v362 = vunpack.c.h.b16 %v251
      %v363 = vunpack.c.l.b16 %v252
      %v364 = vunpack.c.h.b16 %v252
      %v365 = vunpack.c.l.b16 %v253
      %v366 = vunpack.c.h.b16 %v253
      %v367 = vunpack.c.l.b16 %v254
      %v368 = vunpack.c.h.b16 %v254
      %v369 = vunpack.c.l.b16 %v255
      %v370 = vunpack.c.h.b16 %v255
      %v371 = vunpack.c.l.b16 %v256
      %v372 = vunpack.c.h.b16 %v256
      %v373 = vunpack.c.l.b16 %v257
      %v374 = vunpack.c.h.b16 %v257
      %v375 = vunpack.c.l.b16 %v258
      %v376 = vunpack.c.h.b16 %v258
      %v377 = vunpack.c.l.b16 %v259
      %v378 = vunpack.c.h.b16 %v259
      %v379 = vunpack.c.l.b16 %v260
      %v380 = vunpack.c.h.b16 %v260
      %v381 = vunpack.c.l.b16 %v261
      %v382 = vunpack.c.h.b16 %v261
      %v383 = vunpack.c.l.b16 %v262
      %v384 = vunpack.c.h.b16 %v262
      %v385 = vunpack.c.l.b16 %v263
      %v386 = vunpack.c.h.b16 %v263
      %v387 = vunpack.c.l.b16 %v264
      %v388 = vunpack.c.h.b16 %v264
      %v389 = vunpack.c.l.b16 %v265
      %v390 = vunpack.c.h.b16 %v265
      %v391 = vunpack.c.l.b16 %v266
      %v392 = vunpack.c.h.b16 %v266
      %v393 = vunpack.c.l.b16 %v267
      %v394 = vunpack.c.h.b16 %v267
      %v395 = vunpack.c.l.b16 %v268
      %v396 = vunpack.c.h.b16 %v268
      %v397 = vpack.c.b16 %v335, %v333
      %v398 = vpack.c.b16 %v336, %v334
      %v399 = vpack.c.b16 %v339, %v337
      %v400 = vpack.c.b16 %v340, %v338
      %v401 = vpack.c.b16 %v343, %v341
      %v402 = vpack.c.b16 %v344, %v342
      %v403 = vpack.c.b16 %v347, %v345
      %v404 = vpack.c.b16 %v348, %v346
      %v405 = vpack.c.b16 %v351, %v349
      %v406 = vpack.c.b16 %v352, %v350
      %v407 = vpack.c.b16 %v355, %v353
      %v408 = vpack.c.b16 %v356, %v354
      %v409 = vpack.c.b16 %v359, %v357
      %v410 = vpack.c.b16 %v360, %v358
      %v411 = vpack.c.b16 %v363, %v361
      %v412 = vpack.c.b16 %v364, %v362
      %v413 = vpack.c.b16 %v367, %v365
      %v414 = vpack.c.b16 %v368, %v366
      %v415 = vpack.c.b16 %v371, %v369
      %v416 = vpack.c.b16 %v372, %v370
      %v417 = vpack.c.b16 %v375, %v373
      %v418 = vpack.c.b16 %v376, %v374
      %v419 = vpack.c.b16 %v379, %v377
      %v420 = vpack.c.b16 %v380, %v378
      %v421 = vpack.c.b16 %v383, %v381
      %v422 = vpack.c.b16 %v384, %v382
      %v423 = vpack.c.b16 %v387, %v385
      %v424 = vpack.c.b16 %v388, %v386
      %v425 = vpack.c.b16 %v391, %v389
      %v426 = vpack.c.b16 %v392, %v390
      %v427 = vpack.c.b16 %v395, %v393
      %v428 = vpack.c.b16 %v396, %v394
      %v493 = vunpack.c.l.b16 %v269
      %v494 = vunpack.c.l.b16 %v270
      %v495 = vunpack.c.l.b16 %v271
      %v496 = vunpack.c.l.b16 %v272
      %v497 = vunpack.c.l.b16 %v273
      %v498 = vunpack.c.l.b16 %v274
      %v499 = vunpack.c.l.b16 %v275
      %v500 = vunpack.c.l.b16 %v276
      %v501 = vunpack.c.l.b16 %v277
      %v502 = vunpack.c.l.b16 %v278
      %v503 = vunpack.c.l.b16 %v279
      %v504 = vunpack.c.l.b16 %v280
      %v505 = vunpack.c.l.b16 %v281
      %v506 = vunpack.c.l.b16 %v282
      %v507 = vunpack.c.l.b16 %v283
      %v508 = vunpack.c.l.b16 %v284
      %v509 = vunpack.c.l.b16 %v285
      %v510 = vunpack.c.l.b16 %v286
      %v511 = vunpack.c.l.b16 %v287
      %v512 = vunpack.c.l.b16 %v288
      %v513 = vunpack.c.l.b16 %v289
      %v514 = vunpack.c.l.b16 %v290
      %v515 = vunpack.c.l.b16 %v291
      %v516 = vunpack.c.l.b16 %v292
      %v517 = vunpack.c.l.b16 %v293
      %v518 = vunpack.c.l.b16 %v294
      %v519 = vunpack.c.l.b16 %v295
      %v520 = vunpack.c.l.b16 %v296
      %v521 = vunpack.c.l.b16 %v297
      %v522 = vunpack.c.l.b16 %v298
      %v523 = vunpack.c.l.b16 %v299
      %v524 = vunpack.c.l.b16 %v300
      %v525 = vpack.c.b16 %v494, %v493
      %v526 = vpack.c.b16 %v496, %v495
      %v527 = vpack.c.b16 %v498, %v497
      %v528 = vpack.c.b16 %v500, %v499
      %v529 = vpack.c.b16 %v502, %v501
      %v530 = vpack.c.b16 %v504, %v503
      %v531 = vpack.c.b16 %v506, %v505
      %v532 = vpack.c.b16 %v508, %v507
      %v533 = vpack.c.b16 %v510, %v509
      %v534 = vpack.c.b16 %v512, %v511
      %v535 = vpack.c.b16 %v514, %v513
      %v536 = vpack.c.b16 %v516, %v515
      %v537 = vpack.c.b16 %v518, %v517
      %v538 = vpack.c.b16 %v520, %v519
      %v539 = vpack.c.b16 %v522, %v521
      %v540 = vpack.c.b16 %v524, %v523
      %557 = vmatpush.bf16.msra.mxu0 %v532
      %558 = vmatpush.bf16.msra.mxu0 %v531
      %559 = vmatpush.bf16.msra.mxu0 %v530
      %560 = vmatpush.bf16.msra.mxu0 %v529
      %561 = vmatpush.bf16.msra.mxu0 %v528
      %562 = vmatpush.bf16.msra.mxu0 %v527
      %563 = vmatpush.bf16.msra.mxu0 %v526
      %564 = vmatpush.bf16.msra.mxu0 %v525
      %565 = vmatmul.bf16.gmra.mxu0 %v397
      %v566 = vpop.f32.mrf.mxu0
      %v567 = vadd.f32 0.0, %v566
      %v568 = vpop.f32.mrf.mxu0
      %v569 = vadd.f32 0.0, %v568
      %570 = vmatmul.bf16.gmra.mxu0 %v399
      %v571 = vpop.f32.mrf.mxu0
      %v572 = vadd.f32 0.0, %v571
      %v573 = vpop.f32.mrf.mxu0
      %v574 = vadd.f32 0.0, %v573
      %575 = vmatmul.bf16.gmra.mxu0 %v401
      %v576 = vpop.f32.mrf.mxu0
      %v577 = vadd.f32 0.0, %v576
      %v578 = vpop.f32.mrf.mxu0
      %v579 = vadd.f32 0.0, %v578
      %580 = vmatmul.bf16.gmra.mxu0 %v403
      %v581 = vpop.f32.mrf.mxu0
      %v582 = vadd.f32 0.0, %v581
      %v583 = vpop.f32.mrf.mxu0
      %v584 = vadd.f32 0.0, %v583
      %585 = vmatmul.bf16.gmra.mxu0 %v405
      %v586 = vpop.f32.mrf.mxu0
      %v587 = vadd.f32 0.0, %v586
      %v588 = vpop.f32.mrf.mxu0
      %v589 = vadd.f32 0.0, %v588
      %590 = vmatmul.bf16.gmra.mxu0 %v407
      %v591 = vpop.f32.mrf.mxu0
      %v592 = vadd.f32 0.0, %v591
      %v593 = vpop.f32.mrf.mxu0
      %v594 = vadd.f32 0.0, %v593
      %595 = vmatmul.bf16.gmra.mxu0 %v409
      %v596 = vpop.f32.mrf.mxu0
      %v597 = vadd.f32 0.0, %v596
      %v598 = vpop.f32.mrf.mxu0
      %v599 = vadd.f32 0.0, %v598
      %600 = vmatmul.bf16.gmra.mxu0 %v411
      %v601 = vpop.f32.mrf.mxu0
      %v602 = vadd.f32 0.0, %v601
      %v603 = vpop.f32.mrf.mxu0
      %v604 = vadd.f32 0.0, %v603
      %605 = vmatmul.bf16.gmra.mxu0 %v413
      %v606 = vpop.f32.mrf.mxu0
      %v607 = vadd.f32 0.0, %v606
      %v608 = vpop.f32.mrf.mxu0
      %v609 = vadd.f32 0.0, %v608
      %610 = vmatmul.bf16.gmra.mxu0 %v415
      %v611 = vpop.f32.mrf.mxu0
      %v612 = vadd.f32 0.0, %v611
      %v613 = vpop.f32.mrf.mxu0
      %v614 = vadd.f32 0.0, %v613
      %615 = vmatmul.bf16.gmra.mxu0 %v417
      %v616 = vpop.f32.mrf.mxu0
      %v617 = vadd.f32 0.0, %v616
      %v618 = vpop.f32.mrf.mxu0
      %v619 = vadd.f32 0.0, %v618
      %620 = vmatmul.bf16.gmra.mxu0 %v419
      %v621 = vpop.f32.mrf.mxu0
      %v622 = vadd.f32 0.0, %v621
      %v623 = vpop.f32.mrf.mxu0
      %v624 = vadd.f32 0.0, %v623
      %625 = vmatmul.bf16.gmra.mxu0 %v421
      %v626 = vpop.f32.mrf.mxu0
      %v627 = vadd.f32 0.0, %v626
      %v628 = vpop.f32.mrf.mxu0
      %v629 = vadd.f32 0.0, %v628
      %630 = vmatmul.bf16.gmra.mxu0 %v423
      %v631 = vpop.f32.mrf.mxu0
      %v632 = vadd.f32 0.0, %v631
      %v633 = vpop.f32.mrf.mxu0
      %v634 = vadd.f32 0.0, %v633
      %635 = vmatmul.bf16.gmra.mxu0 %v425
      %v636 = vpop.f32.mrf.mxu0
      %v637 = vadd.f32 0.0, %v636
      %v638 = vpop.f32.mrf.mxu0
      %v639 = vadd.f32 0.0, %v638
      %640 = vmatmul.bf16.gmra.mxu0 %v427
      %v641 = vpop.f32.mrf.mxu0
      %v642 = vadd.f32 0.0, %v641
      %v643 = vpop.f32.mrf.mxu0
      %v644 = vadd.f32 0.0, %v643
      %645 = vdwg.mxu0
      %646 = vmatpush.bf16.msra.mxu0 %v540
      %647 = vmatpush.bf16.msra.mxu0 %v539
      %648 = vmatpush.bf16.msra.mxu0 %v538
      %649 = vmatpush.bf16.msra.mxu0 %v537
      %650 = vmatpush.bf16.msra.mxu0 %v536
      %651 = vmatpush.bf16.msra.mxu0 %v535
      %652 = vmatpush.bf16.msra.mxu0 %v534
      %653 = vmatpush.bf16.msra.mxu0 %v533
      %654 = vmatmul.bf16.gmra.mxu0 %v398
      %v655 = vpop.f32.mrf.mxu0
      %v656 = vadd.f32 %v567, %v655
      %v657 = vpop.f32.mrf.mxu0
      %v658 = vadd.f32 %v569, %v657
      %659 = vmatmul.bf16.gmra.mxu0 %v400
      %v660 = vpop.f32.mrf.mxu0
      %v661 = vadd.f32 %v572, %v660
      %v662 = vpop.f32.mrf.mxu0
      %v663 = vadd.f32 %v574, %v662
      %664 = vmatmul.bf16.gmra.mxu0 %v402
      %v665 = vpop.f32.mrf.mxu0
      %v666 = vadd.f32 %v577, %v665
      %v667 = vpop.f32.mrf.mxu0
      %v668 = vadd.f32 %v579, %v667
      %669 = vmatmul.bf16.gmra.mxu0 %v404
      %v670 = vpop.f32.mrf.mxu0
      %v671 = vadd.f32 %v582, %v670
      %v672 = vpop.f32.mrf.mxu0
      %v673 = vadd.f32 %v584, %v672
      %674 = vmatmul.bf16.gmra.mxu0 %v406
      %v675 = vpop.f32.mrf.mxu0
      %v676 = vadd.f32 %v587, %v675
      %v677 = vpop.f32.mrf.mxu0
      %v678 = vadd.f32 %v589, %v677
      %679 = vmatmul.bf16.gmra.mxu0 %v408
      %v680 = vpop.f32.mrf.mxu0
      %v681 = vadd.f32 %v592, %v680
      %v682 = vpop.f32.mrf.mxu0
      %v683 = vadd.f32 %v594, %v682
      %684 = vmatmul.bf16.gmra.mxu0 %v410
      %v685 = vpop.f32.mrf.mxu0
      %v686 = vadd.f32 %v597, %v685
      %v687 = vpop.f32.mrf.mxu0
      %v688 = vadd.f32 %v599, %v687
      %689 = vmatmul.bf16.gmra.mxu0 %v412
      %v690 = vpop.f32.mrf.mxu0
      %v691 = vadd.f32 %v602, %v690
      %v692 = vpop.f32.mrf.mxu0
      %v693 = vadd.f32 %v604, %v692
      %694 = vmatmul.bf16.gmra.mxu0 %v414
      %v695 = vpop.f32.mrf.mxu0
      %v696 = vadd.f32 %v607, %v695
      %v697 = vpop.f32.mrf.mxu0
      %v698 = vadd.f32 %v609, %v697
      %699 = vmatmul.bf16.gmra.mxu0 %v416
      %v700 = vpop.f32.mrf.mxu0
      %v701 = vadd.f32 %v612, %v700
      %v702 = vpop.f32.mrf.mxu0
      %v703 = vadd.f32 %v614, %v702
      %704 = vmatmul.bf16.gmra.mxu0 %v418
      %v705 = vpop.f32.mrf.mxu0
      %v706 = vadd.f32 %v617, %v705
      %v707 = vpop.f32.mrf.mxu0
      %v708 = vadd.f32 %v619, %v707
      %709 = vmatmul.bf16.gmra.mxu0 %v420
      %v710 = vpop.f32.mrf.mxu0
      %v711 = vadd.f32 %v622, %v710
      %v712 = vpop.f32.mrf.mxu0
      %v713 = vadd.f32 %v624, %v712
      %714 = vmatmul.bf16.gmra.mxu0 %v422
      %v715 = vpop.f32.mrf.mxu0
      %v716 = vadd.f32 %v627, %v715
      %v717 = vpop.f32.mrf.mxu0
      %v718 = vadd.f32 %v629, %v717
      %719 = vmatmul.bf16.gmra.mxu0 %v424
      %v720 = vpop.f32.mrf.mxu0
      %v721 = vadd.f32 %v632, %v720
      %v722 = vpop.f32.mrf.mxu0
      %v723 = vadd.f32 %v634, %v722
      %724 = vmatmul.bf16.gmra.mxu0 %v426
      %v725 = vpop.f32.mrf.mxu0
      %v726 = vadd.f32 %v637, %v725
      %v727 = vpop.f32.mrf.mxu0
      %v728 = vadd.f32 %v639, %v727
      %729 = vmatmul.bf16.gmra.mxu0 %v428
      %v730 = vpop.f32.mrf.mxu0
      %v731 = vadd.f32 %v642, %v730
      %v732 = vpop.f32.mrf.mxu0
      %v733 = vadd.f32 %v644, %v732
      %734 = vdwg.mxu0
      %735 = vst [vmem:[#allocation2] sm:$0xff] %v656
      %736 = vst [vmem:[#allocation2 + $0x8] sm:$0xff] %v658
      %737 = vst [vmem:[#allocation2 + $0x10] sm:$0xff] %v661
      %738 = vst [vmem:[#allocation2 + $0x18] sm:$0xff] %v663
      %739 = vst [vmem:[#allocation2 + $0x20] sm:$0xff] %v666
      %740 = vst [vmem:[#allocation2 + $0x28] sm:$0xff] %v668
      %741 = vst [vmem:[#allocation2 + $0x30] sm:$0xff] %v671
      %742 = vst [vmem:[#allocation2 + $0x38] sm:$0xff] %v673
      %743 = vst [vmem:[#allocation2 + $0x40] sm:$0xff] %v676
      %744 = vst [vmem:[#allocation2 + $0x48] sm:$0xff] %v678
      %745 = vst [vmem:[#allocation2 + $0x50] sm:$0xff] %v681
      %746 = vst [vmem:[#allocation2 + $0x58] sm:$0xff] %v683
      %747 = vst [vmem:[#allocation2 + $0x60] sm:$0xff] %v686
      %748 = vst [vmem:[#allocation2 + $0x68] sm:$0xff] %v688
      %749 = vst [vmem:[#allocation2 + $0x70] sm:$0xff] %v691
      %750 = vst [vmem:[#allocation2 + $0x78] sm:$0xff] %v693
      %751 = vst [vmem:[#allocation2 + $0x80] sm:$0xff] %v696
      %752 = vst [vmem:[#allocation2 + $0x88] sm:$0xff] %v698
      %753 = vst [vmem:[#allocation2 + $0x90] sm:$0xff] %v701
      %754 = vst [vmem:[#allocation2 + $0x98] sm:$0xff] %v703
      %755 = vst [vmem:[#allocation2 + $0xa0] sm:$0xff] %v706
      %756 = vst [vmem:[#allocation2 + $0xa8] sm:$0xff] %v708
      %757 = vst [vmem:[#allocation2 + $0xb0] sm:$0xff] %v711
      %758 = vst [vmem:[#allocation2 + $0xb8] sm:$0xff] %v713
      %759 = vst [vmem:[#allocation2 + $0xc0] sm:$0xff] %v716
      %760 = vst [vmem:[#allocation2 + $0xc8] sm:$0xff] %v718
      %761 = vst [vmem:[#allocation2 + $0xd0] sm:$0xff] %v721
      %762 = vst [vmem:[#allocation2 + $0xd8] sm:$0xff] %v723
      %763 = vst [vmem:[#allocation2 + $0xe0] sm:$0xff] %v726
      %764 = vst [vmem:[#allocation2 + $0xe8] sm:$0xff] %v728
      %765 = vst [vmem:[#allocation2 + $0xf0] sm:$0xff] %v731
      %766 = vst [vmem:[#allocation2 + $0xf8] sm:$0xff] %v733
      %s767 = sadd.s32 %s230, 1
      %s768 = smul.u32 %s767, 16
      %s769 = sshra.s32 %s768, 3
      %s770 = sand.u32 %s768, 7
      %s771 = smul.u32 %s769, 2
      %s772 = smul.addr %s771, 4
      %s773 = scalar_lea.vmem %s209, %s772
      %v774 = vld [vmem:[%s773] sm:$0xff]
      %v775 = vld [vmem:[%s773 + $0x8] sm:$0xff]
      %v776 = vld [vmem:[%s773 + $0x10] sm:$0xff]
      %v777 = vld [vmem:[%s773 + $0x18] sm:$0xff]
      %v778 = vld [vmem:[%s773 + $0x20] sm:$0xff]
      %v779 = vld [vmem:[%s773 + $0x28] sm:$0xff]
      %v780 = vld [vmem:[%s773 + $0x30] sm:$0xff]
      %v781 = vld [vmem:[%s773 + $0x38] sm:$0xff]
      %v782 = vld [vmem:[%s773 + $0x40] sm:$0xff]
      %v783 = vld [vmem:[%s773 + $0x48] sm:$0xff]
      %v784 = vld [vmem:[%s773 + $0x50] sm:$0xff]
      %v785 = vld [vmem:[%s773 + $0x58] sm:$0xff]
      %v786 = vld [vmem:[%s773 + $0x60] sm:$0xff]
      %v787 = vld [vmem:[%s773 + $0x68] sm:$0xff]
      %v788 = vld [vmem:[%s773 + $0x70] sm:$0xff]
      %v789 = vld [vmem:[%s773 + $0x78] sm:$0xff]
      %v790 = vld [vmem:[%s773 + $0x80] sm:$0xff]
      %v791 = vld [vmem:[%s773 + $0x88] sm:$0xff]
      %v792 = vld [vmem:[%s773 + $0x90] sm:$0xff]
      %v793 = vld [vmem:[%s773 + $0x98] sm:$0xff]
      %v794 = vld [vmem:[%s773 + $0xa0] sm:$0xff]
      %v795 = vld [vmem:[%s773 + $0xa8] sm:$0xff]
      %v796 = vld [vmem:[%s773 + $0xb0] sm:$0xff]
      %v797 = vld [vmem:[%s773 + $0xb8] sm:$0xff]
      %v798 = vld [vmem:[%s773 + $0xc0] sm:$0xff]
      %v799 = vld [vmem:[%s773 + $0xc8] sm:$0xff]
      %v800 = vld [vmem:[%s773 + $0xd0] sm:$0xff]
      %v801 = vld [vmem:[%s773 + $0xd8] sm:$0xff]
      %v802 = vld [vmem:[%s773 + $0xe0] sm:$0xff]
      %v803 = vld [vmem:[%s773 + $0xe8] sm:$0xff]
      %v804 = vld [vmem:[%s773 + $0xf0] sm:$0xff]
      %v805 = vld [vmem:[%s773 + $0xf8] sm:$0xff]
      %s806 = scalar_lea.vmem %s2, 128
      %v807 = vld [vmem:[%s806] sm:$0xf]
      %v808 = vld [vmem:[%s806 + $0x4] sm:$0xf]
      %v809 = vld [vmem:[%s806 + $0x8] sm:$0xf]
      %v810 = vld [vmem:[%s806 + $0xc] sm:$0xf]
      %v811 = vld [vmem:[%s806 + $0x10] sm:$0xf]
      %v812 = vld [vmem:[%s806 + $0x14] sm:$0xf]
      %v813 = vld [vmem:[%s806 + $0x18] sm:$0xf]
      %v814 = vld [vmem:[%s806 + $0x1c] sm:$0xf]
      %v815 = vld [vmem:[%s806 + $0x20] sm:$0xf]
      %v816 = vld [vmem:[%s806 + $0x24] sm:$0xf]
      %v817 = vld [vmem:[%s806 + $0x28] sm:$0xf]
      %v818 = vld [vmem:[%s806 + $0x2c] sm:$0xf]
      %v819 = vld [vmem:[%s806 + $0x30] sm:$0xf]
      %v820 = vld [vmem:[%s806 + $0x34] sm:$0xf]
      %v821 = vld [vmem:[%s806 + $0x38] sm:$0xf]
      %v822 = vld [vmem:[%s806 + $0x3c] sm:$0xf]
      %v823 = vld [vmem:[%s806 + $0x40] sm:$0xf]
      %v824 = vld [vmem:[%s806 + $0x44] sm:$0xf]
      %v825 = vld [vmem:[%s806 + $0x48] sm:$0xf]
      %v826 = vld [vmem:[%s806 + $0x4c] sm:$0xf]
      %v827 = vld [vmem:[%s806 + $0x50] sm:$0xf]
      %v828 = vld [vmem:[%s806 + $0x54] sm:$0xf]
      %v829 = vld [vmem:[%s806 + $0x58] sm:$0xf]
      %v830 = vld [vmem:[%s806 + $0x5c] sm:$0xf]
      %v831 = vld [vmem:[%s806 + $0x60] sm:$0xf]
      %v832 = vld [vmem:[%s806 + $0x64] sm:$0xf]
      %v833 = vld [vmem:[%s806 + $0x68] sm:$0xf]
      %v834 = vld [vmem:[%s806 + $0x6c] sm:$0xf]
      %v835 = vld [vmem:[%s806 + $0x70] sm:$0xf]
      %v836 = vld [vmem:[%s806 + $0x74] sm:$0xf]
      %v837 = vld [vmem:[%s806 + $0x78] sm:$0xf]
      %v838 = vld [vmem:[%s806 + $0x7c] sm:$0xf]
      %v871 = vunpack.c.l.b16 %v774
      %v872 = vunpack.c.h.b16 %v774
      %v873 = vunpack.c.l.b16 %v775
      %v874 = vunpack.c.h.b16 %v775
      %v875 = vunpack.c.l.b16 %v776
      %v876 = vunpack.c.h.b16 %v776
      %v877 = vunpack.c.l.b16 %v777
      %v878 = vunpack.c.h.b16 %v777
      %v879 = vunpack.c.l.b16 %v778
      %v880 = vunpack.c.h.b16 %v778
      %v881 = vunpack.c.l.b16 %v779
      %v882 = vunpack.c.h.b16 %v779
      %v883 = vunpack.c.l.b16 %v780
      %v884 = vunpack.c.h.b16 %v780
      %v885 = vunpack.c.l.b16 %v781
      %v886 = vunpack.c.h.b16 %v781
      %v887 = vunpack.c.l.b16 %v782
      %v888 = vunpack.c.h.b16 %v782
      %v889 = vunpack.c.l.b16 %v783
      %v890 = vunpack.c.h.b16 %v783
      %v891 = vunpack.c.l.b16 %v784
      %v892 = vunpack.c.h.b16 %v784
      %v893 = vunpack.c.l.b16 %v785
      %v894 = vunpack.c.h.b16 %v785
      %v895 = vunpack.c.l.b16 %v786
      %v896 = vunpack.c.h.b16 %v786
      %v897 = vunpack.c.l.b16 %v787
      %v898 = vunpack.c.h.b16 %v787
      %v899 = vunpack.c.l.b16 %v788
      %v900 = vunpack.c.h.b16 %v788
      %v901 = vunpack.c.l.b16 %v789
      %v902 = vunpack.c.h.b16 %v789
      %v903 = vunpack.c.l.b16 %v790
      %v904 = vunpack.c.h.b16 %v790
      %v905 = vunpack.c.l.b16 %v791
      %v906 = vunpack.c.h.b16 %v791
      %v907 = vunpack.c.l.b16 %v792
      %v908 = vunpack.c.h.b16 %v792
      %v909 = vunpack.c.l.b16 %v793
      %v910 = vunpack.c.h.b16 %v793
      %v911 = vunpack.c.l.b16 %v794
      %v912 = vunpack.c.h.b16 %v794
      %v913 = vunpack.c.l.b16 %v795
      %v914 = vunpack.c.h.b16 %v795
      %v915 = vunpack.c.l.b16 %v796
      %v916 = vunpack.c.h.b16 %v796
      %v917 = vunpack.c.l.b16 %v797
      %v918 = vunpack.c.h.b16 %v797
      %v919 = vunpack.c.l.b16 %v798
      %v920 = vunpack.c.h.b16 %v798
      %v921 = vunpack.c.l.b16 %v799
      %v922 = vunpack.c.h.b16 %v799
      %v923 = vunpack.c.l.b16 %v800
      %v924 = vunpack.c.h.b16 %v800
      %v925 = vunpack.c.l.b16 %v801
      %v926 = vunpack.c.h.b16 %v801
      %v927 = vunpack.c.l.b16 %v802
      %v928 = vunpack.c.h.b16 %v802
      %v929 = vunpack.c.l.b16 %v803
      %v930 = vunpack.c.h.b16 %v803
      %v931 = vunpack.c.l.b16 %v804
      %v932 = vunpack.c.h.b16 %v804
      %v933 = vunpack.c.l.b16 %v805
      %v934 = vunpack.c.h.b16 %v805
      %v935 = vpack.c.b16 %v873, %v871
      %v936 = vpack.c.b16 %v874, %v872
      %v937 = vpack.c.b16 %v877, %v875
      %v938 = vpack.c.b16 %v878, %v876
      %v939 = vpack.c.b16 %v881, %v879
      %v940 = vpack.c.b16 %v882, %v880
      %v941 = vpack.c.b16 %v885, %v883
      %v942 = vpack.c.b16 %v886, %v884
      %v943 = vpack.c.b16 %v889, %v887
      %v944 = vpack.c.b16 %v890, %v888
      %v945 = vpack.c.b16 %v893, %v891
      %v946 = vpack.c.b16 %v894, %v892
      %v947 = vpack.c.b16 %v897, %v895
      %v948 = vpack.c.b16 %v898, %v896
      %v949 = vpack.c.b16 %v901, %v899
      %v950 = vpack.c.b16 %v902, %v900
      %v951 = vpack.c.b16 %v905, %v903
      %v952 = vpack.c.b16 %v906, %v904
      %v953 = vpack.c.b16 %v909, %v907
      %v954 = vpack.c.b16 %v910, %v908
      %v955 = vpack.c.b16 %v913, %v911
      %v956 = vpack.c.b16 %v914, %v912
      %v957 = vpack.c.b16 %v917, %v915
      %v958 = vpack.c.b16 %v918, %v916
      %v959 = vpack.c.b16 %v921, %v919
      %v960 = vpack.c.b16 %v922, %v920
      %v961 = vpack.c.b16 %v925, %v923
      %v962 = vpack.c.b16 %v926, %v924
      %v963 = vpack.c.b16 %v929, %v927
      %v964 = vpack.c.b16 %v930, %v928
      %v965 = vpack.c.b16 %v933, %v931
      %v966 = vpack.c.b16 %v934, %v932
      %v1031 = vunpack.c.l.b16 %v807
      %v1032 = vunpack.c.l.b16 %v808
      %v1033 = vunpack.c.l.b16 %v809
      %v1034 = vunpack.c.l.b16 %v810
      %v1035 = vunpack.c.l.b16 %v811
      %v1036 = vunpack.c.l.b16 %v812
      %v1037 = vunpack.c.l.b16 %v813
      %v1038 = vunpack.c.l.b16 %v814
      %v1039 = vunpack.c.l.b16 %v815
      %v1040 = vunpack.c.l.b16 %v816
      %v1041 = vunpack.c.l.b16 %v817
      %v1042 = vunpack.c.l.b16 %v818
      %v1043 = vunpack.c.l.b16 %v819
      %v1044 = vunpack.c.l.b16 %v820
      %v1045 = vunpack.c.l.b16 %v821
      %v1046 = vunpack.c.l.b16 %v822
      %v1047 = vunpack.c.l.b16 %v823
      %v1048 = vunpack.c.l.b16 %v824
      %v1049 = vunpack.c.l.b16 %v825
      %v1050 = vunpack.c.l.b16 %v826
      %v1051 = vunpack.c.l.b16 %v827
      %v1052 = vunpack.c.l.b16 %v828
      %v1053 = vunpack.c.l.b16 %v829
      %v1054 = vunpack.c.l.b16 %v830
      %v1055 = vunpack.c.l.b16 %v831
      %v1056 = vunpack.c.l.b16 %v832
      %v1057 = vunpack.c.l.b16 %v833
      %v1058 = vunpack.c.l.b16 %v834
      %v1059 = vunpack.c.l.b16 %v835
      %v1060 = vunpack.c.l.b16 %v836
      %v1061 = vunpack.c.l.b16 %v837
      %v1062 = vunpack.c.l.b16 %v838
      %v1063 = vpack.c.b16 %v1032, %v1031
      %v1064 = vpack.c.b16 %v1034, %v1033
      %v1065 = vpack.c.b16 %v1036, %v1035
      %v1066 = vpack.c.b16 %v1038, %v1037
      %v1067 = vpack.c.b16 %v1040, %v1039
      %v1068 = vpack.c.b16 %v1042, %v1041
      %v1069 = vpack.c.b16 %v1044, %v1043
      %v1070 = vpack.c.b16 %v1046, %v1045
      %v1071 = vpack.c.b16 %v1048, %v1047
      %v1072 = vpack.c.b16 %v1050, %v1049
      %v1073 = vpack.c.b16 %v1052, %v1051
      %v1074 = vpack.c.b16 %v1054, %v1053
      %v1075 = vpack.c.b16 %v1056, %v1055
      %v1076 = vpack.c.b16 %v1058, %v1057
      %v1077 = vpack.c.b16 %v1060, %v1059
      %v1078 = vpack.c.b16 %v1062, %v1061
      %1095 = vmatpush.bf16.msra.mxu0 %v1070
      %1096 = vmatpush.bf16.msra.mxu0 %v1069
      %1097 = vmatpush.bf16.msra.mxu0 %v1068
      %1098 = vmatpush.bf16.msra.mxu0 %v1067
      %1099 = vmatpush.bf16.msra.mxu0 %v1066
      %1100 = vmatpush.bf16.msra.mxu0 %v1065
      %1101 = vmatpush.bf16.msra.mxu0 %v1064
      %1102 = vmatpush.bf16.msra.mxu0 %v1063
      %1103 = vmatmul.bf16.gmra.mxu0 %v935
      %v1104 = vpop.f32.mrf.mxu0
      %v1105 = vadd.f32 0.0, %v1104
      %v1106 = vpop.f32.mrf.mxu0
      %v1107 = vadd.f32 0.0, %v1106
      %1108 = vmatmul.bf16.gmra.mxu0 %v937
      %v1109 = vpop.f32.mrf.mxu0
      %v1110 = vadd.f32 0.0, %v1109
      %v1111 = vpop.f32.mrf.mxu0
      %v1112 = vadd.f32 0.0, %v1111
      %1113 = vmatmul.bf16.gmra.mxu0 %v939
      %v1114 = vpop.f32.mrf.mxu0
      %v1115 = vadd.f32 0.0, %v1114
      %v1116 = vpop.f32.mrf.mxu0
      %v1117 = vadd.f32 0.0, %v1116
      %1118 = vmatmul.bf16.gmra.mxu0 %v941
      %v1119 = vpop.f32.mrf.mxu0
      %v1120 = vadd.f32 0.0, %v1119
      %v1121 = vpop.f32.mrf.mxu0
      %v1122 = vadd.f32 0.0, %v1121
      %1123 = vmatmul.bf16.gmra.mxu0 %v943
      %v1124 = vpop.f32.mrf.mxu0
      %v1125 = vadd.f32 0.0, %v1124
      %v1126 = vpop.f32.mrf.mxu0
      %v1127 = vadd.f32 0.0, %v1126
      %1128 = vmatmul.bf16.gmra.mxu0 %v945
      %v1129 = vpop.f32.mrf.mxu0
      %v1130 = vadd.f32 0.0, %v1129
      %v1131 = vpop.f32.mrf.mxu0
      %v1132 = vadd.f32 0.0, %v1131
      %1133 = vmatmul.bf16.gmra.mxu0 %v947
      %v1134 = vpop.f32.mrf.mxu0
      %v1135 = vadd.f32 0.0, %v1134
      %v1136 = vpop.f32.mrf.mxu0
      %v1137 = vadd.f32 0.0, %v1136
      %1138 = vmatmul.bf16.gmra.mxu0 %v949
      %v1139 = vpop.f32.mrf.mxu0
      %v1140 = vadd.f32 0.0, %v1139
      %v1141 = vpop.f32.mrf.mxu0
      %v1142 = vadd.f32 0.0, %v1141
      %1143 = vmatmul.bf16.gmra.mxu0 %v951
      %v1144 = vpop.f32.mrf.mxu0
      %v1145 = vadd.f32 0.0, %v1144
      %v1146 = vpop.f32.mrf.mxu0
      %v1147 = vadd.f32 0.0, %v1146
      %1148 = vmatmul.bf16.gmra.mxu0 %v953
      %v1149 = vpop.f32.mrf.mxu0
      %v1150 = vadd.f32 0.0, %v1149
      %v1151 = vpop.f32.mrf.mxu0
      %v1152 = vadd.f32 0.0, %v1151
      %1153 = vmatmul.bf16.gmra.mxu0 %v955
      %v1154 = vpop.f32.mrf.mxu0
      %v1155 = vadd.f32 0.0, %v1154
      %v1156 = vpop.f32.mrf.mxu0
      %v1157 = vadd.f32 0.0, %v1156
      %1158 = vmatmul.bf16.gmra.mxu0 %v957
      %v1159 = vpop.f32.mrf.mxu0
      %v1160 = vadd.f32 0.0, %v1159
      %v1161 = vpop.f32.mrf.mxu0
      %v1162 = vadd.f32 0.0, %v1161
      %1163 = vmatmul.bf16.gmra.mxu0 %v959
      %v1164 = vpop.f32.mrf.mxu0
      %v1165 = vadd.f32 0.0, %v1164
      %v1166 = vpop.f32.mrf.mxu0
      %v1167 = vadd.f32 0.0, %v1166
      %1168 = vmatmul.bf16.gmra.mxu0 %v961
      %v1169 = vpop.f32.mrf.mxu0
      %v1170 = vadd.f32 0.0, %v1169
      %v1171 = vpop.f32.mrf.mxu0
      %v1172 = vadd.f32 0.0, %v1171
      %1173 = vmatmul.bf16.gmra.mxu0 %v963
      %v1174 = vpop.f32.mrf.mxu0
      %v1175 = vadd.f32 0.0, %v1174
      %v1176 = vpop.f32.mrf.mxu0
      %v1177 = vadd.f32 0.0, %v1176
      %1178 = vmatmul.bf16.gmra.mxu0 %v965
      %v1179 = vpop.f32.mrf.mxu0
      %v1180 = vadd.f32 0.0, %v1179
      %v1181 = vpop.f32.mrf.mxu0
      %v1182 = vadd.f32 0.0, %v1181
      %1183 = vdwg.mxu0
      %1184 = vmatpush.bf16.msra.mxu0 %v1078
      %1185 = vmatpush.bf16.msra.mxu0 %v1077
      %1186 = vmatpush.bf16.msra.mxu0 %v1076
      %1187 = vmatpush.bf16.msra.mxu0 %v1075
      %1188 = vmatpush.bf16.msra.mxu0 %v1074
      %1189 = vmatpush.bf16.msra.mxu0 %v1073
      %1190 = vmatpush.bf16.msra.mxu0 %v1072
      %1191 = vmatpush.bf16.msra.mxu0 %v1071
      %1192 = vmatmul.bf16.gmra.mxu0 %v936
      %v1193 = vpop.f32.mrf.mxu0
      %v1194 = vadd.f32 %v1105, %v1193
      %v1195 = vpop.f32.mrf.mxu0
      %v1196 = vadd.f32 %v1107, %v1195
      %1197 = vmatmul.bf16.gmra.mxu0 %v938
      %v1198 = vpop.f32.mrf.mxu0
      %v1199 = vadd.f32 %v1110, %v1198
      %v1200 = vpop.f32.mrf.mxu0
      %v1201 = vadd.f32 %v1112, %v1200
      %1202 = vmatmul.bf16.gmra.mxu0 %v940
      %v1203 = vpop.f32.mrf.mxu0
      %v1204 = vadd.f32 %v1115, %v1203
      %v1205 = vpop.f32.mrf.mxu0
      %v1206 = vadd.f32 %v1117, %v1205
      %1207 = vmatmul.bf16.gmra.mxu0 %v942
      %v1208 = vpop.f32.mrf.mxu0
      %v1209 = vadd.f32 %v1120, %v1208
      %v1210 = vpop.f32.mrf.mxu0
      %v1211 = vadd.f32 %v1122, %v1210
      %1212 = vmatmul.bf16.gmra.mxu0 %v944
      %v1213 = vpop.f32.mrf.mxu0
      %v1214 = vadd.f32 %v1125, %v1213
      %v1215 = vpop.f32.mrf.mxu0
      %v1216 = vadd.f32 %v1127, %v1215
      %1217 = vmatmul.bf16.gmra.mxu0 %v946
      %v1218 = vpop.f32.mrf.mxu0
      %v1219 = vadd.f32 %v1130, %v1218
      %v1220 = vpop.f32.mrf.mxu0
      %v1221 = vadd.f32 %v1132, %v1220
      %1222 = vmatmul.bf16.gmra.mxu0 %v948
      %v1223 = vpop.f32.mrf.mxu0
      %v1224 = vadd.f32 %v1135, %v1223
      %v1225 = vpop.f32.mrf.mxu0
      %v1226 = vadd.f32 %v1137, %v1225
      %1227 = vmatmul.bf16.gmra.mxu0 %v950
      %v1228 = vpop.f32.mrf.mxu0
      %v1229 = vadd.f32 %v1140, %v1228
      %v1230 = vpop.f32.mrf.mxu0
      %v1231 = vadd.f32 %v1142, %v1230
      %1232 = vmatmul.bf16.gmra.mxu0 %v952
      %v1233 = vpop.f32.mrf.mxu0
      %v1234 = vadd.f32 %v1145, %v1233
      %v1235 = vpop.f32.mrf.mxu0
      %v1236 = vadd.f32 %v1147, %v1235
      %1237 = vmatmul.bf16.gmra.mxu0 %v954
      %v1238 = vpop.f32.mrf.mxu0
      %v1239 = vadd.f32 %v1150, %v1238
      %v1240 = vpop.f32.mrf.mxu0
      %v1241 = vadd.f32 %v1152, %v1240
      %1242 = vmatmul.bf16.gmra.mxu0 %v956
      %v1243 = vpop.f32.mrf.mxu0
      %v1244 = vadd.f32 %v1155, %v1243
      %v1245 = vpop.f32.mrf.mxu0
      %v1246 = vadd.f32 %v1157, %v1245
      %1247 = vmatmul.bf16.gmra.mxu0 %v958
      %v1248 = vpop.f32.mrf.mxu0
      %v1249 = vadd.f32 %v1160, %v1248
      %v1250 = vpop.f32.mrf.mxu0
      %v1251 = vadd.f32 %v1162, %v1250
      %1252 = vmatmul.bf16.gmra.mxu0 %v960
      %v1253 = vpop.f32.mrf.mxu0
      %v1254 = vadd.f32 %v1165, %v1253
      %v1255 = vpop.f32.mrf.mxu0
      %v1256 = vadd.f32 %v1167, %v1255
      %1257 = vmatmul.bf16.gmra.mxu0 %v962
      %v1258 = vpop.f32.mrf.mxu0
      %v1259 = vadd.f32 %v1170, %v1258
      %v1260 = vpop.f32.mrf.mxu0
      %v1261 = vadd.f32 %v1172, %v1260
      %1262 = vmatmul.bf16.gmra.mxu0 %v964
      %v1263 = vpop.f32.mrf.mxu0
      %v1264 = vadd.f32 %v1175, %v1263
      %v1265 = vpop.f32.mrf.mxu0
      %v1266 = vadd.f32 %v1177, %v1265
      %1267 = vmatmul.bf16.gmra.mxu0 %v966
      %v1268 = vpop.f32.mrf.mxu0
      %v1269 = vadd.f32 %v1180, %v1268
      %v1270 = vpop.f32.mrf.mxu0
      %v1271 = vadd.f32 %v1182, %v1270
      %1272 = vdwg.mxu0
      %v1273 = vld [vmem:[#allocation2] sm:$0xff]
      %v1274 = vld [vmem:[#allocation2 + $0x8] sm:$0xff]
      %v1275 = vld [vmem:[#allocation2 + $0x10] sm:$0xff]
      %v1276 = vld [vmem:[#allocation2 + $0x18] sm:$0xff]
      %v1277 = vld [vmem:[#allocation2 + $0x20] sm:$0xff]
      %v1278 = vld [vmem:[#allocation2 + $0x28] sm:$0xff]
      %v1279 = vld [vmem:[#allocation2 + $0x30] sm:$0xff]
      %v1280 = vld [vmem:[#allocation2 + $0x38] sm:$0xff]
      %v1281 = vld [vmem:[#allocation2 + $0x40] sm:$0xff]
      %v1282 = vld [vmem:[#allocation2 + $0x48] sm:$0xff]
      %v1283 = vld [vmem:[#allocation2 + $0x50] sm:$0xff]
      %v1284 = vld [vmem:[#allocation2 + $0x58] sm:$0xff]
      %v1285 = vld [vmem:[#allocation2 + $0x60] sm:$0xff]
      %v1286 = vld [vmem:[#allocation2 + $0x68] sm:$0xff]
      %v1287 = vld [vmem:[#allocation2 + $0x70] sm:$0xff]
      %v1288 = vld [vmem:[#allocation2 + $0x78] sm:$0xff]
      %v1289 = vld [vmem:[#allocation2 + $0x80] sm:$0xff]
      %v1290 = vld [vmem:[#allocation2 + $0x88] sm:$0xff]
      %v1291 = vld [vmem:[#allocation2 + $0x90] sm:$0xff]
      %v1292 = vld [vmem:[#allocation2 + $0x98] sm:$0xff]
      %v1293 = vld [vmem:[#allocation2 + $0xa0] sm:$0xff]
      %v1294 = vld [vmem:[#allocation2 + $0xa8] sm:$0xff]
      %v1295 = vld [vmem:[#allocation2 + $0xb0] sm:$0xff]
      %v1296 = vld [vmem:[#allocation2 + $0xb8] sm:$0xff]
      %v1297 = vld [vmem:[#allocation2 + $0xc0] sm:$0xff]
      %v1298 = vld [vmem:[#allocation2 + $0xc8] sm:$0xff]
      %v1299 = vld [vmem:[#allocation2 + $0xd0] sm:$0xff]
      %v1300 = vld [vmem:[#allocation2 + $0xd8] sm:$0xff]
      %v1301 = vld [vmem:[#allocation2 + $0xe0] sm:$0xff]
      %v1302 = vld [vmem:[#allocation2 + $0xe8] sm:$0xff]
      %v1303 = vld [vmem:[#allocation2 + $0xf0] sm:$0xff]
      %v1304 = vld [vmem:[#allocation2 + $0xf8] sm:$0xff]
      %v1305 = vadd.f32 %v1273, %v1194
      %v1306 = vadd.f32 %v1274, %v1196
      %v1307 = vadd.f32 %v1275, %v1199
      %v1308 = vadd.f32 %v1276, %v1201
      %v1309 = vadd.f32 %v1277, %v1204
      %v1310 = vadd.f32 %v1278, %v1206
      %v1311 = vadd.f32 %v1279, %v1209
      %v1312 = vadd.f32 %v1280, %v1211
      %v1313 = vadd.f32 %v1281, %v1214
      %v1314 = vadd.f32 %v1282, %v1216
      %v1315 = vadd.f32 %v1283, %v1219
      %v1316 = vadd.f32 %v1284, %v1221
      %v1317 = vadd.f32 %v1285, %v1224
      %v1318 = vadd.f32 %v1286, %v1226
      %v1319 = vadd.f32 %v1287, %v1229
      %v1320 = vadd.f32 %v1288, %v1231
      %v1321 = vadd.f32 %v1289, %v1234
      %v1322 = vadd.f32 %v1290, %v1236
      %v1323 = vadd.f32 %v1291, %v1239
      %v1324 = vadd.f32 %v1292, %v1241
      %v1325 = vadd.f32 %v1293, %v1244
      %v1326 = vadd.f32 %v1294, %v1246
      %v1327 = vadd.f32 %v1295, %v1249
      %v1328 = vadd.f32 %v1296, %v1251
      %v1329 = vadd.f32 %v1297, %v1254
      %v1330 = vadd.f32 %v1298, %v1256
      %v1331 = vadd.f32 %v1299, %v1259
      %v1332 = vadd.f32 %v1300, %v1261
      %v1333 = vadd.f32 %v1301, %v1264
      %v1334 = vadd.f32 %v1302, %v1266
      %v1335 = vadd.f32 %v1303, %v1269
      %v1336 = vadd.f32 %v1304, %v1271
      %1337 = vst [vmem:[#allocation2] sm:$0xff] %v1305
      %1338 = vst [vmem:[#allocation2 + $0x8] sm:$0xff] %v1306
      %1339 = vst [vmem:[#allocation2 + $0x10] sm:$0xff] %v1307
      %1340 = vst [vmem:[#allocation2 + $0x18] sm:$0xff] %v1308
      %1341 = vst [vmem:[#allocation2 + $0x20] sm:$0xff] %v1309
      %1342 = vst [vmem:[#allocation2 + $0x28] sm:$0xff] %v1310
      %1343 = vst [vmem:[#allocation2 + $0x30] sm:$0xff] %v1311
      %1344 = vst [vmem:[#allocation2 + $0x38] sm:$0xff] %v1312
      %1345 = vst [vmem:[#allocation2 + $0x40] sm:$0xff] %v1313
      %1346 = vst [vmem:[#allocation2 + $0x48] sm:$0xff] %v1314
      %1347 = vst [vmem:[#allocation2 + $0x50] sm:$0xff] %v1315
      %1348 = vst [vmem:[#allocation2 + $0x58] sm:$0xff] %v1316
      %1349 = vst [vmem:[#allocation2 + $0x60] sm:$0xff] %v1317
      %1350 = vst [vmem:[#allocation2 + $0x68] sm:$0xff] %v1318
      %1351 = vst [vmem:[#allocation2 + $0x70] sm:$0xff] %v1319
      %1352 = vst [vmem:[#allocation2 + $0x78] sm:$0xff] %v1320
      %1353 = vst [vmem:[#allocation2 + $0x80] sm:$0xff] %v1321
      %1354 = vst [vmem:[#allocation2 + $0x88] sm:$0xff] %v1322
      %1355 = vst [vmem:[#allocation2 + $0x90] sm:$0xff] %v1323
      %1356 = vst [vmem:[#allocation2 + $0x98] sm:$0xff] %v1324
      %1357 = vst [vmem:[#allocation2 + $0xa0] sm:$0xff] %v1325
      %1358 = vst [vmem:[#allocation2 + $0xa8] sm:$0xff] %v1326
      %1359 = vst [vmem:[#allocation2 + $0xb0] sm:$0xff] %v1327
      %1360 = vst [vmem:[#allocation2 + $0xb8] sm:$0xff] %v1328
      %1361 = vst [vmem:[#allocation2 + $0xc0] sm:$0xff] %v1329
      %1362 = vst [vmem:[#allocation2 + $0xc8] sm:$0xff] %v1330
      %1363 = vst [vmem:[#allocation2 + $0xd0] sm:$0xff] %v1331
      %1364 = vst [vmem:[#allocation2 + $0xd8] sm:$0xff] %v1332
      %1365 = vst [vmem:[#allocation2 + $0xe0] sm:$0xff] %v1333
      %1366 = vst [vmem:[#allocation2 + $0xe8] sm:$0xff] %v1334
      %1367 = vst [vmem:[#allocation2 + $0xf0] sm:$0xff] %v1335
      %1368 = vst [vmem:[#allocation2 + $0xf8] sm:$0xff] %v1336
      %s1369 = sadd.s32 %s230, 2
      %s1370 = smul.u32 %s1369, 16
      %s1371 = sshra.s32 %s1370, 3
      %s1372 = sand.u32 %s1370, 7
      %s1373 = smul.u32 %s1371, 2
      %s1374 = smul.addr %s1373, 4
      %s1375 = scalar_lea.vmem %s209, %s1374
      %v1376 = vld [vmem:[%s1375] sm:$0xff]
      %v1377 = vld [vmem:[%s1375 + $0x8] sm:$0xff]
      %v1378 = vld [vmem:[%s1375 + $0x10] sm:$0xff]
      %v1379 = vld [vmem:[%s1375 + $0x18] sm:$0xff]
      %v1380 = vld [vmem:[%s1375 + $0x20] sm:$0xff]
      %v1381 = vld [vmem:[%s1375 + $0x28] sm:$0xff]
      %v1382 = vld [vmem:[%s1375 + $0x30] sm:$0xff]
      %v1383 = vld [vmem:[%s1375 + $0x38] sm:$0xff]
      %v1384 = vld [vmem:[%s1375 + $0x40] sm:$0xff]
      %v1385 = vld [vmem:[%s1375 + $0x48] sm:$0xff]
      %v1386 = vld [vmem:[%s1375 + $0x50] sm:$0xff]
      %v1387 = vld [vmem:[%s1375 + $0x58] sm:$0xff]
      %v1388 = vld [vmem:[%s1375 + $0x60] sm:$0xff]
      %v1389 = vld [vmem:[%s1375 + $0x68] sm:$0xff]
      %v1390 = vld [vmem:[%s1375 + $0x70] sm:$0xff]
      %v1391 = vld [vmem:[%s1375 + $0x78] sm:$0xff]
      %v1392 = vld [vmem:[%s1375 + $0x80] sm:$0xff]
      %v1393 = vld [vmem:[%s1375 + $0x88] sm:$0xff]
      %v1394 = vld [vmem:[%s1375 + $0x90] sm:$0xff]
      %v1395 = vld [vmem:[%s1375 + $0x98] sm:$0xff]
      %v1396 = vld [vmem:[%s1375 + $0xa0] sm:$0xff]
      %v1397 = vld [vmem:[%s1375 + $0xa8] sm:$0xff]
      %v1398 = vld [vmem:[%s1375 + $0xb0] sm:$0xff]
      %v1399 = vld [vmem:[%s1375 + $0xb8] sm:$0xff]
      %v1400 = vld [vmem:[%s1375 + $0xc0] sm:$0xff]
      %v1401 = vld [vmem:[%s1375 + $0xc8] sm:$0xff]
      %v1402 = vld [vmem:[%s1375 + $0xd0] sm:$0xff]
      %v1403 = vld [vmem:[%s1375 + $0xd8] sm:$0xff]
      %v1404 = vld [vmem:[%s1375 + $0xe0] sm:$0xff]
      %v1405 = vld [vmem:[%s1375 + $0xe8] sm:$0xff]
      %v1406 = vld [vmem:[%s1375 + $0xf0] sm:$0xff]
      %v1407 = vld [vmem:[%s1375 + $0xf8] sm:$0xff]
      %s1408 = scalar_lea.vmem %s2, 256
      %v1409 = vld [vmem:[%s1408] sm:$0xf]
      %v1410 = vld [vmem:[%s1408 + $0x4] sm:$0xf]
      %v1411 = vld [vmem:[%s1408 + $0x8] sm:$0xf]
      %v1412 = vld [vmem:[%s1408 + $0xc] sm:$0xf]
      %v1413 = vld [vmem:[%s1408 + $0x10] sm:$0xf]
      %v1414 = vld [vmem:[%s1408 + $0x14] sm:$0xf]
      %v1415 = vld [vmem:[%s1408 + $0x18] sm:$0xf]
      %v1416 = vld [vmem:[%s1408 + $0x1c] sm:$0xf]
      %v1417 = vld [vmem:[%s1408 + $0x20] sm:$0xf]
      %v1418 = vld [vmem:[%s1408 + $0x24] sm:$0xf]
      %v1419 = vld [vmem:[%s1408 + $0x28] sm:$0xf]
      %v1420 = vld [vmem:[%s1408 + $0x2c] sm:$0xf]
      %v1421 = vld [vmem:[%s1408 + $0x30] sm:$0xf]
      %v1422 = vld [vmem:[%s1408 + $0x34] sm:$0xf]
      %v1423 = vld [vmem:[%s1408 + $0x38] sm:$0xf]
      %v1424 = vld [vmem:[%s1408 + $0x3c] sm:$0xf]
      %v1425 = vld [vmem:[%s1408 + $0x40] sm:$0xf]
      %v1426 = vld [vmem:[%s1408 + $0x44] sm:$0xf]
      %v1427 = vld [vmem:[%s1408 + $0x48] sm:$0xf]
      %v1428 = vld [vmem:[%s1408 + $0x4c] sm:$0xf]
      %v1429 = vld [vmem:[%s1408 + $0x50] sm:$0xf]
      %v1430 = vld [vmem:[%s1408 + $0x54] sm:$0xf]
      %v1431 = vld [vmem:[%s1408 + $0x58] sm:$0xf]
      %v1432 = vld [vmem:[%s1408 + $0x5c] sm:$0xf]
      %v1433 = vld [vmem:[%s1408 + $0x60] sm:$0xf]
      %v1434 = vld [vmem:[%s1408 + $0x64] sm:$0xf]
      %v1435 = vld [vmem:[%s1408 + $0x68] sm:$0xf]
      %v1436 = vld [vmem:[%s1408 + $0x6c] sm:$0xf]
      %v1437 = vld [vmem:[%s1408 + $0x70] sm:$0xf]
      %v1438 = vld [vmem:[%s1408 + $0x74] sm:$0xf]
      %v1439 = vld [vmem:[%s1408 + $0x78] sm:$0xf]
      %v1440 = vld [vmem:[%s1408 + $0x7c] sm:$0xf]
      %v1473 = vunpack.c.l.b16 %v1376
      %v1474 = vunpack.c.h.b16 %v1376
      %v1475 = vunpack.c.l.b16 %v1377
      %v1476 = vunpack.c.h.b16 %v1377
      %v1477 = vunpack.c.l.b16 %v1378
      %v1478 = vunpack.c.h.b16 %v1378
      %v1479 = vunpack.c.l.b16 %v1379
      %v1480 = vunpack.c.h.b16 %v1379
      %v1481 = vunpack.c.l.b16 %v1380
      %v1482 = vunpack.c.h.b16 %v1380
      %v1483 = vunpack.c.l.b16 %v1381
      %v1484 = vunpack.c.h.b16 %v1381
      %v1485 = vunpack.c.l.b16 %v1382
      %v1486 = vunpack.c.h.b16 %v1382
      %v1487 = vunpack.c.l.b16 %v1383
      %v1488 = vunpack.c.h.b16 %v1383
      %v1489 = vunpack.c.l.b16 %v1384
      %v1490 = vunpack.c.h.b16 %v1384
      %v1491 = vunpack.c.l.b16 %v1385
      %v1492 = vunpack.c.h.b16 %v1385
      %v1493 = vunpack.c.l.b16 %v1386
      %v1494 = vunpack.c.h.b16 %v1386
      %v1495 = vunpack.c.l.b16 %v1387
      %v1496 = vunpack.c.h.b16 %v1387
      %v1497 = vunpack.c.l.b16 %v1388
      %v1498 = vunpack.c.h.b16 %v1388
      %v1499 = vunpack.c.l.b16 %v1389
      %v1500 = vunpack.c.h.b16 %v1389
      %v1501 = vunpack.c.l.b16 %v1390
      %v1502 = vunpack.c.h.b16 %v1390
      %v1503 = vunpack.c.l.b16 %v1391
      %v1504 = vunpack.c.h.b16 %v1391
      %v1505 = vunpack.c.l.b16 %v1392
      %v1506 = vunpack.c.h.b16 %v1392
      %v1507 = vunpack.c.l.b16 %v1393
      %v1508 = vunpack.c.h.b16 %v1393
      %v1509 = vunpack.c.l.b16 %v1394
      %v1510 = vunpack.c.h.b16 %v1394
      %v1511 = vunpack.c.l.b16 %v1395
      %v1512 = vunpack.c.h.b16 %v1395
      %v1513 = vunpack.c.l.b16 %v1396
      %v1514 = vunpack.c.h.b16 %v1396
      %v1515 = vunpack.c.l.b16 %v1397
      %v1516 = vunpack.c.h.b16 %v1397
      %v1517 = vunpack.c.l.b16 %v1398
      %v1518 = vunpack.c.h.b16 %v1398
      %v1519 = vunpack.c.l.b16 %v1399
      %v1520 = vunpack.c.h.b16 %v1399
      %v1521 = vunpack.c.l.b16 %v1400
      %v1522 = vunpack.c.h.b16 %v1400
      %v1523 = vunpack.c.l.b16 %v1401
      %v1524 = vunpack.c.h.b16 %v1401
      %v1525 = vunpack.c.l.b16 %v1402
      %v1526 = vunpack.c.h.b16 %v1402
      %v1527 = vunpack.c.l.b16 %v1403
      %v1528 = vunpack.c.h.b16 %v1403
      %v1529 = vunpack.c.l.b16 %v1404
      %v1530 = vunpack.c.h.b16 %v1404
      %v1531 = vunpack.c.l.b16 %v1405
      %v1532 = vunpack.c.h.b16 %v1405
      %v1533 = vunpack.c.l.b16 %v1406
      %v1534 = vunpack.c.h.b16 %v1406
      %v1535 = vunpack.c.l.b16 %v1407
      %v1536 = vunpack.c.h.b16 %v1407
      %v1537 = vpack.c.b16 %v1475, %v1473
      %v1538 = vpack.c.b16 %v1476, %v1474
      %v1539 = vpack.c.b16 %v1479, %v1477
      %v1540 = vpack.c.b16 %v1480, %v1478
      %v1541 = vpack.c.b16 %v1483, %v1481
      %v1542 = vpack.c.b16 %v1484, %v1482
      %v1543 = vpack.c.b16 %v1487, %v1485
      %v1544 = vpack.c.b16 %v1488, %v1486
      %v1545 = vpack.c.b16 %v1491, %v1489
      %v1546 = vpack.c.b16 %v1492, %v1490
      %v1547 = vpack.c.b16 %v1495, %v1493
      %v1548 = vpack.c.b16 %v1496, %v1494
      %v1549 = vpack.c.b16 %v1499, %v1497
      %v1550 = vpack.c.b16 %v1500, %v1498
      %v1551 = vpack.c.b16 %v1503, %v1501
      %v1552 = vpack.c.b16 %v1504, %v1502
      %v1553 = vpack.c.b16 %v1507, %v1505
      %v1554 = vpack.c.b16 %v1508, %v1506
      %v1555 = vpack.c.b16 %v1511, %v1509
      %v1556 = vpack.c.b16 %v1512, %v1510
      %v1557 = vpack.c.b16 %v1515, %v1513
      %v1558 = vpack.c.b16 %v1516, %v1514
      %v1559 = vpack.c.b16 %v1519, %v1517
      %v1560 = vpack.c.b16 %v1520, %v1518
      %v1561 = vpack.c.b16 %v1523, %v1521
      %v1562 = vpack.c.b16 %v1524, %v1522
      %v1563 = vpack.c.b16 %v1527, %v1525
      %v1564 = vpack.c.b16 %v1528, %v1526
      %v1565 = vpack.c.b16 %v1531, %v1529
      %v1566 = vpack.c.b16 %v1532, %v1530
      %v1567 = vpack.c.b16 %v1535, %v1533
      %v1568 = vpack.c.b16 %v1536, %v1534
      %v1633 = vunpack.c.l.b16 %v1409
      %v1634 = vunpack.c.l.b16 %v1410
      %v1635 = vunpack.c.l.b16 %v1411
      %v1636 = vunpack.c.l.b16 %v1412
      %v1637 = vunpack.c.l.b16 %v1413
      %v1638 = vunpack.c.l.b16 %v1414
      %v1639 = vunpack.c.l.b16 %v1415
      %v1640 = vunpack.c.l.b16 %v1416
      %v1641 = vunpack.c.l.b16 %v1417
      %v1642 = vunpack.c.l.b16 %v1418
      %v1643 = vunpack.c.l.b16 %v1419
      %v1644 = vunpack.c.l.b16 %v1420
      %v1645 = vunpack.c.l.b16 %v1421
      %v1646 = vunpack.c.l.b16 %v1422
      %v1647 = vunpack.c.l.b16 %v1423
      %v1648 = vunpack.c.l.b16 %v1424
      %v1649 = vunpack.c.l.b16 %v1425
      %v1650 = vunpack.c.l.b16 %v1426
      %v1651 = vunpack.c.l.b16 %v1427
      %v1652 = vunpack.c.l.b16 %v1428
      %v1653 = vunpack.c.l.b16 %v1429
      %v1654 = vunpack.c.l.b16 %v1430
      %v1655 = vunpack.c.l.b16 %v1431
      %v1656 = vunpack.c.l.b16 %v1432
      %v1657 = vunpack.c.l.b16 %v1433
      %v1658 = vunpack.c.l.b16 %v1434
      %v1659 = vunpack.c.l.b16 %v1435
      %v1660 = vunpack.c.l.b16 %v1436
      %v1661 = vunpack.c.l.b16 %v1437
      %v1662 = vunpack.c.l.b16 %v1438
      %v1663 = vunpack.c.l.b16 %v1439
      %v1664 = vunpack.c.l.b16 %v1440
      %v1665 = vpack.c.b16 %v1634, %v1633
      %v1666 = vpack.c.b16 %v1636, %v1635
      %v1667 = vpack.c.b16 %v1638, %v1637
      %v1668 = vpack.c.b16 %v1640, %v1639
      %v1669 = vpack.c.b16 %v1642, %v1641
      %v1670 = vpack.c.b16 %v1644, %v1643
      %v1671 = vpack.c.b16 %v1646, %v1645
      %v1672 = vpack.c.b16 %v1648, %v1647
      %v1673 = vpack.c.b16 %v1650, %v1649
      %v1674 = vpack.c.b16 %v1652, %v1651
      %v1675 = vpack.c.b16 %v1654, %v1653
      %v1676 = vpack.c.b16 %v1656, %v1655
      %v1677 = vpack.c.b16 %v1658, %v1657
      %v1678 = vpack.c.b16 %v1660, %v1659
      %v1679 = vpack.c.b16 %v1662, %v1661
      %v1680 = vpack.c.b16 %v1664, %v1663
      %1697 = vmatpush.bf16.msra.mxu0 %v1672
      %1698 = vmatpush.bf16.msra.mxu0 %v1671
      %1699 = vmatpush.bf16.msra.mxu0 %v1670
      %1700 = vmatpush.bf16.msra.mxu0 %v1669
      %1701 = vmatpush.bf16.msra.mxu0 %v1668
      %1702 = vmatpush.bf16.msra.mxu0 %v1667
      %1703 = vmatpush.bf16.msra.mxu0 %v1666
      %1704 = vmatpush.bf16.msra.mxu0 %v1665
      %1705 = vmatmul.bf16.gmra.mxu0 %v1537
      %v1706 = vpop.f32.mrf.mxu0
      %v1707 = vadd.f32 0.0, %v1706
      %v1708 = vpop.f32.mrf.mxu0
      %v1709 = vadd.f32 0.0, %v1708
      %1710 = vmatmul.bf16.gmra.mxu0 %v1539
      %v1711 = vpop.f32.mrf.mxu0
      %v1712 = vadd.f32 0.0, %v1711
      %v1713 = vpop.f32.mrf.mxu0
      %v1714 = vadd.f32 0.0, %v1713
      %1715 = vmatmul.bf16.gmra.mxu0 %v1541
      %v1716 = vpop.f32.mrf.mxu0
      %v1717 = vadd.f32 0.0, %v1716
      %v1718 = vpop.f32.mrf.mxu0
      %v1719 = vadd.f32 0.0, %v1718
      %1720 = vmatmul.bf16.gmra.mxu0 %v1543
      %v1721 = vpop.f32.mrf.mxu0
      %v1722 = vadd.f32 0.0, %v1721
      %v1723 = vpop.f32.mrf.mxu0
      %v1724 = vadd.f32 0.0, %v1723
      %1725 = vmatmul.bf16.gmra.mxu0 %v1545
      %v1726 = vpop.f32.mrf.mxu0
      %v1727 = vadd.f32 0.0, %v1726
      %v1728 = vpop.f32.mrf.mxu0
      %v1729 = vadd.f32 0.0, %v1728
      %1730 = vmatmul.bf16.gmra.mxu0 %v1547
      %v1731 = vpop.f32.mrf.mxu0
      %v1732 = vadd.f32 0.0, %v1731
      %v1733 = vpop.f32.mrf.mxu0
      %v1734 = vadd.f32 0.0, %v1733
      %1735 = vmatmul.bf16.gmra.mxu0 %v1549
      %v1736 = vpop.f32.mrf.mxu0
      %v1737 = vadd.f32 0.0, %v1736
      %v1738 = vpop.f32.mrf.mxu0
      %v1739 = vadd.f32 0.0, %v1738
      %1740 = vmatmul.bf16.gmra.mxu0 %v1551
      %v1741 = vpop.f32.mrf.mxu0
      %v1742 = vadd.f32 0.0, %v1741
      %v1743 = vpop.f32.mrf.mxu0
      %v1744 = vadd.f32 0.0, %v1743
      %1745 = vmatmul.bf16.gmra.mxu0 %v1553
      %v1746 = vpop.f32.mrf.mxu0
      %v1747 = vadd.f32 0.0, %v1746
      %v1748 = vpop.f32.mrf.mxu0
      %v1749 = vadd.f32 0.0, %v1748
      %1750 = vmatmul.bf16.gmra.mxu0 %v1555
      %v1751 = vpop.f32.mrf.mxu0
      %v1752 = vadd.f32 0.0, %v1751
      %v1753 = vpop.f32.mrf.mxu0
      %v1754 = vadd.f32 0.0, %v1753
      %1755 = vmatmul.bf16.gmra.mxu0 %v1557
      %v1756 = vpop.f32.mrf.mxu0
      %v1757 = vadd.f32 0.0, %v1756
      %v1758 = vpop.f32.mrf.mxu0
      %v1759 = vadd.f32 0.0, %v1758
      %1760 = vmatmul.bf16.gmra.mxu0 %v1559
      %v1761 = vpop.f32.mrf.mxu0
      %v1762 = vadd.f32 0.0, %v1761
      %v1763 = vpop.f32.mrf.mxu0
      %v1764 = vadd.f32 0.0, %v1763
      %1765 = vmatmul.bf16.gmra.mxu0 %v1561
      %v1766 = vpop.f32.mrf.mxu0
      %v1767 = vadd.f32 0.0, %v1766
      %v1768 = vpop.f32.mrf.mxu0
      %v1769 = vadd.f32 0.0, %v1768
      %1770 = vmatmul.bf16.gmra.mxu0 %v1563
      %v1771 = vpop.f32.mrf.mxu0
      %v1772 = vadd.f32 0.0, %v1771
      %v1773 = vpop.f32.mrf.mxu0
      %v1774 = vadd.f32 0.0, %v1773
      %1775 = vmatmul.bf16.gmra.mxu0 %v1565
      %v1776 = vpop.f32.mrf.mxu0
      %v1777 = vadd.f32 0.0, %v1776
      %v1778 = vpop.f32.mrf.mxu0
      %v1779 = vadd.f32 0.0, %v1778
      %1780 = vmatmul.bf16.gmra.mxu0 %v1567
      %v1781 = vpop.f32.mrf.mxu0
      %v1782 = vadd.f32 0.0, %v1781
      %v1783 = vpop.f32.mrf.mxu0
      %v1784 = vadd.f32 0.0, %v1783
      %1785 = vdwg.mxu0
      %1786 = vmatpush.bf16.msra.mxu0 %v1680
      %1787 = vmatpush.bf16.msra.mxu0 %v1679
      %1788 = vmatpush.bf16.msra.mxu0 %v1678
      %1789 = vmatpush.bf16.msra.mxu0 %v1677
      %1790 = vmatpush.bf16.msra.mxu0 %v1676
      %1791 = vmatpush.bf16.msra.mxu0 %v1675
      %1792 = vmatpush.bf16.msra.mxu0 %v1674
      %1793 = vmatpush.bf16.msra.mxu0 %v1673
      %1794 = vmatmul.bf16.gmra.mxu0 %v1538
      %v1795 = vpop.f32.mrf.mxu0
      %v1796 = vadd.f32 %v1707, %v1795
      %v1797 = vpop.f32.mrf.mxu0
      %v1798 = vadd.f32 %v1709, %v1797
      %1799 = vmatmul.bf16.gmra.mxu0 %v1540
      %v1800 = vpop.f32.mrf.mxu0
      %v1801 = vadd.f32 %v1712, %v1800
      %v1802 = vpop.f32.mrf.mxu0
      %v1803 = vadd.f32 %v1714, %v1802
      %1804 = vmatmul.bf16.gmra.mxu0 %v1542
      %v1805 = vpop.f32.mrf.mxu0
      %v1806 = vadd.f32 %v1717, %v1805
      %v1807 = vpop.f32.mrf.mxu0
      %v1808 = vadd.f32 %v1719, %v1807
      %1809 = vmatmul.bf16.gmra.mxu0 %v1544
      %v1810 = vpop.f32.mrf.mxu0
      %v1811 = vadd.f32 %v1722, %v1810
      %v1812 = vpop.f32.mrf.mxu0
      %v1813 = vadd.f32 %v1724, %v1812
      %1814 = vmatmul.bf16.gmra.mxu0 %v1546
      %v1815 = vpop.f32.mrf.mxu0
      %v1816 = vadd.f32 %v1727, %v1815
      %v1817 = vpop.f32.mrf.mxu0
      %v1818 = vadd.f32 %v1729, %v1817
      %1819 = vmatmul.bf16.gmra.mxu0 %v1548
      %v1820 = vpop.f32.mrf.mxu0
      %v1821 = vadd.f32 %v1732, %v1820
      %v1822 = vpop.f32.mrf.mxu0
      %v1823 = vadd.f32 %v1734, %v1822
      %1824 = vmatmul.bf16.gmra.mxu0 %v1550
      %v1825 = vpop.f32.mrf.mxu0
      %v1826 = vadd.f32 %v1737, %v1825
      %v1827 = vpop.f32.mrf.mxu0
      %v1828 = vadd.f32 %v1739, %v1827
      %1829 = vmatmul.bf16.gmra.mxu0 %v1552
      %v1830 = vpop.f32.mrf.mxu0
      %v1831 = vadd.f32 %v1742, %v1830
      %v1832 = vpop.f32.mrf.mxu0
      %v1833 = vadd.f32 %v1744, %v1832
      %1834 = vmatmul.bf16.gmra.mxu0 %v1554
      %v1835 = vpop.f32.mrf.mxu0
      %v1836 = vadd.f32 %v1747, %v1835
      %v1837 = vpop.f32.mrf.mxu0
      %v1838 = vadd.f32 %v1749, %v1837
      %1839 = vmatmul.bf16.gmra.mxu0 %v1556
      %v1840 = vpop.f32.mrf.mxu0
      %v1841 = vadd.f32 %v1752, %v1840
      %v1842 = vpop.f32.mrf.mxu0
      %v1843 = vadd.f32 %v1754, %v1842
      %1844 = vmatmul.bf16.gmra.mxu0 %v1558
      %v1845 = vpop.f32.mrf.mxu0
      %v1846 = vadd.f32 %v1757, %v1845
      %v1847 = vpop.f32.mrf.mxu0
      %v1848 = vadd.f32 %v1759, %v1847
      %1849 = vmatmul.bf16.gmra.mxu0 %v1560
      %v1850 = vpop.f32.mrf.mxu0
      %v1851 = vadd.f32 %v1762, %v1850
      %v1852 = vpop.f32.mrf.mxu0
      %v1853 = vadd.f32 %v1764, %v1852
      %1854 = vmatmul.bf16.gmra.mxu0 %v1562
      %v1855 = vpop.f32.mrf.mxu0
      %v1856 = vadd.f32 %v1767, %v1855
      %v1857 = vpop.f32.mrf.mxu0
      %v1858 = vadd.f32 %v1769, %v1857
      %1859 = vmatmul.bf16.gmra.mxu0 %v1564
      %v1860 = vpop.f32.mrf.mxu0
      %v1861 = vadd.f32 %v1772, %v1860
      %v1862 = vpop.f32.mrf.mxu0
      %v1863 = vadd.f32 %v1774, %v1862
      %1864 = vmatmul.bf16.gmra.mxu0 %v1566
      %v1865 = vpop.f32.mrf.mxu0
      %v1866 = vadd.f32 %v1777, %v1865
      %v1867 = vpop.f32.mrf.mxu0
      %v1868 = vadd.f32 %v1779, %v1867
      %1869 = vmatmul.bf16.gmra.mxu0 %v1568
      %v1870 = vpop.f32.mrf.mxu0
      %v1871 = vadd.f32 %v1782, %v1870
      %v1872 = vpop.f32.mrf.mxu0
      %v1873 = vadd.f32 %v1784, %v1872
      %1874 = vdwg.mxu0
      %v1875 = vld [vmem:[#allocation2] sm:$0xff]
      %v1876 = vld [vmem:[#allocation2 + $0x8] sm:$0xff]
      %v1877 = vld [vmem:[#allocation2 + $0x10] sm:$0xff]
      %v1878 = vld [vmem:[#allocation2 + $0x18] sm:$0xff]
      %v1879 = vld [vmem:[#allocation2 + $0x20] sm:$0xff]
      %v1880 = vld [vmem:[#allocation2 + $0x28] sm:$0xff]
      %v1881 = vld [vmem:[#allocation2 + $0x30] sm:$0xff]
      %v1882 = vld [vmem:[#allocation2 + $0x38] sm:$0xff]
      %v1883 = vld [vmem:[#allocation2 + $0x40] sm:$0xff]
      %v1884 = vld [vmem:[#allocation2 + $0x48] sm:$0xff]
      %v1885 = vld [vmem:[#allocation2 + $0x50] sm:$0xff]
      %v1886 = vld [vmem:[#allocation2 + $0x58] sm:$0xff]
      %v1887 = vld [vmem:[#allocation2 + $0x60] sm:$0xff]
      %v1888 = vld [vmem:[#allocation2 + $0x68] sm:$0xff]
      %v1889 = vld [vmem:[#allocation2 + $0x70] sm:$0xff]
      %v1890 = vld [vmem:[#allocation2 + $0x78] sm:$0xff]
      %v1891 = vld [vmem:[#allocation2 + $0x80] sm:$0xff]
      %v1892 = vld [vmem:[#allocation2 + $0x88] sm:$0xff]
      %v1893 = vld [vmem:[#allocation2 + $0x90] sm:$0xff]
      %v1894 = vld [vmem:[#allocation2 + $0x98] sm:$0xff]
      %v1895 = vld [vmem:[#allocation2 + $0xa0] sm:$0xff]
      %v1896 = vld [vmem:[#allocation2 + $0xa8] sm:$0xff]
      %v1897 = vld [vmem:[#allocation2 + $0xb0] sm:$0xff]
      %v1898 = vld [vmem:[#allocation2 + $0xb8] sm:$0xff]
      %v1899 = vld [vmem:[#allocation2 + $0xc0] sm:$0xff]
      %v1900 = vld [vmem:[#allocation2 + $0xc8] sm:$0xff]
      %v1901 = vld [vmem:[#allocation2 + $0xd0] sm:$0xff]
      %v1902 = vld [vmem:[#allocation2 + $0xd8] sm:$0xff]
      %v1903 = vld [vmem:[#allocation2 + $0xe0] sm:$0xff]
      %v1904 = vld [vmem:[#allocation2 + $0xe8] sm:$0xff]
      %v1905 = vld [vmem:[#allocation2 + $0xf0] sm:$0xff]
      %v1906 = vld [vmem:[#allocation2 + $0xf8] sm:$0xff]
      %v1907 = vadd.f32 %v1875, %v1796
      %v1908 = vadd.f32 %v1876, %v1798
      %v1909 = vadd.f32 %v1877, %v1801
      %v1910 = vadd.f32 %v1878, %v1803
      %v1911 = vadd.f32 %v1879, %v1806
      %v1912 = vadd.f32 %v1880, %v1808
      %v1913 = vadd.f32 %v1881, %v1811
      %v1914 = vadd.f32 %v1882, %v1813
      %v1915 = vadd.f32 %v1883, %v1816
      %v1916 = vadd.f32 %v1884, %v1818
      %v1917 = vadd.f32 %v1885, %v1821
      %v1918 = vadd.f32 %v1886, %v1823
      %v1919 = vadd.f32 %v1887, %v1826
      %v1920 = vadd.f32 %v1888, %v1828
      %v1921 = vadd.f32 %v1889, %v1831
      %v1922 = vadd.f32 %v1890, %v1833
      %v1923 = vadd.f32 %v1891, %v1836
      %v1924 = vadd.f32 %v1892, %v1838
      %v1925 = vadd.f32 %v1893, %v1841
      %v1926 = vadd.f32 %v1894, %v1843
      %v1927 = vadd.f32 %v1895, %v1846
      %v1928 = vadd.f32 %v1896, %v1848
      %v1929 = vadd.f32 %v1897, %v1851
      %v1930 = vadd.f32 %v1898, %v1853
      %v1931 = vadd.f32 %v1899, %v1856
      %v1932 = vadd.f32 %v1900, %v1858
      %v1933 = vadd.f32 %v1901, %v1861
      %v1934 = vadd.f32 %v1902, %v1863
      %v1935 = vadd.f32 %v1903, %v1866
      %v1936 = vadd.f32 %v1904, %v1868
      %v1937 = vadd.f32 %v1905, %v1871
      %v1938 = vadd.f32 %v1906, %v1873
      %1939 = vst [vmem:[#allocation2] sm:$0xff] %v1907
      %1940 = vst [vmem:[#allocation2 + $0x8] sm:$0xff] %v1908
      %1941 = vst [vmem:[#allocation2 + $0x10] sm:$0xff] %v1909
      %1942 = vst [vmem:[#allocation2 + $0x18] sm:$0xff] %v1910
      %1943 = vst [vmem:[#allocation2 + $0x20] sm:$0xff] %v1911
      %1944 = vst [vmem:[#allocation2 + $0x28] sm:$0xff] %v1912
      %1945 = vst [vmem:[#allocation2 + $0x30] sm:$0xff] %v1913
      %1946 = vst [vmem:[#allocation2 + $0x38] sm:$0xff] %v1914
      %1947 = vst [vmem:[#allocation2 + $0x40] sm:$0xff] %v1915
      %1948 = vst [vmem:[#allocation2 + $0x48] sm:$0xff] %v1916
      %1949 = vst [vmem:[#allocation2 + $0x50] sm:$0xff] %v1917
      %1950 = vst [vmem:[#allocation2 + $0x58] sm:$0xff] %v1918
      %1951 = vst [vmem:[#allocation2 + $0x60] sm:$0xff] %v1919
      %1952 = vst [vmem:[#allocation2 + $0x68] sm:$0xff] %v1920
      %1953 = vst [vmem:[#allocation2 + $0x70] sm:$0xff] %v1921
      %1954 = vst [vmem:[#allocation2 + $0x78] sm:$0xff] %v1922
      %1955 = vst [vmem:[#allocation2 + $0x80] sm:$0xff] %v1923
      %1956 = vst [vmem:[#allocation2 + $0x88] sm:$0xff] %v1924
      %1957 = vst [vmem:[#allocation2 + $0x90] sm:$0xff] %v1925
      %1958 = vst [vmem:[#allocation2 + $0x98] sm:$0xff] %v1926
      %1959 = vst [vmem:[#allocation2 + $0xa0] sm:$0xff] %v1927
      %1960 = vst [vmem:[#allocation2 + $0xa8] sm:$0xff] %v1928
      %1961 = vst [vmem:[#allocation2 + $0xb0] sm:$0xff] %v1929
      %1962 = vst [vmem:[#allocation2 + $0xb8] sm:$0xff] %v1930
      %1963 = vst [vmem:[#allocation2 + $0xc0] sm:$0xff] %v1931
      %1964 = vst [vmem:[#allocation2 + $0xc8] sm:$0xff] %v1932
      %1965 = vst [vmem:[#allocation2 + $0xd0] sm:$0xff] %v1933
      %1966 = vst [vmem:[#allocation2 + $0xd8] sm:$0xff] %v1934
      %1967 = vst [vmem:[#allocation2 + $0xe0] sm:$0xff] %v1935
      %1968 = vst [vmem:[#allocation2 + $0xe8] sm:$0xff] %v1936
      %1969 = vst [vmem:[#allocation2 + $0xf0] sm:$0xff] %v1937
      %1970 = vst [vmem:[#allocation2 + $0xf8] sm:$0xff] %v1938
      %s1971 = sadd.s32 %s230, 3
      %s1972 = smul.u32 %s1971, 16
      %s1973 = sshra.s32 %s1972, 3
      %s1974 = sand.u32 %s1972, 7
      %s1975 = smul.u32 %s1973, 2
      %s1976 = smul.addr %s1975, 4
      %s1977 = scalar_lea.vmem %s209, %s1976
      %v1978 = vld [vmem:[%s1977] sm:$0xff]
      %v1979 = vld [vmem:[%s1977 + $0x8] sm:$0xff]
      %v1980 = vld [vmem:[%s1977 + $0x10] sm:$0xff]
      %v1981 = vld [vmem:[%s1977 + $0x18] sm:$0xff]
      %v1982 = vld [vmem:[%s1977 + $0x20] sm:$0xff]
      %v1983 = vld [vmem:[%s1977 + $0x28] sm:$0xff]
      %v1984 = vld [vmem:[%s1977 + $0x30] sm:$0xff]
      %v1985 = vld [vmem:[%s1977 + $0x38] sm:$0xff]
      %v1986 = vld [vmem:[%s1977 + $0x40] sm:$0xff]
      %v1987 = vld [vmem:[%s1977 + $0x48] sm:$0xff]
      %v1988 = vld [vmem:[%s1977 + $0x50] sm:$0xff]
      %v1989 = vld [vmem:[%s1977 + $0x58] sm:$0xff]
      %v1990 = vld [vmem:[%s1977 + $0x60] sm:$0xff]
      %v1991 = vld [vmem:[%s1977 + $0x68] sm:$0xff]
      %v1992 = vld [vmem:[%s1977 + $0x70] sm:$0xff]
      %v1993 = vld [vmem:[%s1977 + $0x78] sm:$0xff]
      %v1994 = vld [vmem:[%s1977 + $0x80] sm:$0xff]
      %v1995 = vld [vmem:[%s1977 + $0x88] sm:$0xff]
      %v1996 = vld [vmem:[%s1977 + $0x90] sm:$0xff]
      %v1997 = vld [vmem:[%s1977 + $0x98] sm:$0xff]
      %v1998 = vld [vmem:[%s1977 + $0xa0] sm:$0xff]
      %v1999 = vld [vmem:[%s1977 + $0xa8] sm:$0xff]
      %v2000 = vld [vmem:[%s1977 + $0xb0] sm:$0xff]
      %v2001 = vld [vmem:[%s1977 + $0xb8] sm:$0xff]
      %v2002 = vld [vmem:[%s1977 + $0xc0] sm:$0xff]
      %v2003 = vld [vmem:[%s1977 + $0xc8] sm:$0xff]
      %v2004 = vld [vmem:[%s1977 + $0xd0] sm:$0xff]
      %v2005 = vld [vmem:[%s1977 + $0xd8] sm:$0xff]
      %v2006 = vld [vmem:[%s1977 + $0xe0] sm:$0xff]
      %v2007 = vld [vmem:[%s1977 + $0xe8] sm:$0xff]
      %v2008 = vld [vmem:[%s1977 + $0xf0] sm:$0xff]
      %v2009 = vld [vmem:[%s1977 + $0xf8] sm:$0xff]
      %s2010 = scalar_lea.vmem %s2, 384
      %v2011 = vld [vmem:[%s2010] sm:$0xf]
      %v2012 = vld [vmem:[%s2010 + $0x4] sm:$0xf]
      %v2013 = vld [vmem:[%s2010 + $0x8] sm:$0xf]
      %v2014 = vld [vmem:[%s2010 + $0xc] sm:$0xf]
      %v2015 = vld [vmem:[%s2010 + $0x10] sm:$0xf]
      %v2016 = vld [vmem:[%s2010 + $0x14] sm:$0xf]
      %v2017 = vld [vmem:[%s2010 + $0x18] sm:$0xf]
      %v2018 = vld [vmem:[%s2010 + $0x1c] sm:$0xf]
      %v2019 = vld [vmem:[%s2010 + $0x20] sm:$0xf]
      %v2020 = vld [vmem:[%s2010 + $0x24] sm:$0xf]
      %v2021 = vld [vmem:[%s2010 + $0x28] sm:$0xf]
      %v2022 = vld [vmem:[%s2010 + $0x2c] sm:$0xf]
      %v2023 = vld [vmem:[%s2010 + $0x30] sm:$0xf]
      %v2024 = vld [vmem:[%s2010 + $0x34] sm:$0xf]
      %v2025 = vld [vmem:[%s2010 + $0x38] sm:$0xf]
      %v2026 = vld [vmem:[%s2010 + $0x3c] sm:$0xf]
      %v2027 = vld [vmem:[%s2010 + $0x40] sm:$0xf]
      %v2028 = vld [vmem:[%s2010 + $0x44] sm:$0xf]
      %v2029 = vld [vmem:[%s2010 + $0x48] sm:$0xf]
      %v2030 = vld [vmem:[%s2010 + $0x4c] sm:$0xf]
      %v2031 = vld [vmem:[%s2010 + $0x50] sm:$0xf]
      %v2032 = vld [vmem:[%s2010 + $0x54] sm:$0xf]
      %v2033 = vld [vmem:[%s2010 + $0x58] sm:$0xf]
      %v2034 = vld [vmem:[%s2010 + $0x5c] sm:$0xf]
      %v2035 = vld [vmem:[%s2010 + $0x60] sm:$0xf]
      %v2036 = vld [vmem:[%s2010 + $0x64] sm:$0xf]
      %v2037 = vld [vmem:[%s2010 + $0x68] sm:$0xf]
      %v2038 = vld [vmem:[%s2010 + $0x6c] sm:$0xf]
      %v2039 = vld [vmem:[%s2010 + $0x70] sm:$0xf]
      %v2040 = vld [vmem:[%s2010 + $0x74] sm:$0xf]
      %v2041 = vld [vmem:[%s2010 + $0x78] sm:$0xf]
      %v2042 = vld [vmem:[%s2010 + $0x7c] sm:$0xf]
      %v2075 = vunpack.c.l.b16 %v1978
      %v2076 = vunpack.c.h.b16 %v1978
      %v2077 = vunpack.c.l.b16 %v1979
      %v2078 = vunpack.c.h.b16 %v1979
      %v2079 = vunpack.c.l.b16 %v1980
      %v2080 = vunpack.c.h.b16 %v1980
      %v2081 = vunpack.c.l.b16 %v1981
      %v2082 = vunpack.c.h.b16 %v1981
      %v2083 = vunpack.c.l.b16 %v1982
      %v2084 = vunpack.c.h.b16 %v1982
      %v2085 = vunpack.c.l.b16 %v1983
      %v2086 = vunpack.c.h.b16 %v1983
      %v2087 = vunpack.c.l.b16 %v1984
      %v2088 = vunpack.c.h.b16 %v1984
      %v2089 = vunpack.c.l.b16 %v1985
      %v2090 = vunpack.c.h.b16 %v1985
      %v2091 = vunpack.c.l.b16 %v1986
      %v2092 = vunpack.c.h.b16 %v1986
      %v2093 = vunpack.c.l.b16 %v1987
      %v2094 = vunpack.c.h.b16 %v1987
      %v2095 = vunpack.c.l.b16 %v1988
      %v2096 = vunpack.c.h.b16 %v1988
      %v2097 = vunpack.c.l.b16 %v1989
      %v2098 = vunpack.c.h.b16 %v1989
      %v2099 = vunpack.c.l.b16 %v1990
      %v2100 = vunpack.c.h.b16 %v1990
      %v2101 = vunpack.c.l.b16 %v1991
      %v2102 = vunpack.c.h.b16 %v1991
      %v2103 = vunpack.c.l.b16 %v1992
      %v2104 = vunpack.c.h.b16 %v1992
      %v2105 = vunpack.c.l.b16 %v1993
      %v2106 = vunpack.c.h.b16 %v1993
      %v2107 = vunpack.c.l.b16 %v1994
      %v2108 = vunpack.c.h.b16 %v1994
      %v2109 = vunpack.c.l.b16 %v1995
      %v2110 = vunpack.c.h.b16 %v1995
      %v2111 = vunpack.c.l.b16 %v1996
      %v2112 = vunpack.c.h.b16 %v1996
      %v2113 = vunpack.c.l.b16 %v1997
      %v2114 = vunpack.c.h.b16 %v1997
      %v2115 = vunpack.c.l.b16 %v1998
      %v2116 = vunpack.c.h.b16 %v1998
      %v2117 = vunpack.c.l.b16 %v1999
      %v2118 = vunpack.c.h.b16 %v1999
      %v2119 = vunpack.c.l.b16 %v2000
      %v2120 = vunpack.c.h.b16 %v2000
      %v2121 = vunpack.c.l.b16 %v2001
      %v2122 = vunpack.c.h.b16 %v2001
      %v2123 = vunpack.c.l.b16 %v2002
      %v2124 = vunpack.c.h.b16 %v2002
      %v2125 = vunpack.c.l.b16 %v2003
      %v2126 = vunpack.c.h.b16 %v2003
      %v2127 = vunpack.c.l.b16 %v2004
      %v2128 = vunpack.c.h.b16 %v2004
      %v2129 = vunpack.c.l.b16 %v2005
      %v2130 = vunpack.c.h.b16 %v2005
      %v2131 = vunpack.c.l.b16 %v2006
      %v2132 = vunpack.c.h.b16 %v2006
      %v2133 = vunpack.c.l.b16 %v2007
      %v2134 = vunpack.c.h.b16 %v2007
      %v2135 = vunpack.c.l.b16 %v2008
      %v2136 = vunpack.c.h.b16 %v2008
      %v2137 = vunpack.c.l.b16 %v2009
      %v2138 = vunpack.c.h.b16 %v2009
      %v2139 = vpack.c.b16 %v2077, %v2075
      %v2140 = vpack.c.b16 %v2078, %v2076
      %v2141 = vpack.c.b16 %v2081, %v2079
      %v2142 = vpack.c.b16 %v2082, %v2080
      %v2143 = vpack.c.b16 %v2085, %v2083
      %v2144 = vpack.c.b16 %v2086, %v2084
      %v2145 = vpack.c.b16 %v2089, %v2087
      %v2146 = vpack.c.b16 %v2090, %v2088
      %v2147 = vpack.c.b16 %v2093, %v2091
      %v2148 = vpack.c.b16 %v2094, %v2092
      %v2149 = vpack.c.b16 %v2097, %v2095
      %v2150 = vpack.c.b16 %v2098, %v2096
      %v2151 = vpack.c.b16 %v2101, %v2099
      %v2152 = vpack.c.b16 %v2102, %v2100
      %v2153 = vpack.c.b16 %v2105, %v2103
      %v2154 = vpack.c.b16 %v2106, %v2104
      %v2155 = vpack.c.b16 %v2109, %v2107
      %v2156 = vpack.c.b16 %v2110, %v2108
      %v2157 = vpack.c.b16 %v2113, %v2111
      %v2158 = vpack.c.b16 %v2114, %v2112
      %v2159 = vpack.c.b16 %v2117, %v2115
      %v2160 = vpack.c.b16 %v2118, %v2116
      %v2161 = vpack.c.b16 %v2121, %v2119
      %v2162 = vpack.c.b16 %v2122, %v2120
      %v2163 = vpack.c.b16 %v2125, %v2123
      %v2164 = vpack.c.b16 %v2126, %v2124
      %v2165 = vpack.c.b16 %v2129, %v2127
      %v2166 = vpack.c.b16 %v2130, %v2128
      %v2167 = vpack.c.b16 %v2133, %v2131
      %v2168 = vpack.c.b16 %v2134, %v2132
      %v2169 = vpack.c.b16 %v2137, %v2135
      %v2170 = vpack.c.b16 %v2138, %v2136
      %v2235 = vunpack.c.l.b16 %v2011
      %v2236 = vunpack.c.l.b16 %v2012
      %v2237 = vunpack.c.l.b16 %v2013
      %v2238 = vunpack.c.l.b16 %v2014
      %v2239 = vunpack.c.l.b16 %v2015
      %v2240 = vunpack.c.l.b16 %v2016
      %v2241 = vunpack.c.l.b16 %v2017
      %v2242 = vunpack.c.l.b16 %v2018
      %v2243 = vunpack.c.l.b16 %v2019
      %v2244 = vunpack.c.l.b16 %v2020
      %v2245 = vunpack.c.l.b16 %v2021
      %v2246 = vunpack.c.l.b16 %v2022
      %v2247 = vunpack.c.l.b16 %v2023
      %v2248 = vunpack.c.l.b16 %v2024
      %v2249 = vunpack.c.l.b16 %v2025
      %v2250 = vunpack.c.l.b16 %v2026
      %v2251 = vunpack.c.l.b16 %v2027
      %v2252 = vunpack.c.l.b16 %v2028
      %v2253 = vunpack.c.l.b16 %v2029
      %v2254 = vunpack.c.l.b16 %v2030
      %v2255 = vunpack.c.l.b16 %v2031
      %v2256 = vunpack.c.l.b16 %v2032
      %v2257 = vunpack.c.l.b16 %v2033
      %v2258 = vunpack.c.l.b16 %v2034
      %v2259 = vunpack.c.l.b16 %v2035
      %v2260 = vunpack.c.l.b16 %v2036
      %v2261 = vunpack.c.l.b16 %v2037
      %v2262 = vunpack.c.l.b16 %v2038
      %v2263 = vunpack.c.l.b16 %v2039
      %v2264 = vunpack.c.l.b16 %v2040
      %v2265 = vunpack.c.l.b16 %v2041
      %v2266 = vunpack.c.l.b16 %v2042
      %v2267 = vpack.c.b16 %v2236, %v2235
      %v2268 = vpack.c.b16 %v2238, %v2237
      %v2269 = vpack.c.b16 %v2240, %v2239
      %v2270 = vpack.c.b16 %v2242, %v2241
      %v2271 = vpack.c.b16 %v2244, %v2243
      %v2272 = vpack.c.b16 %v2246, %v2245
      %v2273 = vpack.c.b16 %v2248, %v2247
      %v2274 = vpack.c.b16 %v2250, %v2249
      %v2275 = vpack.c.b16 %v2252, %v2251
      %v2276 = vpack.c.b16 %v2254, %v2253
      %v2277 = vpack.c.b16 %v2256, %v2255
      %v2278 = vpack.c.b16 %v2258, %v2257
      %v2279 = vpack.c.b16 %v2260, %v2259
      %v2280 = vpack.c.b16 %v2262, %v2261
      %v2281 = vpack.c.b16 %v2264, %v2263
      %v2282 = vpack.c.b16 %v2266, %v2265
      %2299 = vmatpush.bf16.msra.mxu0 %v2274
      %2300 = vmatpush.bf16.msra.mxu0 %v2273
      %2301 = vmatpush.bf16.msra.mxu0 %v2272
      %2302 = vmatpush.bf16.msra.mxu0 %v2271
      %2303 = vmatpush.bf16.msra.mxu0 %v2270
      %2304 = vmatpush.bf16.msra.mxu0 %v2269
      %2305 = vmatpush.bf16.msra.mxu0 %v2268
      %2306 = vmatpush.bf16.msra.mxu0 %v2267
      %2307 = vmatmul.bf16.gmra.mxu0 %v2139
      %v2308 = vpop.f32.mrf.mxu0
      %v2309 = vadd.f32 0.0, %v2308
      %v2310 = vpop.f32.mrf.mxu0
      %v2311 = vadd.f32 0.0, %v2310
      %2312 = vmatmul.bf16.gmra.mxu0 %v2141
      %v2313 = vpop.f32.mrf.mxu0
      %v2314 = vadd.f32 0.0, %v2313
      %v2315 = vpop.f32.mrf.mxu0
      %v2316 = vadd.f32 0.0, %v2315
      %2317 = vmatmul.bf16.gmra.mxu0 %v2143
      %v2318 = vpop.f32.mrf.mxu0
      %v2319 = vadd.f32 0.0, %v2318
      %v2320 = vpop.f32.mrf.mxu0
      %v2321 = vadd.f32 0.0, %v2320
      %2322 = vmatmul.bf16.gmra.mxu0 %v2145
      %v2323 = vpop.f32.mrf.mxu0
      %v2324 = vadd.f32 0.0, %v2323
      %v2325 = vpop.f32.mrf.mxu0
      %v2326 = vadd.f32 0.0, %v2325
      %2327 = vmatmul.bf16.gmra.mxu0 %v2147
      %v2328 = vpop.f32.mrf.mxu0
      %v2329 = vadd.f32 0.0, %v2328
      %v2330 = vpop.f32.mrf.mxu0
      %v2331 = vadd.f32 0.0, %v2330
      %2332 = vmatmul.bf16.gmra.mxu0 %v2149
      %v2333 = vpop.f32.mrf.mxu0
      %v2334 = vadd.f32 0.0, %v2333
      %v2335 = vpop.f32.mrf.mxu0
      %v2336 = vadd.f32 0.0, %v2335
      %2337 = vmatmul.bf16.gmra.mxu0 %v2151
      %v2338 = vpop.f32.mrf.mxu0
      %v2339 = vadd.f32 0.0, %v2338
      %v2340 = vpop.f32.mrf.mxu0
      %v2341 = vadd.f32 0.0, %v2340
      %2342 = vmatmul.bf16.gmra.mxu0 %v2153
      %v2343 = vpop.f32.mrf.mxu0
      %v2344 = vadd.f32 0.0, %v2343
      %v2345 = vpop.f32.mrf.mxu0
      %v2346 = vadd.f32 0.0, %v2345
      %2347 = vmatmul.bf16.gmra.mxu0 %v2155
      %v2348 = vpop.f32.mrf.mxu0
      %v2349 = vadd.f32 0.0, %v2348
      %v2350 = vpop.f32.mrf.mxu0
      %v2351 = vadd.f32 0.0, %v2350
      %2352 = vmatmul.bf16.gmra.mxu0 %v2157
      %v2353 = vpop.f32.mrf.mxu0
      %v2354 = vadd.f32 0.0, %v2353
      %v2355 = vpop.f32.mrf.mxu0
      %v2356 = vadd.f32 0.0, %v2355
      %2357 = vmatmul.bf16.gmra.mxu0 %v2159
      %v2358 = vpop.f32.mrf.mxu0
      %v2359 = vadd.f32 0.0, %v2358
      %v2360 = vpop.f32.mrf.mxu0
      %v2361 = vadd.f32 0.0, %v2360
      %2362 = vmatmul.bf16.gmra.mxu0 %v2161
      %v2363 = vpop.f32.mrf.mxu0
      %v2364 = vadd.f32 0.0, %v2363
      %v2365 = vpop.f32.mrf.mxu0
      %v2366 = vadd.f32 0.0, %v2365
      %2367 = vmatmul.bf16.gmra.mxu0 %v2163
      %v2368 = vpop.f32.mrf.mxu0
      %v2369 = vadd.f32 0.0, %v2368
      %v2370 = vpop.f32.mrf.mxu0
      %v2371 = vadd.f32 0.0, %v2370
      %2372 = vmatmul.bf16.gmra.mxu0 %v2165
      %v2373 = vpop.f32.mrf.mxu0
      %v2374 = vadd.f32 0.0, %v2373
      %v2375 = vpop.f32.mrf.mxu0
      %v2376 = vadd.f32 0.0, %v2375
      %2377 = vmatmul.bf16.gmra.mxu0 %v2167
      %v2378 = vpop.f32.mrf.mxu0
      %v2379 = vadd.f32 0.0, %v2378
      %v2380 = vpop.f32.mrf.mxu0
      %v2381 = vadd.f32 0.0, %v2380
      %2382 = vmatmul.bf16.gmra.mxu0 %v2169
      %v2383 = vpop.f32.mrf.mxu0
      %v2384 = vadd.f32 0.0, %v2383
      %v2385 = vpop.f32.mrf.mxu0
      %v2386 = vadd.f32 0.0, %v2385
      %2387 = vdwg.mxu0
      %2388 = vmatpush.bf16.msra.mxu0 %v2282
      %2389 = vmatpush.bf16.msra.mxu0 %v2281
      %2390 = vmatpush.bf16.msra.mxu0 %v2280
      %2391 = vmatpush.bf16.msra.mxu0 %v2279
      %2392 = vmatpush.bf16.msra.mxu0 %v2278
      %2393 = vmatpush.bf16.msra.mxu0 %v2277
      %2394 = vmatpush.bf16.msra.mxu0 %v2276
      %2395 = vmatpush.bf16.msra.mxu0 %v2275
      %2396 = vmatmul.bf16.gmra.mxu0 %v2140
      %v2397 = vpop.f32.mrf.mxu0
      %v2398 = vadd.f32 %v2309, %v2397
      %v2399 = vpop.f32.mrf.mxu0
      %v2400 = vadd.f32 %v2311, %v2399
      %2401 = vmatmul.bf16.gmra.mxu0 %v2142
      %v2402 = vpop.f32.mrf.mxu0
      %v2403 = vadd.f32 %v2314, %v2402
      %v2404 = vpop.f32.mrf.mxu0
      %v2405 = vadd.f32 %v2316, %v2404
      %2406 = vmatmul.bf16.gmra.mxu0 %v2144
      %v2407 = vpop.f32.mrf.mxu0
      %v2408 = vadd.f32 %v2319, %v2407
      %v2409 = vpop.f32.mrf.mxu0
      %v2410 = vadd.f32 %v2321, %v2409
      %2411 = vmatmul.bf16.gmra.mxu0 %v2146
      %v2412 = vpop.f32.mrf.mxu0
      %v2413 = vadd.f32 %v2324, %v2412
      %v2414 = vpop.f32.mrf.mxu0
      %v2415 = vadd.f32 %v2326, %v2414
      %2416 = vmatmul.bf16.gmra.mxu0 %v2148
      %v2417 = vpop.f32.mrf.mxu0
      %v2418 = vadd.f32 %v2329, %v2417
      %v2419 = vpop.f32.mrf.mxu0
      %v2420 = vadd.f32 %v2331, %v2419
      %2421 = vmatmul.bf16.gmra.mxu0 %v2150
      %v2422 = vpop.f32.mrf.mxu0
      %v2423 = vadd.f32 %v2334, %v2422
      %v2424 = vpop.f32.mrf.mxu0
      %v2425 = vadd.f32 %v2336, %v2424
      %2426 = vmatmul.bf16.gmra.mxu0 %v2152
      %v2427 = vpop.f32.mrf.mxu0
      %v2428 = vadd.f32 %v2339, %v2427
      %v2429 = vpop.f32.mrf.mxu0
      %v2430 = vadd.f32 %v2341, %v2429
      %2431 = vmatmul.bf16.gmra.mxu0 %v2154
      %v2432 = vpop.f32.mrf.mxu0
      %v2433 = vadd.f32 %v2344, %v2432
      %v2434 = vpop.f32.mrf.mxu0
      %v2435 = vadd.f32 %v2346, %v2434
      %2436 = vmatmul.bf16.gmra.mxu0 %v2156
      %v2437 = vpop.f32.mrf.mxu0
      %v2438 = vadd.f32 %v2349, %v2437
      %v2439 = vpop.f32.mrf.mxu0
      %v2440 = vadd.f32 %v2351, %v2439
      %2441 = vmatmul.bf16.gmra.mxu0 %v2158
      %v2442 = vpop.f32.mrf.mxu0
      %v2443 = vadd.f32 %v2354, %v2442
      %v2444 = vpop.f32.mrf.mxu0
      %v2445 = vadd.f32 %v2356, %v2444
      %2446 = vmatmul.bf16.gmra.mxu0 %v2160
      %v2447 = vpop.f32.mrf.mxu0
      %v2448 = vadd.f32 %v2359, %v2447
      %v2449 = vpop.f32.mrf.mxu0
      %v2450 = vadd.f32 %v2361, %v2449
      %2451 = vmatmul.bf16.gmra.mxu0 %v2162
      %v2452 = vpop.f32.mrf.mxu0
      %v2453 = vadd.f32 %v2364, %v2452
      %v2454 = vpop.f32.mrf.mxu0
      %v2455 = vadd.f32 %v2366, %v2454
      %2456 = vmatmul.bf16.gmra.mxu0 %v2164
      %v2457 = vpop.f32.mrf.mxu0
      %v2458 = vadd.f32 %v2369, %v2457
      %v2459 = vpop.f32.mrf.mxu0
      %v2460 = vadd.f32 %v2371, %v2459
      %2461 = vmatmul.bf16.gmra.mxu0 %v2166
      %v2462 = vpop.f32.mrf.mxu0
      %v2463 = vadd.f32 %v2374, %v2462
      %v2464 = vpop.f32.mrf.mxu0
      %v2465 = vadd.f32 %v2376, %v2464
      %2466 = vmatmul.bf16.gmra.mxu0 %v2168
      %v2467 = vpop.f32.mrf.mxu0
      %v2468 = vadd.f32 %v2379, %v2467
      %v2469 = vpop.f32.mrf.mxu0
      %v2470 = vadd.f32 %v2381, %v2469
      %2471 = vmatmul.bf16.gmra.mxu0 %v2170
      %v2472 = vpop.f32.mrf.mxu0
      %v2473 = vadd.f32 %v2384, %v2472
      %v2474 = vpop.f32.mrf.mxu0
      %v2475 = vadd.f32 %v2386, %v2474
      %2476 = vdwg.mxu0
      %v2477 = vld [vmem:[#allocation2] sm:$0xff]
      %v2478 = vld [vmem:[#allocation2 + $0x8] sm:$0xff]
      %v2479 = vld [vmem:[#allocation2 + $0x10] sm:$0xff]
      %v2480 = vld [vmem:[#allocation2 + $0x18] sm:$0xff]
      %v2481 = vld [vmem:[#allocation2 + $0x20] sm:$0xff]
      %v2482 = vld [vmem:[#allocation2 + $0x28] sm:$0xff]
      %v2483 = vld [vmem:[#allocation2 + $0x30] sm:$0xff]
      %v2484 = vld [vmem:[#allocation2 + $0x38] sm:$0xff]
      %v2485 = vld [vmem:[#allocation2 + $0x40] sm:$0xff]
      %v2486 = vld [vmem:[#allocation2 + $0x48] sm:$0xff]
      %v2487 = vld [vmem:[#allocation2 + $0x50] sm:$0xff]
      %v2488 = vld [vmem:[#allocation2 + $0x58] sm:$0xff]
      %v2489 = vld [vmem:[#allocation2 + $0x60] sm:$0xff]
      %v2490 = vld [vmem:[#allocation2 + $0x68] sm:$0xff]
      %v2491 = vld [vmem:[#allocation2 + $0x70] sm:$0xff]
      %v2492 = vld [vmem:[#allocation2 + $0x78] sm:$0xff]
      %v2493 = vld [vmem:[#allocation2 + $0x80] sm:$0xff]
      %v2494 = vld [vmem:[#allocation2 + $0x88] sm:$0xff]
      %v2495 = vld [vmem:[#allocation2 + $0x90] sm:$0xff]
      %v2496 = vld [vmem:[#allocation2 + $0x98] sm:$0xff]
      %v2497 = vld [vmem:[#allocation2 + $0xa0] sm:$0xff]
      %v2498 = vld [vmem:[#allocation2 + $0xa8] sm:$0xff]
      %v2499 = vld [vmem:[#allocation2 + $0xb0] sm:$0xff]
      %v2500 = vld [vmem:[#allocation2 + $0xb8] sm:$0xff]
      %v2501 = vld [vmem:[#allocation2 + $0xc0] sm:$0xff]
      %v2502 = vld [vmem:[#allocation2 + $0xc8] sm:$0xff]
      %v2503 = vld [vmem:[#allocation2 + $0xd0] sm:$0xff]
      %v2504 = vld [vmem:[#allocation2 + $0xd8] sm:$0xff]
      %v2505 = vld [vmem:[#allocation2 + $0xe0] sm:$0xff]
      %v2506 = vld [vmem:[#allocation2 + $0xe8] sm:$0xff]
      %v2507 = vld [vmem:[#allocation2 + $0xf0] sm:$0xff]
      %v2508 = vld [vmem:[#allocation2 + $0xf8] sm:$0xff]
      %v2509 = vadd.f32 %v2477, %v2398
      %v2510 = vadd.f32 %v2478, %v2400
      %v2511 = vadd.f32 %v2479, %v2403
      %v2512 = vadd.f32 %v2480, %v2405
      %v2513 = vadd.f32 %v2481, %v2408
      %v2514 = vadd.f32 %v2482, %v2410
      %v2515 = vadd.f32 %v2483, %v2413
      %v2516 = vadd.f32 %v2484, %v2415
      %v2517 = vadd.f32 %v2485, %v2418
      %v2518 = vadd.f32 %v2486, %v2420
      %v2519 = vadd.f32 %v2487, %v2423
      %v2520 = vadd.f32 %v2488, %v2425
      %v2521 = vadd.f32 %v2489, %v2428
      %v2522 = vadd.f32 %v2490, %v2430
      %v2523 = vadd.f32 %v2491, %v2433
      %v2524 = vadd.f32 %v2492, %v2435
      %v2525 = vadd.f32 %v2493, %v2438
      %v2526 = vadd.f32 %v2494, %v2440
      %v2527 = vadd.f32 %v2495, %v2443
      %v2528 = vadd.f32 %v2496, %v2445
      %v2529 = vadd.f32 %v2497, %v2448
      %v2530 = vadd.f32 %v2498, %v2450
      %v2531 = vadd.f32 %v2499, %v2453
      %v2532 = vadd.f32 %v2500, %v2455
      %v2533 = vadd.f32 %v2501, %v2458
      %v2534 = vadd.f32 %v2502, %v2460
      %v2535 = vadd.f32 %v2503, %v2463
      %v2536 = vadd.f32 %v2504, %v2465
      %v2537 = vadd.f32 %v2505, %v2468
      %v2538 = vadd.f32 %v2506, %v2470
      %v2539 = vadd.f32 %v2507, %v2473
      %v2540 = vadd.f32 %v2508, %v2475
      %2541 = vst [vmem:[#allocation2] sm:$0xff] %v2509
      %2542 = vst [vmem:[#allocation2 + $0x8] sm:$0xff] %v2510
      %2543 = vst [vmem:[#allocation2 + $0x10] sm:$0xff] %v2511
      %2544 = vst [vmem:[#allocation2 + $0x18] sm:$0xff] %v2512
      %2545 = vst [vmem:[#allocation2 + $0x20] sm:$0xff] %v2513
      %2546 = vst [vmem:[#allocation2 + $0x28] sm:$0xff] %v2514
      %2547 = vst [vmem:[#allocation2 + $0x30] sm:$0xff] %v2515
      %2548 = vst [vmem:[#allocation2 + $0x38] sm:$0xff] %v2516
      %2549 = vst [vmem:[#allocation2 + $0x40] sm:$0xff] %v2517
      %2550 = vst [vmem:[#allocation2 + $0x48] sm:$0xff] %v2518
      %2551 = vst [vmem:[#allocation2 + $0x50] sm:$0xff] %v2519
      %2552 = vst [vmem:[#allocation2 + $0x58] sm:$0xff] %v2520
      %2553 = vst [vmem:[#allocation2 + $0x60] sm:$0xff] %v2521
      %2554 = vst [vmem:[#allocation2 + $0x68] sm:$0xff] %v2522
      %2555 = vst [vmem:[#allocation2 + $0x70] sm:$0xff] %v2523
      %2556 = vst [vmem:[#allocation2 + $0x78] sm:$0xff] %v2524
      %2557 = vst [vmem:[#allocation2 + $0x80] sm:$0xff] %v2525
      %2558 = vst [vmem:[#allocation2 + $0x88] sm:$0xff] %v2526
      %2559 = vst [vmem:[#allocation2 + $0x90] sm:$0xff] %v2527
      %2560 = vst [vmem:[#allocation2 + $0x98] sm:$0xff] %v2528
      %2561 = vst [vmem:[#allocation2 + $0xa0] sm:$0xff] %v2529
      %2562 = vst [vmem:[#allocation2 + $0xa8] sm:$0xff] %v2530
      %2563 = vst [vmem:[#allocation2 + $0xb0] sm:$0xff] %v2531
      %2564 = vst [vmem:[#allocation2 + $0xb8] sm:$0xff] %v2532
      %2565 = vst [vmem:[#allocation2 + $0xc0] sm:$0xff] %v2533
      %2566 = vst [vmem:[#allocation2 + $0xc8] sm:$0xff] %v2534
      %2567 = vst [vmem:[#allocation2 + $0xd0] sm:$0xff] %v2535
      %2568 = vst [vmem:[#allocation2 + $0xd8] sm:$0xff] %v2536
      %2569 = vst [vmem:[#allocation2 + $0xe0] sm:$0xff] %v2537
      %2570 = vst [vmem:[#allocation2 + $0xe8] sm:$0xff] %v2538
      %2571 = vst [vmem:[#allocation2 + $0xf0] sm:$0xff] %v2539
      %2572 = vst [vmem:[#allocation2 + $0xf8] sm:$0xff] %v2540
      %s2573 = sadd.s32 %s230, 4
      %s2574 = smul.u32 %s2573, 16
      %s2575 = sshra.s32 %s2574, 3
      %s2576 = sand.u32 %s2574, 7
      %s2577 = smul.u32 %s2575, 2
      %s2578 = smul.addr %s2577, 4
      %s2579 = scalar_lea.vmem %s209, %s2578
      %v2580 = vld [vmem:[%s2579] sm:$0xff]
      %v2581 = vld [vmem:[%s2579 + $0x8] sm:$0xff]
      %v2582 = vld [vmem:[%s2579 + $0x10] sm:$0xff]
      %v2583 = vld [vmem:[%s2579 + $0x18] sm:$0xff]
      %v2584 = vld [vmem:[%s2579 + $0x20] sm:$0xff]
      %v2585 = vld [vmem:[%s2579 + $0x28] sm:$0xff]
      %v2586 = vld [vmem:[%s2579 + $0x30] sm:$0xff]
      %v2587 = vld [vmem:[%s2579 + $0x38] sm:$0xff]
      %v2588 = vld [vmem:[%s2579 + $0x40] sm:$0xff]
      %v2589 = vld [vmem:[%s2579 + $0x48] sm:$0xff]
      %v2590 = vld [vmem:[%s2579 + $0x50] sm:$0xff]
      %v2591 = vld [vmem:[%s2579 + $0x58] sm:$0xff]
      %v2592 = vld [vmem:[%s2579 + $0x60] sm:$0xff]
      %v2593 = vld [vmem:[%s2579 + $0x68] sm:$0xff]
      %v2594 = vld [vmem:[%s2579 + $0x70] sm:$0xff]
      %v2595 = vld [vmem:[%s2579 + $0x78] sm:$0xff]
      %v2596 = vld [vmem:[%s2579 + $0x80] sm:$0xff]
      %v2597 = vld [vmem:[%s2579 + $0x88] sm:$0xff]
      %v2598 = vld [vmem:[%s2579 + $0x90] sm:$0xff]
      %v2599 = vld [vmem:[%s2579 + $0x98] sm:$0xff]
      %v2600 = vld [vmem:[%s2579 + $0xa0] sm:$0xff]
      %v2601 = vld [vmem:[%s2579 + $0xa8] sm:$0xff]
      %v2602 = vld [vmem:[%s2579 + $0xb0] sm:$0xff]
      %v2603 = vld [vmem:[%s2579 + $0xb8] sm:$0xff]
      %v2604 = vld [vmem:[%s2579 + $0xc0] sm:$0xff]
      %v2605 = vld [vmem:[%s2579 + $0xc8] sm:$0xff]
      %v2606 = vld [vmem:[%s2579 + $0xd0] sm:$0xff]
      %v2607 = vld [vmem:[%s2579 + $0xd8] sm:$0xff]
      %v2608 = vld [vmem:[%s2579 + $0xe0] sm:$0xff]
      %v2609 = vld [vmem:[%s2579 + $0xe8] sm:$0xff]
      %v2610 = vld [vmem:[%s2579 + $0xf0] sm:$0xff]
      %v2611 = vld [vmem:[%s2579 + $0xf8] sm:$0xff]
      %s2612 = scalar_lea.vmem %s2, 512
      %v2613 = vld [vmem:[%s2612] sm:$0xf]
      %v2614 = vld [vmem:[%s2612 + $0x4] sm:$0xf]
      %v2615 = vld [vmem:[%s2612 + $0x8] sm:$0xf]
      %v2616 = vld [vmem:[%s2612 + $0xc] sm:$0xf]
      %v2617 = vld [vmem:[%s2612 + $0x10] sm:$0xf]
      %v2618 = vld [vmem:[%s2612 + $0x14] sm:$0xf]
      %v2619 = vld [vmem:[%s2612 + $0x18] sm:$0xf]
      %v2620 = vld [vmem:[%s2612 + $0x1c] sm:$0xf]
      %v2621 = vld [vmem:[%s2612 + $0x20] sm:$0xf]
      %v2622 = vld [vmem:[%s2612 + $0x24] sm:$0xf]
      %v2623 = vld [vmem:[%s2612 + $0x28] sm:$0xf]
      %v2624 = vld [vmem:[%s2612 + $0x2c] sm:$0xf]
      %v2625 = vld [vmem:[%s2612 + $0x30] sm:$0xf]
      %v2626 = vld [vmem:[%s2612 + $0x34] sm:$0xf]
      %v2627 = vld [vmem:[%s2612 + $0x38] sm:$0xf]
      %v2628 = vld [vmem:[%s2612 + $0x3c] sm:$0xf]
      %v2629 = vld [vmem:[%s2612 + $0x40] sm:$0xf]
      %v2630 = vld [vmem:[%s2612 + $0x44] sm:$0xf]
      %v2631 = vld [vmem:[%s2612 + $0x48] sm:$0xf]
      %v2632 = vld [vmem:[%s2612 + $0x4c] sm:$0xf]
      %v2633 = vld [vmem:[%s2612 + $0x50] sm:$0xf]
      %v2634 = vld [vmem:[%s2612 + $0x54] sm:$0xf]
      %v2635 = vld [vmem:[%s2612 + $0x58] sm:$0xf]
      %v2636 = vld [vmem:[%s2612 + $0x5c] sm:$0xf]
      %v2637 = vld [vmem:[%s2612 + $0x60] sm:$0xf]
      %v2638 = vld [vmem:[%s2612 + $0x64] sm:$0xf]
      %v2639 = vld [vmem:[%s2612 + $0x68] sm:$0xf]
      %v2640 = vld [vmem:[%s2612 + $0x6c] sm:$0xf]
      %v2641 = vld [vmem:[%s2612 + $0x70] sm:$0xf]
      %v2642 = vld [vmem:[%s2612 + $0x74] sm:$0xf]
      %v2643 = vld [vmem:[%s2612 + $0x78] sm:$0xf]
      %v2644 = vld [vmem:[%s2612 + $0x7c] sm:$0xf]
      %v2677 = vunpack.c.l.b16 %v2580
      %v2678 = vunpack.c.h.b16 %v2580
      %v2679 = vunpack.c.l.b16 %v2581
      %v2680 = vunpack.c.h.b16 %v2581
      %v2681 = vunpack.c.l.b16 %v2582
      %v2682 = vunpack.c.h.b16 %v2582
      %v2683 = vunpack.c.l.b16 %v2583
      %v2684 = vunpack.c.h.b16 %v2583
      %v2685 = vunpack.c.l.b16 %v2584
      %v2686 = vunpack.c.h.b16 %v2584
      %v2687 = vunpack.c.l.b16 %v2585
      %v2688 = vunpack.c.h.b16 %v2585
      %v2689 = vunpack.c.l.b16 %v2586
      %v2690 = vunpack.c.h.b16 %v2586
      %v2691 = vunpack.c.l.b16 %v2587
      %v2692 = vunpack.c.h.b16 %v2587
      %v2693 = vunpack.c.l.b16 %v2588
      %v2694 = vunpack.c.h.b16 %v2588
      %v2695 = vunpack.c.l.b16 %v2589
      %v2696 = vunpack.c.h.b16 %v2589
      %v2697 = vunpack.c.l.b16 %v2590
      %v2698 = vunpack.c.h.b16 %v2590
      %v2699 = vunpack.c.l.b16 %v2591
      %v2700 = vunpack.c.h.b16 %v2591
      %v2701 = vunpack.c.l.b16 %v2592
      %v2702 = vunpack.c.h.b16 %v2592
      %v2703 = vunpack.c.l.b16 %v2593
      %v2704 = vunpack.c.h.b16 %v2593
      %v2705 = vunpack.c.l.b16 %v2594
      %v2706 = vunpack.c.h.b16 %v2594
      %v2707 = vunpack.c.l.b16 %v2595
      %v2708 = vunpack.c.h.b16 %v2595
      %v2709 = vunpack.c.l.b16 %v2596
      %v2710 = vunpack.c.h.b16 %v2596
      %v2711 = vunpack.c.l.b16 %v2597
      %v2712 = vunpack.c.h.b16 %v2597
      %v2713 = vunpack.c.l.b16 %v2598
      %v2714 = vunpack.c.h.b16 %v2598
      %v2715 = vunpack.c.l.b16 %v2599
      %v2716 = vunpack.c.h.b16 %v2599
      %v2717 = vunpack.c.l.b16 %v2600
      %v2718 = vunpack.c.h.b16 %v2600
      %v2719 = vunpack.c.l.b16 %v2601
      %v2720 = vunpack.c.h.b16 %v2601
      %v2721 = vunpack.c.l.b16 %v2602
      %v2722 = vunpack.c.h.b16 %v2602
      %v2723 = vunpack.c.l.b16 %v2603
      %v2724 = vunpack.c.h.b16 %v2603
      %v2725 = vunpack.c.l.b16 %v2604
      %v2726 = vunpack.c.h.b16 %v2604
      %v2727 = vunpack.c.l.b16 %v2605
      %v2728 = vunpack.c.h.b16 %v2605
      %v2729 = vunpack.c.l.b16 %v2606
      %v2730 = vunpack.c.h.b16 %v2606
      %v2731 = vunpack.c.l.b16 %v2607
      %v2732 = vunpack.c.h.b16 %v2607
      %v2733 = vunpack.c.l.b16 %v2608
      %v2734 = vunpack.c.h.b16 %v2608
      %v2735 = vunpack.c.l.b16 %v2609
      %v2736 = vunpack.c.h.b16 %v2609
      %v2737 = vunpack.c.l.b16 %v2610
      %v2738 = vunpack.c.h.b16 %v2610
      %v2739 = vunpack.c.l.b16 %v2611
      %v2740 = vunpack.c.h.b16 %v2611
      %v2741 = vpack.c.b16 %v2679, %v2677
      %v2742 = vpack.c.b16 %v2680, %v2678
      %v2743 = vpack.c.b16 %v2683, %v2681
      %v2744 = vpack.c.b16 %v2684, %v2682
      %v2745 = vpack.c.b16 %v2687, %v2685
      %v2746 = vpack.c.b16 %v2688, %v2686
      %v2747 = vpack.c.b16 %v2691, %v2689
      %v2748 = vpack.c.b16 %v2692, %v2690
      %v2749 = vpack.c.b16 %v2695, %v2693
      %v2750 = vpack.c.b16 %v2696, %v2694
      %v2751 = vpack.c.b16 %v2699, %v2697
      %v2752 = vpack.c.b16 %v2700, %v2698
      %v2753 = vpack.c.b16 %v2703, %v2701
      %v2754 = vpack.c.b16 %v2704, %v2702
      %v2755 = vpack.c.b16 %v2707, %v2705
      %v2756 = vpack.c.b16 %v2708, %v2706
      %v2757 = vpack.c.b16 %v2711, %v2709
      %v2758 = vpack.c.b16 %v2712, %v2710
      %v2759 = vpack.c.b16 %v2715, %v2713
      %v2760 = vpack.c.b16 %v2716, %v2714
      %v2761 = vpack.c.b16 %v2719, %v2717
      %v2762 = vpack.c.b16 %v2720, %v2718
      %v2763 = vpack.c.b16 %v2723, %v2721
      %v2764 = vpack.c.b16 %v2724, %v2722
      %v2765 = vpack.c.b16 %v2727, %v2725
      %v2766 = vpack.c.b16 %v2728, %v2726
      %v2767 = vpack.c.b16 %v2731, %v2729
      %v2768 = vpack.c.b16 %v2732, %v2730
      %v2769 = vpack.c.b16 %v2735, %v2733
      %v2770 = vpack.c.b16 %v2736, %v2734
      %v2771 = vpack.c.b16 %v2739, %v2737
      %v2772 = vpack.c.b16 %v2740, %v2738
      %v2837 = vunpack.c.l.b16 %v2613
      %v2838 = vunpack.c.l.b16 %v2614
      %v2839 = vunpack.c.l.b16 %v2615
      %v2840 = vunpack.c.l.b16 %v2616
      %v2841 = vunpack.c.l.b16 %v2617
      %v2842 = vunpack.c.l.b16 %v2618
      %v2843 = vunpack.c.l.b16 %v2619
      %v2844 = vunpack.c.l.b16 %v2620
      %v2845 = vunpack.c.l.b16 %v2621
      %v2846 = vunpack.c.l.b16 %v2622
      %v2847 = vunpack.c.l.b16 %v2623
      %v2848 = vunpack.c.l.b16 %v2624
      %v2849 = vunpack.c.l.b16 %v2625
      %v2850 = vunpack.c.l.b16 %v2626
      %v2851 = vunpack.c.l.b16 %v2627
      %v2852 = vunpack.c.l.b16 %v2628
      %v2853 = vunpack.c.l.b16 %v2629
      %v2854 = vunpack.c.l.b16 %v2630
      %v2855 = vunpack.c.l.b16 %v2631
      %v2856 = vunpack.c.l.b16 %v2632
      %v2857 = vunpack.c.l.b16 %v2633
      %v2858 = vunpack.c.l.b16 %v2634
      %v2859 = vunpack.c.l.b16 %v2635
      %v2860 = vunpack.c.l.b16 %v2636
      %v2861 = vunpack.c.l.b16 %v2637
      %v2862 = vunpack.c.l.b16 %v2638
      %v2863 = vunpack.c.l.b16 %v2639
      %v2864 = vunpack.c.l.b16 %v2640
      %v2865 = vunpack.c.l.b16 %v2641
      %v2866 = vunpack.c.l.b16 %v2642
      %v2867 = vunpack.c.l.b16 %v2643
      %v2868 = vunpack.c.l.b16 %v2644
      %v2869 = vpack.c.b16 %v2838, %v2837
      %v2870 = vpack.c.b16 %v2840, %v2839
      %v2871 = vpack.c.b16 %v2842, %v2841
      %v2872 = vpack.c.b16 %v2844, %v2843
      %v2873 = vpack.c.b16 %v2846, %v2845
      %v2874 = vpack.c.b16 %v2848, %v2847
      %v2875 = vpack.c.b16 %v2850, %v2849
      %v2876 = vpack.c.b16 %v2852, %v2851
      %v2877 = vpack.c.b16 %v2854, %v2853
      %v2878 = vpack.c.b16 %v2856, %v2855
      %v2879 = vpack.c.b16 %v2858, %v2857
      %v2880 = vpack.c.b16 %v2860, %v2859
      %v2881 = vpack.c.b16 %v2862, %v2861
      %v2882 = vpack.c.b16 %v2864, %v2863
      %v2883 = vpack.c.b16 %v2866, %v2865
      %v2884 = vpack.c.b16 %v2868, %v2867
      %2901 = vmatpush.bf16.msra.mxu0 %v2876
      %2902 = vmatpush.bf16.msra.mxu0 %v2875
      %2903 = vmatpush.bf16.msra.mxu0 %v2874
      %2904 = vmatpush.bf16.msra.mxu0 %v2873
      %2905 = vmatpush.bf16.msra.mxu0 %v2872
      %2906 = vmatpush.bf16.msra.mxu0 %v2871
      %2907 = vmatpush.bf16.msra.mxu0 %v2870
      %2908 = vmatpush.bf16.msra.mxu0 %v2869
      %2909 = vmatmul.bf16.gmra.mxu0 %v2741
      %v2910 = vpop.f32.mrf.mxu0
      %v2911 = vadd.f32 0.0, %v2910
      %v2912 = vpop.f32.mrf.mxu0
      %v2913 = vadd.f32 0.0, %v2912
      %2914 = vmatmul.bf16.gmra.mxu0 %v2743
      %v2915 = vpop.f32.mrf.mxu0
      %v2916 = vadd.f32 0.0, %v2915
      %v2917 = vpop.f32.mrf.mxu0
      %v2918 = vadd.f32 0.0, %v2917
      %2919 = vmatmul.bf16.gmra.mxu0 %v2745
      %v2920 = vpop.f32.mrf.mxu0
      %v2921 = vadd.f32 0.0, %v2920
      %v2922 = vpop.f32.mrf.mxu0
      %v2923 = vadd.f32 0.0, %v2922
      %2924 = vmatmul.bf16.gmra.mxu0 %v2747
      %v2925 = vpop.f32.mrf.mxu0
      %v2926 = vadd.f32 0.0, %v2925
      %v2927 = vpop.f32.mrf.mxu0
      %v2928 = vadd.f32 0.0, %v2927
      %2929 = vmatmul.bf16.gmra.mxu0 %v2749
      %v2930 = vpop.f32.mrf.mxu0
      %v2931 = vadd.f32 0.0, %v2930
      %v2932 = vpop.f32.mrf.mxu0
      %v2933 = vadd.f32 0.0, %v2932
      %2934 = vmatmul.bf16.gmra.mxu0 %v2751
      %v2935 = vpop.f32.mrf.mxu0
      %v2936 = vadd.f32 0.0, %v2935
      %v2937 = vpop.f32.mrf.mxu0
      %v2938 = vadd.f32 0.0, %v2937
      %2939 = vmatmul.bf16.gmra.mxu0 %v2753
      %v2940 = vpop.f32.mrf.mxu0
      %v2941 = vadd.f32 0.0, %v2940
      %v2942 = vpop.f32.mrf.mxu0
      %v2943 = vadd.f32 0.0, %v2942
      %2944 = vmatmul.bf16.gmra.mxu0 %v2755
      %v2945 = vpop.f32.mrf.mxu0
      %v2946 = vadd.f32 0.0, %v2945
      %v2947 = vpop.f32.mrf.mxu0
      %v2948 = vadd.f32 0.0, %v2947
      %2949 = vmatmul.bf16.gmra.mxu0 %v2757
      %v2950 = vpop.f32.mrf.mxu0
      %v2951 = vadd.f32 0.0, %v2950
      %v2952 = vpop.f32.mrf.mxu0
      %v2953 = vadd.f32 0.0, %v2952
      %2954 = vmatmul.bf16.gmra.mxu0 %v2759
      %v2955 = vpop.f32.mrf.mxu0
      %v2956 = vadd.f32 0.0, %v2955
      %v2957 = vpop.f32.mrf.mxu0
      %v2958 = vadd.f32 0.0, %v2957
      %2959 = vmatmul.bf16.gmra.mxu0 %v2761
      %v2960 = vpop.f32.mrf.mxu0
      %v2961 = vadd.f32 0.0, %v2960
      %v2962 = vpop.f32.mrf.mxu0
      %v2963 = vadd.f32 0.0, %v2962
      %2964 = vmatmul.bf16.gmra.mxu0 %v2763
      %v2965 = vpop.f32.mrf.mxu0
      %v2966 = vadd.f32 0.0, %v2965
      %v2967 = vpop.f32.mrf.mxu0
      %v2968 = vadd.f32 0.0, %v2967
      %2969 = vmatmul.bf16.gmra.mxu0 %v2765
      %v2970 = vpop.f32.mrf.mxu0
      %v2971 = vadd.f32 0.0, %v2970
      %v2972 = vpop.f32.mrf.mxu0
      %v2973 = vadd.f32 0.0, %v2972
      %2974 = vmatmul.bf16.gmra.mxu0 %v2767
      %v2975 = vpop.f32.mrf.mxu0
      %v2976 = vadd.f32 0.0, %v2975
      %v2977 = vpop.f32.mrf.mxu0
      %v2978 = vadd.f32 0.0, %v2977
      %2979 = vmatmul.bf16.gmra.mxu0 %v2769
      %v2980 = vpop.f32.mrf.mxu0
      %v2981 = vadd.f32 0.0, %v2980
      %v2982 = vpop.f32.mrf.mxu0
      %v2983 = vadd.f32 0.0, %v2982
      %2984 = vmatmul.bf16.gmra.mxu0 %v2771
      %v2985 = vpop.f32.mrf.mxu0
      %v2986 = vadd.f32 0.0, %v2985
      %v2987 = vpop.f32.mrf.mxu0
      %v2988 = vadd.f32 0.0, %v2987
      %2989 = vdwg.mxu0
      %2990 = vmatpush.bf16.msra.mxu0 %v2884
      %2991 = vmatpush.bf16.msra.mxu0 %v2883
      %2992 = vmatpush.bf16.msra.mxu0 %v2882
      %2993 = vmatpush.bf16.msra.mxu0 %v2881
      %2994 = vmatpush.bf16.msra.mxu0 %v2880
      %2995 = vmatpush.bf16.msra.mxu0 %v2879
      %2996 = vmatpush.bf16.msra.mxu0 %v2878
      %2997 = vmatpush.bf16.msra.mxu0 %v2877
      %2998 = vmatmul.bf16.gmra.mxu0 %v2742
      %v2999 = vpop.f32.mrf.mxu0
      %v3000 = vadd.f32 %v2911, %v2999
      %v3001 = vpop.f32.mrf.mxu0
      %v3002 = vadd.f32 %v2913, %v3001
      %3003 = vmatmul.bf16.gmra.mxu0 %v2744
      %v3004 = vpop.f32.mrf.mxu0
      %v3005 = vadd.f32 %v2916, %v3004
      %v3006 = vpop.f32.mrf.mxu0
      %v3007 = vadd.f32 %v2918, %v3006
      %3008 = vmatmul.bf16.gmra.mxu0 %v2746
      %v3009 = vpop.f32.mrf.mxu0
      %v3010 = vadd.f32 %v2921, %v3009
      %v3011 = vpop.f32.mrf.mxu0
      %v3012 = vadd.f32 %v2923, %v3011
      %3013 = vmatmul.bf16.gmra.mxu0 %v2748
      %v3014 = vpop.f32.mrf.mxu0
      %v3015 = vadd.f32 %v2926, %v3014
      %v3016 = vpop.f32.mrf.mxu0
      %v3017 = vadd.f32 %v2928, %v3016
      %3018 = vmatmul.bf16.gmra.mxu0 %v2750
      %v3019 = vpop.f32.mrf.mxu0
      %v3020 = vadd.f32 %v2931, %v3019
      %v3021 = vpop.f32.mrf.mxu0
      %v3022 = vadd.f32 %v2933, %v3021
      %3023 = vmatmul.bf16.gmra.mxu0 %v2752
      %v3024 = vpop.f32.mrf.mxu0
      %v3025 = vadd.f32 %v2936, %v3024
      %v3026 = vpop.f32.mrf.mxu0
      %v3027 = vadd.f32 %v2938, %v3026
      %3028 = vmatmul.bf16.gmra.mxu0 %v2754
      %v3029 = vpop.f32.mrf.mxu0
      %v3030 = vadd.f32 %v2941, %v3029
      %v3031 = vpop.f32.mrf.mxu0
      %v3032 = vadd.f32 %v2943, %v3031
      %3033 = vmatmul.bf16.gmra.mxu0 %v2756
      %v3034 = vpop.f32.mrf.mxu0
      %v3035 = vadd.f32 %v2946, %v3034
      %v3036 = vpop.f32.mrf.mxu0
      %v3037 = vadd.f32 %v2948, %v3036
      %3038 = vmatmul.bf16.gmra.mxu0 %v2758
      %v3039 = vpop.f32.mrf.mxu0
      %v3040 = vadd.f32 %v2951, %v3039
      %v3041 = vpop.f32.mrf.mxu0
      %v3042 = vadd.f32 %v2953, %v3041
      %3043 = vmatmul.bf16.gmra.mxu0 %v2760
      %v3044 = vpop.f32.mrf.mxu0
      %v3045 = vadd.f32 %v2956, %v3044
      %v3046 = vpop.f32.mrf.mxu0
      %v3047 = vadd.f32 %v2958, %v3046
      %3048 = vmatmul.bf16.gmra.mxu0 %v2762
      %v3049 = vpop.f32.mrf.mxu0
      %v3050 = vadd.f32 %v2961, %v3049
      %v3051 = vpop.f32.mrf.mxu0
      %v3052 = vadd.f32 %v2963, %v3051
      %3053 = vmatmul.bf16.gmra.mxu0 %v2764
      %v3054 = vpop.f32.mrf.mxu0
      %v3055 = vadd.f32 %v2966, %v3054
      %v3056 = vpop.f32.mrf.mxu0
      %v3057 = vadd.f32 %v2968, %v3056
      %3058 = vmatmul.bf16.gmra.mxu0 %v2766
      %v3059 = vpop.f32.mrf.mxu0
      %v3060 = vadd.f32 %v2971, %v3059
      %v3061 = vpop.f32.mrf.mxu0
      %v3062 = vadd.f32 %v2973, %v3061
      %3063 = vmatmul.bf16.gmra.mxu0 %v2768
      %v3064 = vpop.f32.mrf.mxu0
      %v3065 = vadd.f32 %v2976, %v3064
      %v3066 = vpop.f32.mrf.mxu0
      %v3067 = vadd.f32 %v2978, %v3066
      %3068 = vmatmul.bf16.gmra.mxu0 %v2770
      %v3069 = vpop.f32.mrf.mxu0
      %v3070 = vadd.f32 %v2981, %v3069
      %v3071 = vpop.f32.mrf.mxu0
      %v3072 = vadd.f32 %v2983, %v3071
      %3073 = vmatmul.bf16.gmra.mxu0 %v2772
      %v3074 = vpop.f32.mrf.mxu0
      %v3075 = vadd.f32 %v2986, %v3074
      %v3076 = vpop.f32.mrf.mxu0
      %v3077 = vadd.f32 %v2988, %v3076
      %3078 = vdwg.mxu0
      %v3079 = vld [vmem:[#allocation2] sm:$0xff]
      %v3080 = vld [vmem:[#allocation2 + $0x8] sm:$0xff]
      %v3081 = vld [vmem:[#allocation2 + $0x10] sm:$0xff]
      %v3082 = vld [vmem:[#allocation2 + $0x18] sm:$0xff]
      %v3083 = vld [vmem:[#allocation2 + $0x20] sm:$0xff]
      %v3084 = vld [vmem:[#allocation2 + $0x28] sm:$0xff]
      %v3085 = vld [vmem:[#allocation2 + $0x30] sm:$0xff]
      %v3086 = vld [vmem:[#allocation2 + $0x38] sm:$0xff]
      %v3087 = vld [vmem:[#allocation2 + $0x40] sm:$0xff]
      %v3088 = vld [vmem:[#allocation2 + $0x48] sm:$0xff]
      %v3089 = vld [vmem:[#allocation2 + $0x50] sm:$0xff]
      %v3090 = vld [vmem:[#allocation2 + $0x58] sm:$0xff]
      %v3091 = vld [vmem:[#allocation2 + $0x60] sm:$0xff]
      %v3092 = vld [vmem:[#allocation2 + $0x68] sm:$0xff]
      %v3093 = vld [vmem:[#allocation2 + $0x70] sm:$0xff]
      %v3094 = vld [vmem:[#allocation2 + $0x78] sm:$0xff]
      %v3095 = vld [vmem:[#allocation2 + $0x80] sm:$0xff]
      %v3096 = vld [vmem:[#allocation2 + $0x88] sm:$0xff]
      %v3097 = vld [vmem:[#allocation2 + $0x90] sm:$0xff]
      %v3098 = vld [vmem:[#allocation2 + $0x98] sm:$0xff]
      %v3099 = vld [vmem:[#allocation2 + $0xa0] sm:$0xff]
      %v3100 = vld [vmem:[#allocation2 + $0xa8] sm:$0xff]
      %v3101 = vld [vmem:[#allocation2 + $0xb0] sm:$0xff]
      %v3102 = vld [vmem:[#allocation2 + $0xb8] sm:$0xff]
      %v3103 = vld [vmem:[#allocation2 + $0xc0] sm:$0xff]
      %v3104 = vld [vmem:[#allocation2 + $0xc8] sm:$0xff]
      %v3105 = vld [vmem:[#allocation2 + $0xd0] sm:$0xff]
      %v3106 = vld [vmem:[#allocation2 + $0xd8] sm:$0xff]
      %v3107 = vld [vmem:[#allocation2 + $0xe0] sm:$0xff]
      %v3108 = vld [vmem:[#allocation2 + $0xe8] sm:$0xff]
      %v3109 = vld [vmem:[#allocation2 + $0xf0] sm:$0xff]
      %v3110 = vld [vmem:[#allocation2 + $0xf8] sm:$0xff]
      %v3111 = vadd.f32 %v3079, %v3000
      %v3112 = vadd.f32 %v3080, %v3002
      %v3113 = vadd.f32 %v3081, %v3005
      %v3114 = vadd.f32 %v3082, %v3007
      %v3115 = vadd.f32 %v3083, %v3010
      %v3116 = vadd.f32 %v3084, %v3012
      %v3117 = vadd.f32 %v3085, %v3015
      %v3118 = vadd.f32 %v3086, %v3017
      %v3119 = vadd.f32 %v3087, %v3020
      %v3120 = vadd.f32 %v3088, %v3022
      %v3121 = vadd.f32 %v3089, %v3025
      %v3122 = vadd.f32 %v3090, %v3027
      %v3123 = vadd.f32 %v3091, %v3030
      %v3124 = vadd.f32 %v3092, %v3032
      %v3125 = vadd.f32 %v3093, %v3035
      %v3126 = vadd.f32 %v3094, %v3037
      %v3127 = vadd.f32 %v3095, %v3040
      %v3128 = vadd.f32 %v3096, %v3042
      %v3129 = vadd.f32 %v3097, %v3045
      %v3130 = vadd.f32 %v3098, %v3047
      %v3131 = vadd.f32 %v3099, %v3050
      %v3132 = vadd.f32 %v3100, %v3052
      %v3133 = vadd.f32 %v3101, %v3055
      %v3134 = vadd.f32 %v3102, %v3057
      %v3135 = vadd.f32 %v3103, %v3060
      %v3136 = vadd.f32 %v3104, %v3062
      %v3137 = vadd.f32 %v3105, %v3065
      %v3138 = vadd.f32 %v3106, %v3067
      %v3139 = vadd.f32 %v3107, %v3070
      %v3140 = vadd.f32 %v3108, %v3072
      %v3141 = vadd.f32 %v3109, %v3075
      %v3142 = vadd.f32 %v3110, %v3077
      %3143 = vst [vmem:[#allocation2] sm:$0xff] %v3111
      %3144 = vst [vmem:[#allocation2 + $0x8] sm:$0xff] %v3112
      %3145 = vst [vmem:[#allocation2 + $0x10] sm:$0xff] %v3113
      %3146 = vst [vmem:[#allocation2 + $0x18] sm:$0xff] %v3114
      %3147 = vst [vmem:[#allocation2 + $0x20] sm:$0xff] %v3115
      %3148 = vst [vmem:[#allocation2 + $0x28] sm:$0xff] %v3116
      %3149 = vst [vmem:[#allocation2 + $0x30] sm:$0xff] %v3117
      %3150 = vst [vmem:[#allocation2 + $0x38] sm:$0xff] %v3118
      %3151 = vst [vmem:[#allocation2 + $0x40] sm:$0xff] %v3119
      %3152 = vst [vmem:[#allocation2 + $0x48] sm:$0xff] %v3120
      %3153 = vst [vmem:[#allocation2 + $0x50] sm:$0xff] %v3121
      %3154 = vst [vmem:[#allocation2 + $0x58] sm:$0xff] %v3122
      %3155 = vst [vmem:[#allocation2 + $0x60] sm:$0xff] %v3123
      %3156 = vst [vmem:[#allocation2 + $0x68] sm:$0xff] %v3124
      %3157 = vst [vmem:[#allocation2 + $0x70] sm:$0xff] %v3125
      %3158 = vst [vmem:[#allocation2 + $0x78] sm:$0xff] %v3126
      %3159 = vst [vmem:[#allocation2 + $0x80] sm:$0xff] %v3127
      %3160 = vst [vmem:[#allocation2 + $0x88] sm:$0xff] %v3128
      %3161 = vst [vmem:[#allocation2 + $0x90] sm:$0xff] %v3129
      %3162 = vst [vmem:[#allocation2 + $0x98] sm:$0xff] %v3130
      %3163 = vst [vmem:[#allocation2 + $0xa0] sm:$0xff] %v3131
      %3164 = vst [vmem:[#allocation2 + $0xa8] sm:$0xff] %v3132
      %3165 = vst [vmem:[#allocation2 + $0xb0] sm:$0xff] %v3133
      %3166 = vst [vmem:[#allocation2 + $0xb8] sm:$0xff] %v3134
      %3167 = vst [vmem:[#allocation2 + $0xc0] sm:$0xff] %v3135
      %3168 = vst [vmem:[#allocation2 + $0xc8] sm:$0xff] %v3136
      %3169 = vst [vmem:[#allocation2 + $0xd0] sm:$0xff] %v3137
      %3170 = vst [vmem:[#allocation2 + $0xd8] sm:$0xff] %v3138
      %3171 = vst [vmem:[#allocation2 + $0xe0] sm:$0xff] %v3139
      %3172 = vst [vmem:[#allocation2 + $0xe8] sm:$0xff] %v3140
      %3173 = vst [vmem:[#allocation2 + $0xf0] sm:$0xff] %v3141
      %3174 = vst [vmem:[#allocation2 + $0xf8] sm:$0xff] %v3142
      %v3175 = vld [vmem:[#allocation2] sm:$0xff]
      %v3176 = vld [vmem:[#allocation2 + $0x8] sm:$0xff]
      %v3177 = vld [vmem:[#allocation2 + $0x10] sm:$0xff]
      %v3178 = vld [vmem:[#allocation2 + $0x18] sm:$0xff]
      %v3179 = vld [vmem:[#allocation2 + $0x20] sm:$0xff]
      %v3180 = vld [vmem:[#allocation2 + $0x28] sm:$0xff]
      %v3181 = vld [vmem:[#allocation2 + $0x30] sm:$0xff]
      %v3182 = vld [vmem:[#allocation2 + $0x38] sm:$0xff]
      %v3183 = vld [vmem:[#allocation2 + $0x40] sm:$0xff]
      %v3184 = vld [vmem:[#allocation2 + $0x48] sm:$0xff]
      %v3185 = vld [vmem:[#allocation2 + $0x50] sm:$0xff]
      %v3186 = vld [vmem:[#allocation2 + $0x58] sm:$0xff]
      %v3187 = vld [vmem:[#allocation2 + $0x60] sm:$0xff]
      %v3188 = vld [vmem:[#allocation2 + $0x68] sm:$0xff]
      %v3189 = vld [vmem:[#allocation2 + $0x70] sm:$0xff]
      %v3190 = vld [vmem:[#allocation2 + $0x78] sm:$0xff]
      %v3191 = vld [vmem:[#allocation2 + $0x80] sm:$0xff]
      %v3192 = vld [vmem:[#allocation2 + $0x88] sm:$0xff]
      %v3193 = vld [vmem:[#allocation2 + $0x90] sm:$0xff]
      %v3194 = vld [vmem:[#allocation2 + $0x98] sm:$0xff]
      %v3195 = vld [vmem:[#allocation2 + $0xa0] sm:$0xff]
      %v3196 = vld [vmem:[#allocation2 + $0xa8] sm:$0xff]
      %v3197 = vld [vmem:[#allocation2 + $0xb0] sm:$0xff]
      %v3198 = vld [vmem:[#allocation2 + $0xb8] sm:$0xff]
      %v3199 = vld [vmem:[#allocation2 + $0xc0] sm:$0xff]
      %v3200 = vld [vmem:[#allocation2 + $0xc8] sm:$0xff]
      %v3201 = vld [vmem:[#allocation2 + $0xd0] sm:$0xff]
      %v3202 = vld [vmem:[#allocation2 + $0xd8] sm:$0xff]
      %v3203 = vld [vmem:[#allocation2 + $0xe0] sm:$0xff]
      %v3204 = vld [vmem:[#allocation2 + $0xe8] sm:$0xff]
      %v3205 = vld [vmem:[#allocation2 + $0xf0] sm:$0xff]
      %v3206 = vld [vmem:[#allocation2 + $0xf8] sm:$0xff]
      %v3207 = vsub.f32 0.0, %v3175
      %v3208 = vsub.f32 0.0, %v3176
      %v3209 = vsub.f32 0.0, %v3177
      %v3210 = vsub.f32 0.0, %v3178
      %v3211 = vsub.f32 0.0, %v3179
      %v3212 = vsub.f32 0.0, %v3180
      %v3213 = vsub.f32 0.0, %v3181
      %v3214 = vsub.f32 0.0, %v3182
      %v3215 = vsub.f32 0.0, %v3183
      %v3216 = vsub.f32 0.0, %v3184
      %v3217 = vsub.f32 0.0, %v3185
      %v3218 = vsub.f32 0.0, %v3186
      %v3219 = vsub.f32 0.0, %v3187
      %v3220 = vsub.f32 0.0, %v3188
      %v3221 = vsub.f32 0.0, %v3189
      %v3222 = vsub.f32 0.0, %v3190
      %v3223 = vsub.f32 0.0, %v3191
      %v3224 = vsub.f32 0.0, %v3192
      %v3225 = vsub.f32 0.0, %v3193
      %v3226 = vsub.f32 0.0, %v3194
      %v3227 = vsub.f32 0.0, %v3195
      %v3228 = vsub.f32 0.0, %v3196
      %v3229 = vsub.f32 0.0, %v3197
      %v3230 = vsub.f32 0.0, %v3198
      %v3231 = vsub.f32 0.0, %v3199
      %v3232 = vsub.f32 0.0, %v3200
      %v3233 = vsub.f32 0.0, %v3201
      %v3234 = vsub.f32 0.0, %v3202
      %v3235 = vsub.f32 0.0, %v3203
      %v3236 = vsub.f32 0.0, %v3204
      %v3237 = vsub.f32 0.0, %v3205
      %v3238 = vsub.f32 0.0, %v3206
      %v3239 = vmul.f32 %v3207, 1.442695
      %v3240 = vpow.pop %v3239
      %v3241 = vmul.f32 %v3208, 1.442695
      %v3242 = vpow.pop %v3241
      %v3243 = vmul.f32 %v3209, 1.442695
      %v3244 = vpow.pop %v3243
      %v3245 = vmul.f32 %v3210, 1.442695
      %v3246 = vpow.pop %v3245
      %v3247 = vmul.f32 %v3211, 1.442695
      %v3248 = vpow.pop %v3247
      %v3249 = vmul.f32 %v3212, 1.442695
      %v3250 = vpow.pop %v3249
      %v3251 = vmul.f32 %v3213, 1.442695
      %v3252 = vpow.pop %v3251
      %v3253 = vmul.f32 %v3214, 1.442695
      %v3254 = vpow.pop %v3253
      %v3255 = vmul.f32 %v3215, 1.442695
      %v3256 = vpow.pop %v3255
      %v3257 = vmul.f32 %v3216, 1.442695
      %v3258 = vpow.pop %v3257
      %v3259 = vmul.f32 %v3217, 1.442695
      %v3260 = vpow.pop %v3259
      %v3261 = vmul.f32 %v3218, 1.442695
      %v3262 = vpow.pop %v3261
      %v3263 = vmul.f32 %v3219, 1.442695
      %v3264 = vpow.pop %v3263
      %v3265 = vmul.f32 %v3220, 1.442695
      %v3266 = vpow.pop %v3265
      %v3267 = vmul.f32 %v3221, 1.442695
      %v3268 = vpow.pop %v3267
      %v3269 = vmul.f32 %v3222, 1.442695
      %v3270 = vpow.pop %v3269
      %v3271 = vmul.f32 %v3223, 1.442695
      %v3272 = vpow.pop %v3271
      %v3273 = vmul.f32 %v3224, 1.442695
      %v3274 = vpow.pop %v3273
      %v3275 = vmul.f32 %v3225, 1.442695
      %v3276 = vpow.pop %v3275
      %v3277 = vmul.f32 %v3226, 1.442695
      %v3278 = vpow.pop %v3277
      %v3279 = vmul.f32 %v3227, 1.442695
      %v3280 = vpow.pop %v3279
      %v3281 = vmul.f32 %v3228, 1.442695
      %v3282 = vpow.pop %v3281
      %v3283 = vmul.f32 %v3229, 1.442695
      %v3284 = vpow.pop %v3283
      %v3285 = vmul.f32 %v3230, 1.442695
      %v3286 = vpow.pop %v3285
      %v3287 = vmul.f32 %v3231, 1.442695
      %v3288 = vpow.pop %v3287
      %v3289 = vmul.f32 %v3232, 1.442695
      %v3290 = vpow.pop %v3289
      %v3291 = vmul.f32 %v3233, 1.442695
      %v3292 = vpow.pop %v3291
      %v3293 = vmul.f32 %v3234, 1.442695
      %v3294 = vpow.pop %v3293
      %v3295 = vmul.f32 %v3235, 1.442695
      %v3296 = vpow.pop %v3295
      %v3297 = vmul.f32 %v3236, 1.442695
      %v3298 = vpow.pop %v3297
      %v3299 = vmul.f32 %v3237, 1.442695
      %v3300 = vpow.pop %v3299
      %v3301 = vmul.f32 %v3238, 1.442695
      %v3302 = vpow.pop %v3301
      %v3303 = vadd.f32 %v3240, 1.0
      %v3304 = vadd.f32 %v3242, 1.0
      %v3305 = vadd.f32 %v3244, 1.0
      %v3306 = vadd.f32 %v3246, 1.0
      %v3307 = vadd.f32 %v3248, 1.0
      %v3308 = vadd.f32 %v3250, 1.0
      %v3309 = vadd.f32 %v3252, 1.0
      %v3310 = vadd.f32 %v3254, 1.0
      %v3311 = vadd.f32 %v3256, 1.0
      %v3312 = vadd.f32 %v3258, 1.0
      %v3313 = vadd.f32 %v3260, 1.0
      %v3314 = vadd.f32 %v3262, 1.0
      %v3315 = vadd.f32 %v3264, 1.0
      %v3316 = vadd.f32 %v3266, 1.0
      %v3317 = vadd.f32 %v3268, 1.0
      %v3318 = vadd.f32 %v3270, 1.0
      %v3319 = vadd.f32 %v3272, 1.0
      %v3320 = vadd.f32 %v3274, 1.0
      %v3321 = vadd.f32 %v3276, 1.0
      %v3322 = vadd.f32 %v3278, 1.0
      %v3323 = vadd.f32 %v3280, 1.0
      %v3324 = vadd.f32 %v3282, 1.0
      %v3325 = vadd.f32 %v3284, 1.0
      %v3326 = vadd.f32 %v3286, 1.0
      %v3327 = vadd.f32 %v3288, 1.0
      %v3328 = vadd.f32 %v3290, 1.0
      %v3329 = vadd.f32 %v3292, 1.0
      %v3330 = vadd.f32 %v3294, 1.0
      %v3331 = vadd.f32 %v3296, 1.0
      %v3332 = vadd.f32 %v3298, 1.0
      %v3333 = vadd.f32 %v3300, 1.0
      %v3334 = vadd.f32 %v3302, 1.0
      %v3335 = vrcp.pop %v3303
      %v3336 = vmul.f32 %v3303, %v3335
      %v3337 = vsub.f32 1.0, %v3336
      %v3338 = vmul.f32 %v3335, %v3337
      %v3339 = vadd.f32 %v3335, %v3338
      %vm3340 = vweird.f32 %v3303
      %vm3341 = vweird.f32 %v3335
      %vm3342 = vmor %vm3340, %vm3341
      %v3343 = vsel %vm3342, %v3335, %v3339
      %v3344 = vand.u32 2147483647, %v3303
      %vm3345 = vcmp.eq.f32.partialorder %v3344, 8.507059e+37
      %v3346 = vand.u32 %v3303, 2147483648
      %v3347 = vor.u32 1.1754944e-38, %v3346
      %v3348 = vsel %vm3345, %v3347, %v3343
      %v3349 = vmul.f32 1.0, %v3348
      %v3350 = vrcp.pop %v3304
      %v3351 = vmul.f32 %v3304, %v3350
      %v3352 = vsub.f32 1.0, %v3351
      %v3353 = vmul.f32 %v3350, %v3352
      %v3354 = vadd.f32 %v3350, %v3353
      %vm3355 = vweird.f32 %v3304
      %vm3356 = vweird.f32 %v3350
      %vm3357 = vmor %vm3355, %vm3356
      %v3358 = vsel %vm3357, %v3350, %v3354
      %v3359 = vand.u32 2147483647, %v3304
      %vm3360 = vcmp.eq.f32.partialorder %v3359, 8.507059e+37
      %v3361 = vand.u32 %v3304, 2147483648
      %v3362 = vor.u32 1.1754944e-38, %v3361
      %v3363 = vsel %vm3360, %v3362, %v3358
      %v3364 = vmul.f32 1.0, %v3363
      %v3365 = vrcp.pop %v3305
      %v3366 = vmul.f32 %v3305, %v3365
      %v3367 = vsub.f32 1.0, %v3366
      %v3368 = vmul.f32 %v3365, %v3367
      %v3369 = vadd.f32 %v3365, %v3368
      %vm3370 = vweird.f32 %v3305
      %vm3371 = vweird.f32 %v3365
      %vm3372 = vmor %vm3370, %vm3371
      %v3373 = vsel %vm3372, %v3365, %v3369
      %v3374 = vand.u32 2147483647, %v3305
      %vm3375 = vcmp.eq.f32.partialorder %v3374, 8.507059e+37
      %v3376 = vand.u32 %v3305, 2147483648
      %v3377 = vor.u32 1.1754944e-38, %v3376
      %v3378 = vsel %vm3375, %v3377, %v3373
      %v3379 = vmul.f32 1.0, %v3378
      %v3380 = vrcp.pop %v3306
      %v3381 = vmul.f32 %v3306, %v3380
      %v3382 = vsub.f32 1.0, %v3381
      %v3383 = vmul.f32 %v3380, %v3382
      %v3384 = vadd.f32 %v3380, %v3383
      %vm3385 = vweird.f32 %v3306
      %vm3386 = vweird.f32 %v3380
      %vm3387 = vmor %vm3385, %vm3386
      %v3388 = vsel %vm3387, %v3380, %v3384
      %v3389 = vand.u32 2147483647, %v3306
      %vm3390 = vcmp.eq.f32.partialorder %v3389, 8.507059e+37
      %v3391 = vand.u32 %v3306, 2147483648
      %v3392 = vor.u32 1.1754944e-38, %v3391
      %v3393 = vsel %vm3390, %v3392, %v3388
      %v3394 = vmul.f32 1.0, %v3393
      %v3395 = vrcp.pop %v3307
      %v3396 = vmul.f32 %v3307, %v3395
      %v3397 = vsub.f32 1.0, %v3396
      %v3398 = vmul.f32 %v3395, %v3397
      %v3399 = vadd.f32 %v3395, %v3398
      %vm3400 = vweird.f32 %v3307
      %vm3401 = vweird.f32 %v3395
      %vm3402 = vmor %vm3400, %vm3401
      %v3403 = vsel %vm3402, %v3395, %v3399
      %v3404 = vand.u32 2147483647, %v3307
      %vm3405 = vcmp.eq.f32.partialorder %v3404, 8.507059e+37
      %v3406 = vand.u32 %v3307, 2147483648
      %v3407 = vor.u32 1.1754944e-38, %v3406
      %v3408 = vsel %vm3405, %v3407, %v3403
      %v3409 = vmul.f32 1.0, %v3408
      %v3410 = vrcp.pop %v3308
      %v3411 = vmul.f32 %v3308, %v3410
      %v3412 = vsub.f32 1.0, %v3411
      %v3413 = vmul.f32 %v3410, %v3412
      %v3414 = vadd.f32 %v3410, %v3413
      %vm3415 = vweird.f32 %v3308
      %vm3416 = vweird.f32 %v3410
      %vm3417 = vmor %vm3415, %vm3416
      %v3418 = vsel %vm3417, %v3410, %v3414
      %v3419 = vand.u32 2147483647, %v3308
      %vm3420 = vcmp.eq.f32.partialorder %v3419, 8.507059e+37
      %v3421 = vand.u32 %v3308, 2147483648
      %v3422 = vor.u32 1.1754944e-38, %v3421
      %v3423 = vsel %vm3420, %v3422, %v3418
      %v3424 = vmul.f32 1.0, %v3423
      %v3425 = vrcp.pop %v3309
      %v3426 = vmul.f32 %v3309, %v3425
      %v3427 = vsub.f32 1.0, %v3426
      %v3428 = vmul.f32 %v3425, %v3427
      %v3429 = vadd.f32 %v3425, %v3428
      %vm3430 = vweird.f32 %v3309
      %vm3431 = vweird.f32 %v3425
      %vm3432 = vmor %vm3430, %vm3431
      %v3433 = vsel %vm3432, %v3425, %v3429
      %v3434 = vand.u32 2147483647, %v3309
      %vm3435 = vcmp.eq.f32.partialorder %v3434, 8.507059e+37
      %v3436 = vand.u32 %v3309, 2147483648
      %v3437 = vor.u32 1.1754944e-38, %v3436
      %v3438 = vsel %vm3435, %v3437, %v3433
      %v3439 = vmul.f32 1.0, %v3438
      %v3440 = vrcp.pop %v3310
      %v3441 = vmul.f32 %v3310, %v3440
      %v3442 = vsub.f32 1.0, %v3441
      %v3443 = vmul.f32 %v3440, %v3442
      %v3444 = vadd.f32 %v3440, %v3443
      %vm3445 = vweird.f32 %v3310
      %vm3446 = vweird.f32 %v3440
      %vm3447 = vmor %vm3445, %vm3446
      %v3448 = vsel %vm3447, %v3440, %v3444
      %v3449 = vand.u32 2147483647, %v3310
      %vm3450 = vcmp.eq.f32.partialorder %v3449, 8.507059e+37
      %v3451 = vand.u32 %v3310, 2147483648
      %v3452 = vor.u32 1.1754944e-38, %v3451
      %v3453 = vsel %vm3450, %v3452, %v3448
      %v3454 = vmul.f32 1.0, %v3453
      %v3455 = vrcp.pop %v3311
      %v3456 = vmul.f32 %v3311, %v3455
      %v3457 = vsub.f32 1.0, %v3456
      %v3458 = vmul.f32 %v3455, %v3457
      %v3459 = vadd.f32 %v3455, %v3458
      %vm3460 = vweird.f32 %v3311
      %vm3461 = vweird.f32 %v3455
      %vm3462 = vmor %vm3460, %vm3461
      %v3463 = vsel %vm3462, %v3455, %v3459
      %v3464 = vand.u32 2147483647, %v3311
      %vm3465 = vcmp.eq.f32.partialorder %v3464, 8.507059e+37
      %v3466 = vand.u32 %v3311, 2147483648
      %v3467 = vor.u32 1.1754944e-38, %v3466
      %v3468 = vsel %vm3465, %v3467, %v3463
      %v3469 = vmul.f32 1.0, %v3468
      %v3470 = vrcp.pop %v3312
      %v3471 = vmul.f32 %v3312, %v3470
      %v3472 = vsub.f32 1.0, %v3471
      %v3473 = vmul.f32 %v3470, %v3472
      %v3474 = vadd.f32 %v3470, %v3473
      %vm3475 = vweird.f32 %v3312
      %vm3476 = vweird.f32 %v3470
      %vm3477 = vmor %vm3475, %vm3476
      %v3478 = vsel %vm3477, %v3470, %v3474
      %v3479 = vand.u32 2147483647, %v3312
      %vm3480 = vcmp.eq.f32.partialorder %v3479, 8.507059e+37
      %v3481 = vand.u32 %v3312, 2147483648
      %v3482 = vor.u32 1.1754944e-38, %v3481
      %v3483 = vsel %vm3480, %v3482, %v3478
      %v3484 = vmul.f32 1.0, %v3483
      %v3485 = vrcp.pop %v3313
      %v3486 = vmul.f32 %v3313, %v3485
      %v3487 = vsub.f32 1.0, %v3486
      %v3488 = vmul.f32 %v3485, %v3487
      %v3489 = vadd.f32 %v3485, %v3488
      %vm3490 = vweird.f32 %v3313
      %vm3491 = vweird.f32 %v3485
      %vm3492 = vmor %vm3490, %vm3491
      %v3493 = vsel %vm3492, %v3485, %v3489
      %v3494 = vand.u32 2147483647, %v3313
      %vm3495 = vcmp.eq.f32.partialorder %v3494, 8.507059e+37
      %v3496 = vand.u32 %v3313, 2147483648
      %v3497 = vor.u32 1.1754944e-38, %v3496
      %v3498 = vsel %vm3495, %v3497, %v3493
      %v3499 = vmul.f32 1.0, %v3498
      %v3500 = vrcp.pop %v3314
      %v3501 = vmul.f32 %v3314, %v3500
      %v3502 = vsub.f32 1.0, %v3501
      %v3503 = vmul.f32 %v3500, %v3502
      %v3504 = vadd.f32 %v3500, %v3503
      %vm3505 = vweird.f32 %v3314
      %vm3506 = vweird.f32 %v3500
      %vm3507 = vmor %vm3505, %vm3506
      %v3508 = vsel %vm3507, %v3500, %v3504
      %v3509 = vand.u32 2147483647, %v3314
      %vm3510 = vcmp.eq.f32.partialorder %v3509, 8.507059e+37
      %v3511 = vand.u32 %v3314, 2147483648
      %v3512 = vor.u32 1.1754944e-38, %v3511
      %v3513 = vsel %vm3510, %v3512, %v3508
      %v3514 = vmul.f32 1.0, %v3513
      %v3515 = vrcp.pop %v3315
      %v3516 = vmul.f32 %v3315, %v3515
      %v3517 = vsub.f32 1.0, %v3516
      %v3518 = vmul.f32 %v3515, %v3517
      %v3519 = vadd.f32 %v3515, %v3518
      %vm3520 = vweird.f32 %v3315
      %vm3521 = vweird.f32 %v3515
      %vm3522 = vmor %vm3520, %vm3521
      %v3523 = vsel %vm3522, %v3515, %v3519
      %v3524 = vand.u32 2147483647, %v3315
      %vm3525 = vcmp.eq.f32.partialorder %v3524, 8.507059e+37
      %v3526 = vand.u32 %v3315, 2147483648
      %v3527 = vor.u32 1.1754944e-38, %v3526
      %v3528 = vsel %vm3525, %v3527, %v3523
      %v3529 = vmul.f32 1.0, %v3528
      %v3530 = vrcp.pop %v3316
      %v3531 = vmul.f32 %v3316, %v3530
      %v3532 = vsub.f32 1.0, %v3531
      %v3533 = vmul.f32 %v3530, %v3532
      %v3534 = vadd.f32 %v3530, %v3533
      %vm3535 = vweird.f32 %v3316
      %vm3536 = vweird.f32 %v3530
      %vm3537 = vmor %vm3535, %vm3536
      %v3538 = vsel %vm3537, %v3530, %v3534
      %v3539 = vand.u32 2147483647, %v3316
      %vm3540 = vcmp.eq.f32.partialorder %v3539, 8.507059e+37
      %v3541 = vand.u32 %v3316, 2147483648
      %v3542 = vor.u32 1.1754944e-38, %v3541
      %v3543 = vsel %vm3540, %v3542, %v3538
      %v3544 = vmul.f32 1.0, %v3543
      %v3545 = vrcp.pop %v3317
      %v3546 = vmul.f32 %v3317, %v3545
      %v3547 = vsub.f32 1.0, %v3546
      %v3548 = vmul.f32 %v3545, %v3547
      %v3549 = vadd.f32 %v3545, %v3548
      %vm3550 = vweird.f32 %v3317
      %vm3551 = vweird.f32 %v3545
      %vm3552 = vmor %vm3550, %vm3551
      %v3553 = vsel %vm3552, %v3545, %v3549
      %v3554 = vand.u32 2147483647, %v3317
      %vm3555 = vcmp.eq.f32.partialorder %v3554, 8.507059e+37
      %v3556 = vand.u32 %v3317, 2147483648
      %v3557 = vor.u32 1.1754944e-38, %v3556
      %v3558 = vsel %vm3555, %v3557, %v3553
      %v3559 = vmul.f32 1.0, %v3558
      %v3560 = vrcp.pop %v3318
      %v3561 = vmul.f32 %v3318, %v3560
      %v3562 = vsub.f32 1.0, %v3561
      %v3563 = vmul.f32 %v3560, %v3562
      %v3564 = vadd.f32 %v3560, %v3563
      %vm3565 = vweird.f32 %v3318
      %vm3566 = vweird.f32 %v3560
      %vm3567 = vmor %vm3565, %vm3566
      %v3568 = vsel %vm3567, %v3560, %v3564
      %v3569 = vand.u32 2147483647, %v3318
      %vm3570 = vcmp.eq.f32.partialorder %v3569, 8.507059e+37
      %v3571 = vand.u32 %v3318, 2147483648
      %v3572 = vor.u32 1.1754944e-38, %v3571
      %v3573 = vsel %vm3570, %v3572, %v3568
      %v3574 = vmul.f32 1.0, %v3573
      %v3575 = vrcp.pop %v3319
      %v3576 = vmul.f32 %v3319, %v3575
      %v3577 = vsub.f32 1.0, %v3576
      %v3578 = vmul.f32 %v3575, %v3577
      %v3579 = vadd.f32 %v3575, %v3578
      %vm3580 = vweird.f32 %v3319
      %vm3581 = vweird.f32 %v3575
      %vm3582 = vmor %vm3580, %vm3581
      %v3583 = vsel %vm3582, %v3575, %v3579
      %v3584 = vand.u32 2147483647, %v3319
      %vm3585 = vcmp.eq.f32.partialorder %v3584, 8.507059e+37
      %v3586 = vand.u32 %v3319, 2147483648
      %v3587 = vor.u32 1.1754944e-38, %v3586
      %v3588 = vsel %vm3585, %v3587, %v3583
      %v3589 = vmul.f32 1.0, %v3588
      %v3590 = vrcp.pop %v3320
      %v3591 = vmul.f32 %v3320, %v3590
      %v3592 = vsub.f32 1.0, %v3591
      %v3593 = vmul.f32 %v3590, %v3592
      %v3594 = vadd.f32 %v3590, %v3593
      %vm3595 = vweird.f32 %v3320
      %vm3596 = vweird.f32 %v3590
      %vm3597 = vmor %vm3595, %vm3596
      %v3598 = vsel %vm3597, %v3590, %v3594
      %v3599 = vand.u32 2147483647, %v3320
      %vm3600 = vcmp.eq.f32.partialorder %v3599, 8.507059e+37
      %v3601 = vand.u32 %v3320, 2147483648
      %v3602 = vor.u32 1.1754944e-38, %v3601
      %v3603 = vsel %vm3600, %v3602, %v3598
      %v3604 = vmul.f32 1.0, %v3603
      %v3605 = vrcp.pop %v3321
      %v3606 = vmul.f32 %v3321, %v3605
      %v3607 = vsub.f32 1.0, %v3606
      %v3608 = vmul.f32 %v3605, %v3607
      %v3609 = vadd.f32 %v3605, %v3608
      %vm3610 = vweird.f32 %v3321
      %vm3611 = vweird.f32 %v3605
      %vm3612 = vmor %vm3610, %vm3611
      %v3613 = vsel %vm3612, %v3605, %v3609
      %v3614 = vand.u32 2147483647, %v3321
      %vm3615 = vcmp.eq.f32.partialorder %v3614, 8.507059e+37
      %v3616 = vand.u32 %v3321, 2147483648
      %v3617 = vor.u32 1.1754944e-38, %v3616
      %v3618 = vsel %vm3615, %v3617, %v3613
      %v3619 = vmul.f32 1.0, %v3618
      %v3620 = vrcp.pop %v3322
      %v3621 = vmul.f32 %v3322, %v3620
      %v3622 = vsub.f32 1.0, %v3621
      %v3623 = vmul.f32 %v3620, %v3622
      %v3624 = vadd.f32 %v3620, %v3623
      %vm3625 = vweird.f32 %v3322
      %vm3626 = vweird.f32 %v3620
      %vm3627 = vmor %vm3625, %vm3626
      %v3628 = vsel %vm3627, %v3620, %v3624
      %v3629 = vand.u32 2147483647, %v3322
      %vm3630 = vcmp.eq.f32.partialorder %v3629, 8.507059e+37
      %v3631 = vand.u32 %v3322, 2147483648
      %v3632 = vor.u32 1.1754944e-38, %v3631
      %v3633 = vsel %vm3630, %v3632, %v3628
      %v3634 = vmul.f32 1.0, %v3633
      %v3635 = vrcp.pop %v3323
      %v3636 = vmul.f32 %v3323, %v3635
      %v3637 = vsub.f32 1.0, %v3636
      %v3638 = vmul.f32 %v3635, %v3637
      %v3639 = vadd.f32 %v3635, %v3638
      %vm3640 = vweird.f32 %v3323
      %vm3641 = vweird.f32 %v3635
      %vm3642 = vmor %vm3640, %vm3641
      %v3643 = vsel %vm3642, %v3635, %v3639
      %v3644 = vand.u32 2147483647, %v3323
      %vm3645 = vcmp.eq.f32.partialorder %v3644, 8.507059e+37
      %v3646 = vand.u32 %v3323, 2147483648
      %v3647 = vor.u32 1.1754944e-38, %v3646
      %v3648 = vsel %vm3645, %v3647, %v3643
      %v3649 = vmul.f32 1.0, %v3648
      %v3650 = vrcp.pop %v3324
      %v3651 = vmul.f32 %v3324, %v3650
      %v3652 = vsub.f32 1.0, %v3651
      %v3653 = vmul.f32 %v3650, %v3652
      %v3654 = vadd.f32 %v3650, %v3653
      %vm3655 = vweird.f32 %v3324
      %vm3656 = vweird.f32 %v3650
      %vm3657 = vmor %vm3655, %vm3656
      %v3658 = vsel %vm3657, %v3650, %v3654
      %v3659 = vand.u32 2147483647, %v3324
      %vm3660 = vcmp.eq.f32.partialorder %v3659, 8.507059e+37
      %v3661 = vand.u32 %v3324, 2147483648
      %v3662 = vor.u32 1.1754944e-38, %v3661
      %v3663 = vsel %vm3660, %v3662, %v3658
      %v3664 = vmul.f32 1.0, %v3663
      %v3665 = vrcp.pop %v3325
      %v3666 = vmul.f32 %v3325, %v3665
      %v3667 = vsub.f32 1.0, %v3666
      %v3668 = vmul.f32 %v3665, %v3667
      %v3669 = vadd.f32 %v3665, %v3668
      %vm3670 = vweird.f32 %v3325
      %vm3671 = vweird.f32 %v3665
      %vm3672 = vmor %vm3670, %vm3671
      %v3673 = vsel %vm3672, %v3665, %v3669
      %v3674 = vand.u32 2147483647, %v3325
      %vm3675 = vcmp.eq.f32.partialorder %v3674, 8.507059e+37
      %v3676 = vand.u32 %v3325, 2147483648
      %v3677 = vor.u32 1.1754944e-38, %v3676
      %v3678 = vsel %vm3675, %v3677, %v3673
      %v3679 = vmul.f32 1.0, %v3678
      %v3680 = vrcp.pop %v3326
      %v3681 = vmul.f32 %v3326, %v3680
      %v3682 = vsub.f32 1.0, %v3681
      %v3683 = vmul.f32 %v3680, %v3682
      %v3684 = vadd.f32 %v3680, %v3683
      %vm3685 = vweird.f32 %v3326
      %vm3686 = vweird.f32 %v3680
      %vm3687 = vmor %vm3685, %vm3686
      %v3688 = vsel %vm3687, %v3680, %v3684
      %v3689 = vand.u32 2147483647, %v3326
      %vm3690 = vcmp.eq.f32.partialorder %v3689, 8.507059e+37
      %v3691 = vand.u32 %v3326, 2147483648
      %v3692 = vor.u32 1.1754944e-38, %v3691
      %v3693 = vsel %vm3690, %v3692, %v3688
      %v3694 = vmul.f32 1.0, %v3693
      %v3695 = vrcp.pop %v3327
      %v3696 = vmul.f32 %v3327, %v3695
      %v3697 = vsub.f32 1.0, %v3696
      %v3698 = vmul.f32 %v3695, %v3697
      %v3699 = vadd.f32 %v3695, %v3698
      %vm3700 = vweird.f32 %v3327
      %vm3701 = vweird.f32 %v3695
      %vm3702 = vmor %vm3700, %vm3701
      %v3703 = vsel %vm3702, %v3695, %v3699
      %v3704 = vand.u32 2147483647, %v3327
      %vm3705 = vcmp.eq.f32.partialorder %v3704, 8.507059e+37
      %v3706 = vand.u32 %v3327, 2147483648
      %v3707 = vor.u32 1.1754944e-38, %v3706
      %v3708 = vsel %vm3705, %v3707, %v3703
      %v3709 = vmul.f32 1.0, %v3708
      %v3710 = vrcp.pop %v3328
      %v3711 = vmul.f32 %v3328, %v3710
      %v3712 = vsub.f32 1.0, %v3711
      %v3713 = vmul.f32 %v3710, %v3712
      %v3714 = vadd.f32 %v3710, %v3713
      %vm3715 = vweird.f32 %v3328
      %vm3716 = vweird.f32 %v3710
      %vm3717 = vmor %vm3715, %vm3716
      %v3718 = vsel %vm3717, %v3710, %v3714
      %v3719 = vand.u32 2147483647, %v3328
      %vm3720 = vcmp.eq.f32.partialorder %v3719, 8.507059e+37
      %v3721 = vand.u32 %v3328, 2147483648
      %v3722 = vor.u32 1.1754944e-38, %v3721
      %v3723 = vsel %vm3720, %v3722, %v3718
      %v3724 = vmul.f32 1.0, %v3723
      %v3725 = vrcp.pop %v3329
      %v3726 = vmul.f32 %v3329, %v3725
      %v3727 = vsub.f32 1.0, %v3726
      %v3728 = vmul.f32 %v3725, %v3727
      %v3729 = vadd.f32 %v3725, %v3728
      %vm3730 = vweird.f32 %v3329
      %vm3731 = vweird.f32 %v3725
      %vm3732 = vmor %vm3730, %vm3731
      %v3733 = vsel %vm3732, %v3725, %v3729
      %v3734 = vand.u32 2147483647, %v3329
      %vm3735 = vcmp.eq.f32.partialorder %v3734, 8.507059e+37
      %v3736 = vand.u32 %v3329, 2147483648
      %v3737 = vor.u32 1.1754944e-38, %v3736
      %v3738 = vsel %vm3735, %v3737, %v3733
      %v3739 = vmul.f32 1.0, %v3738
      %v3740 = vrcp.pop %v3330
      %v3741 = vmul.f32 %v3330, %v3740
      %v3742 = vsub.f32 1.0, %v3741
      %v3743 = vmul.f32 %v3740, %v3742
      %v3744 = vadd.f32 %v3740, %v3743
      %vm3745 = vweird.f32 %v3330
      %vm3746 = vweird.f32 %v3740
      %vm3747 = vmor %vm3745, %vm3746
      %v3748 = vsel %vm3747, %v3740, %v3744
      %v3749 = vand.u32 2147483647, %v3330
      %vm3750 = vcmp.eq.f32.partialorder %v3749, 8.507059e+37
      %v3751 = vand.u32 %v3330, 2147483648
      %v3752 = vor.u32 1.1754944e-38, %v3751
      %v3753 = vsel %vm3750, %v3752, %v3748
      %v3754 = vmul.f32 1.0, %v3753
      %v3755 = vrcp.pop %v3331
      %v3756 = vmul.f32 %v3331, %v3755
      %v3757 = vsub.f32 1.0, %v3756
      %v3758 = vmul.f32 %v3755, %v3757
      %v3759 = vadd.f32 %v3755, %v3758
      %vm3760 = vweird.f32 %v3331
      %vm3761 = vweird.f32 %v3755
      %vm3762 = vmor %vm3760, %vm3761
      %v3763 = vsel %vm3762, %v3755, %v3759
      %v3764 = vand.u32 2147483647, %v3331
      %vm3765 = vcmp.eq.f32.partialorder %v3764, 8.507059e+37
      %v3766 = vand.u32 %v3331, 2147483648
      %v3767 = vor.u32 1.1754944e-38, %v3766
      %v3768 = vsel %vm3765, %v3767, %v3763
      %v3769 = vmul.f32 1.0, %v3768
      %v3770 = vrcp.pop %v3332
      %v3771 = vmul.f32 %v3332, %v3770
      %v3772 = vsub.f32 1.0, %v3771
      %v3773 = vmul.f32 %v3770, %v3772
      %v3774 = vadd.f32 %v3770, %v3773
      %vm3775 = vweird.f32 %v3332
      %vm3776 = vweird.f32 %v3770
      %vm3777 = vmor %vm3775, %vm3776
      %v3778 = vsel %vm3777, %v3770, %v3774
      %v3779 = vand.u32 2147483647, %v3332
      %vm3780 = vcmp.eq.f32.partialorder %v3779, 8.507059e+37
      %v3781 = vand.u32 %v3332, 2147483648
      %v3782 = vor.u32 1.1754944e-38, %v3781
      %v3783 = vsel %vm3780, %v3782, %v3778
      %v3784 = vmul.f32 1.0, %v3783
      %v3785 = vrcp.pop %v3333
      %v3786 = vmul.f32 %v3333, %v3785
      %v3787 = vsub.f32 1.0, %v3786
      %v3788 = vmul.f32 %v3785, %v3787
      %v3789 = vadd.f32 %v3785, %v3788
      %vm3790 = vweird.f32 %v3333
      %vm3791 = vweird.f32 %v3785
      %vm3792 = vmor %vm3790, %vm3791
      %v3793 = vsel %vm3792, %v3785, %v3789
      %v3794 = vand.u32 2147483647, %v3333
      %vm3795 = vcmp.eq.f32.partialorder %v3794, 8.507059e+37
      %v3796 = vand.u32 %v3333, 2147483648
      %v3797 = vor.u32 1.1754944e-38, %v3796
      %v3798 = vsel %vm3795, %v3797, %v3793
      %v3799 = vmul.f32 1.0, %v3798
      %v3800 = vrcp.pop %v3334
      %v3801 = vmul.f32 %v3334, %v3800
      %v3802 = vsub.f32 1.0, %v3801
      %v3803 = vmul.f32 %v3800, %v3802
      %v3804 = vadd.f32 %v3800, %v3803
      %vm3805 = vweird.f32 %v3334
      %vm3806 = vweird.f32 %v3800
      %vm3807 = vmor %vm3805, %vm3806
      %v3808 = vsel %vm3807, %v3800, %v3804
      %v3809 = vand.u32 2147483647, %v3334
      %vm3810 = vcmp.eq.f32.partialorder %v3809, 8.507059e+37
      %v3811 = vand.u32 %v3334, 2147483648
      %v3812 = vor.u32 1.1754944e-38, %v3811
      %v3813 = vsel %vm3810, %v3812, %v3808
      %v3814 = vmul.f32 1.0, %v3813
      %v3815 = vmul.f32 %v3349, 2.0
      %v3816 = vmul.f32 %v3364, 2.0
      %v3817 = vmul.f32 %v3379, 2.0
      %v3818 = vmul.f32 %v3394, 2.0
      %v3819 = vmul.f32 %v3409, 2.0
      %v3820 = vmul.f32 %v3424, 2.0
      %v3821 = vmul.f32 %v3439, 2.0
      %v3822 = vmul.f32 %v3454, 2.0
      %v3823 = vmul.f32 %v3469, 2.0
      %v3824 = vmul.f32 %v3484, 2.0
      %v3825 = vmul.f32 %v3499, 2.0
      %v3826 = vmul.f32 %v3514, 2.0
      %v3827 = vmul.f32 %v3529, 2.0
      %v3828 = vmul.f32 %v3544, 2.0
      %v3829 = vmul.f32 %v3559, 2.0
      %v3830 = vmul.f32 %v3574, 2.0
      %v3831 = vmul.f32 %v3589, 2.0
      %v3832 = vmul.f32 %v3604, 2.0
      %v3833 = vmul.f32 %v3619, 2.0
      %v3834 = vmul.f32 %v3634, 2.0
      %v3835 = vmul.f32 %v3649, 2.0
      %v3836 = vmul.f32 %v3664, 2.0
      %v3837 = vmul.f32 %v3679, 2.0
      %v3838 = vmul.f32 %v3694, 2.0
      %v3839 = vmul.f32 %v3709, 2.0
      %v3840 = vmul.f32 %v3724, 2.0
      %v3841 = vmul.f32 %v3739, 2.0
      %v3842 = vmul.f32 %v3754, 2.0
      %v3843 = vmul.f32 %v3769, 2.0
      %v3844 = vmul.f32 %v3784, 2.0
      %v3845 = vmul.f32 %v3799, 2.0
      %v3846 = vmul.f32 %v3814, 2.0
      %v3847 = vsub.f32 %v3815, 1.0
      %v3848 = vsub.f32 %v3816, 1.0
      %v3849 = vsub.f32 %v3817, 1.0
      %v3850 = vsub.f32 %v3818, 1.0
      %v3851 = vsub.f32 %v3819, 1.0
      %v3852 = vsub.f32 %v3820, 1.0
      %v3853 = vsub.f32 %v3821, 1.0
      %v3854 = vsub.f32 %v3822, 1.0
      %v3855 = vsub.f32 %v3823, 1.0
      %v3856 = vsub.f32 %v3824, 1.0
      %v3857 = vsub.f32 %v3825, 1.0
      %v3858 = vsub.f32 %v3826, 1.0
      %v3859 = vsub.f32 %v3827, 1.0
      %v3860 = vsub.f32 %v3828, 1.0
      %v3861 = vsub.f32 %v3829, 1.0
      %v3862 = vsub.f32 %v3830, 1.0
      %v3863 = vsub.f32 %v3831, 1.0
      %v3864 = vsub.f32 %v3832, 1.0
      %v3865 = vsub.f32 %v3833, 1.0
      %v3866 = vsub.f32 %v3834, 1.0
      %v3867 = vsub.f32 %v3835, 1.0
      %v3868 = vsub.f32 %v3836, 1.0
      %v3869 = vsub.f32 %v3837, 1.0
      %v3870 = vsub.f32 %v3838, 1.0
      %v3871 = vsub.f32 %v3839, 1.0
      %v3872 = vsub.f32 %v3840, 1.0
      %v3873 = vsub.f32 %v3841, 1.0
      %v3874 = vsub.f32 %v3842, 1.0
      %v3875 = vsub.f32 %v3843, 1.0
      %v3876 = vsub.f32 %v3844, 1.0
      %v3877 = vsub.f32 %v3845, 1.0
      %v3878 = vsub.f32 %v3846, 1.0
      %v3879 = vld [vmem:[%s218] sm:$0xff]
      %v3880 = vld [vmem:[%s218 + $0x8] sm:$0xff]
      %v3881 = vld [vmem:[%s218 + $0x10] sm:$0xff]
      %v3882 = vld [vmem:[%s218 + $0x18] sm:$0xff]
      %v3883 = vld [vmem:[%s218 + $0x20] sm:$0xff]
      %v3884 = vld [vmem:[%s218 + $0x28] sm:$0xff]
      %v3885 = vld [vmem:[%s218 + $0x30] sm:$0xff]
      %v3886 = vld [vmem:[%s218 + $0x38] sm:$0xff]
      %v3887 = vld [vmem:[%s218 + $0x40] sm:$0xff]
      %v3888 = vld [vmem:[%s218 + $0x48] sm:$0xff]
      %v3889 = vld [vmem:[%s218 + $0x50] sm:$0xff]
      %v3890 = vld [vmem:[%s218 + $0x58] sm:$0xff]
      %v3891 = vld [vmem:[%s218 + $0x60] sm:$0xff]
      %v3892 = vld [vmem:[%s218 + $0x68] sm:$0xff]
      %v3893 = vld [vmem:[%s218 + $0x70] sm:$0xff]
      %v3894 = vld [vmem:[%s218 + $0x78] sm:$0xff]
      %v3895 = vld [vmem:[%s218 + $0x80] sm:$0xff]
      %v3896 = vld [vmem:[%s218 + $0x88] sm:$0xff]
      %v3897 = vld [vmem:[%s218 + $0x90] sm:$0xff]
      %v3898 = vld [vmem:[%s218 + $0x98] sm:$0xff]
      %v3899 = vld [vmem:[%s218 + $0xa0] sm:$0xff]
      %v3900 = vld [vmem:[%s218 + $0xa8] sm:$0xff]
      %v3901 = vld [vmem:[%s218 + $0xb0] sm:$0xff]
      %v3902 = vld [vmem:[%s218 + $0xb8] sm:$0xff]
      %v3903 = vld [vmem:[%s218 + $0xc0] sm:$0xff]
      %v3904 = vld [vmem:[%s218 + $0xc8] sm:$0xff]
      %v3905 = vld [vmem:[%s218 + $0xd0] sm:$0xff]
      %v3906 = vld [vmem:[%s218 + $0xd8] sm:$0xff]
      %v3907 = vld [vmem:[%s218 + $0xe0] sm:$0xff]
      %v3908 = vld [vmem:[%s218 + $0xe8] sm:$0xff]
      %v3909 = vld [vmem:[%s218 + $0xf0] sm:$0xff]
      %v3910 = vld [vmem:[%s218 + $0xf8] sm:$0xff]
      %3943 = vrot.lane.b32.xlu0 %v3879, 32
      %v3944 = vpop.permute.xlu0 %3943
      %3945 = vrot.lane.b32.xlu0 %v3880, 32
      %v3946 = vpop.permute.xlu0 %3945
      %3947 = vrot.lane.b32.xlu0 %v3881, 32
      %v3948 = vpop.permute.xlu0 %3947
      %3949 = vrot.lane.b32.xlu0 %v3882, 32
      %v3950 = vpop.permute.xlu0 %3949
      %3951 = vrot.lane.b32.xlu0 %v3883, 32
      %v3952 = vpop.permute.xlu0 %3951
      %3953 = vrot.lane.b32.xlu0 %v3884, 32
      %v3954 = vpop.permute.xlu0 %3953
      %3955 = vrot.lane.b32.xlu0 %v3885, 32
      %v3956 = vpop.permute.xlu0 %3955
      %3957 = vrot.lane.b32.xlu0 %v3886, 32
      %v3958 = vpop.permute.xlu0 %3957
      %3959 = vrot.lane.b32.xlu0 %v3887, 32
      %v3960 = vpop.permute.xlu0 %3959
      %3961 = vrot.lane.b32.xlu0 %v3888, 32
      %v3962 = vpop.permute.xlu0 %3961
      %3963 = vrot.lane.b32.xlu0 %v3889, 32
      %v3964 = vpop.permute.xlu0 %3963
      %3965 = vrot.lane.b32.xlu0 %v3890, 32
      %v3966 = vpop.permute.xlu0 %3965
      %3967 = vrot.lane.b32.xlu0 %v3891, 32
      %v3968 = vpop.permute.xlu0 %3967
      %3969 = vrot.lane.b32.xlu0 %v3892, 32
      %v3970 = vpop.permute.xlu0 %3969
      %3971 = vrot.lane.b32.xlu0 %v3893, 32
      %v3972 = vpop.permute.xlu0 %3971
      %3973 = vrot.lane.b32.xlu0 %v3894, 32
      %v3974 = vpop.permute.xlu0 %3973
      %3975 = vrot.lane.b32.xlu0 %v3895, 32
      %v3976 = vpop.permute.xlu0 %3975
      %3977 = vrot.lane.b32.xlu0 %v3896, 32
      %v3978 = vpop.permute.xlu0 %3977
      %3979 = vrot.lane.b32.xlu0 %v3897, 32
      %v3980 = vpop.permute.xlu0 %3979
      %3981 = vrot.lane.b32.xlu0 %v3898, 32
      %v3982 = vpop.permute.xlu0 %3981
      %3983 = vrot.lane.b32.xlu0 %v3899, 32
      %v3984 = vpop.permute.xlu0 %3983
      %3985 = vrot.lane.b32.xlu0 %v3900, 32
      %v3986 = vpop.permute.xlu0 %3985
      %3987 = vrot.lane.b32.xlu0 %v3901, 32
      %v3988 = vpop.permute.xlu0 %3987
      %3989 = vrot.lane.b32.xlu0 %v3902, 32
      %v3990 = vpop.permute.xlu0 %3989
      %3991 = vrot.lane.b32.xlu0 %v3903, 32
      %v3992 = vpop.permute.xlu0 %3991
      %3993 = vrot.lane.b32.xlu0 %v3904, 32
      %v3994 = vpop.permute.xlu0 %3993
      %3995 = vrot.lane.b32.xlu0 %v3905, 32
      %v3996 = vpop.permute.xlu0 %3995
      %3997 = vrot.lane.b32.xlu0 %v3906, 32
      %v3998 = vpop.permute.xlu0 %3997
      %3999 = vrot.lane.b32.xlu0 %v3907, 32
      %v4000 = vpop.permute.xlu0 %3999
      %4001 = vrot.lane.b32.xlu0 %v3908, 32
      %v4002 = vpop.permute.xlu0 %4001
      %4003 = vrot.lane.b32.xlu0 %v3909, 32
      %v4004 = vpop.permute.xlu0 %4003
      %4005 = vrot.lane.b32.xlu0 %v3910, 32
      %v4006 = vpop.permute.xlu0 %4005
      %v4039 = vmul.f32 %v3349, %v3944
      %v4040 = vmul.f32 %v3364, %v3946
      %v4041 = vmul.f32 %v3379, %v3948
      %v4042 = vmul.f32 %v3394, %v3950
      %v4043 = vmul.f32 %v3409, %v3952
      %v4044 = vmul.f32 %v3424, %v3954
      %v4045 = vmul.f32 %v3439, %v3956
      %v4046 = vmul.f32 %v3454, %v3958
      %v4047 = vmul.f32 %v3469, %v3960
      %v4048 = vmul.f32 %v3484, %v3962
      %v4049 = vmul.f32 %v3499, %v3964
      %v4050 = vmul.f32 %v3514, %v3966
      %v4051 = vmul.f32 %v3529, %v3968
      %v4052 = vmul.f32 %v3544, %v3970
      %v4053 = vmul.f32 %v3559, %v3972
      %v4054 = vmul.f32 %v3574, %v3974
      %v4055 = vmul.f32 %v3589, %v3976
      %v4056 = vmul.f32 %v3604, %v3978
      %v4057 = vmul.f32 %v3619, %v3980
      %v4058 = vmul.f32 %v3634, %v3982
      %v4059 = vmul.f32 %v3649, %v3984
      %v4060 = vmul.f32 %v3664, %v3986
      %v4061 = vmul.f32 %v3679, %v3988
      %v4062 = vmul.f32 %v3694, %v3990
      %v4063 = vmul.f32 %v3709, %v3992
      %v4064 = vmul.f32 %v3724, %v3994
      %v4065 = vmul.f32 %v3739, %v3996
      %v4066 = vmul.f32 %v3754, %v3998
      %v4067 = vmul.f32 %v3769, %v4000
      %v4068 = vmul.f32 %v3784, %v4002
      %v4069 = vmul.f32 %v3799, %v4004
      %v4070 = vmul.f32 %v3814, %v4006
      %4103 = vrot.lane.b32.xlu0 %v3847, 64
      %v4104 = vpop.permute.xlu0 %4103
      %4105 = vrot.lane.b32.xlu0 %v3848, 64
      %v4106 = vpop.permute.xlu0 %4105
      %4107 = vrot.lane.b32.xlu0 %v3849, 64
      %v4108 = vpop.permute.xlu0 %4107
      %4109 = vrot.lane.b32.xlu0 %v3850, 64
      %v4110 = vpop.permute.xlu0 %4109
      %4111 = vrot.lane.b32.xlu0 %v3851, 64
      %v4112 = vpop.permute.xlu0 %4111
      %4113 = vrot.lane.b32.xlu0 %v3852, 64
      %v4114 = vpop.permute.xlu0 %4113
      %4115 = vrot.lane.b32.xlu0 %v3853, 64
      %v4116 = vpop.permute.xlu0 %4115
      %4117 = vrot.lane.b32.xlu0 %v3854, 64
      %v4118 = vpop.permute.xlu0 %4117
      %4119 = vrot.lane.b32.xlu0 %v3855, 64
      %v4120 = vpop.permute.xlu0 %4119
      %4121 = vrot.lane.b32.xlu0 %v3856, 64
      %v4122 = vpop.permute.xlu0 %4121
      %4123 = vrot.lane.b32.xlu0 %v3857, 64
      %v4124 = vpop.permute.xlu0 %4123
      %4125 = vrot.lane.b32.xlu0 %v3858, 64
      %v4126 = vpop.permute.xlu0 %4125
      %4127 = vrot.lane.b32.xlu0 %v3859, 64
      %v4128 = vpop.permute.xlu0 %4127
      %4129 = vrot.lane.b32.xlu0 %v3860, 64
      %v4130 = vpop.permute.xlu0 %4129
      %4131 = vrot.lane.b32.xlu0 %v3861, 64
      %v4132 = vpop.permute.xlu0 %4131
      %4133 = vrot.lane.b32.xlu0 %v3862, 64
      %v4134 = vpop.permute.xlu0 %4133
      %4135 = vrot.lane.b32.xlu0 %v3863, 64
      %v4136 = vpop.permute.xlu0 %4135
      %4137 = vrot.lane.b32.xlu0 %v3864, 64
      %v4138 = vpop.permute.xlu0 %4137
      %4139 = vrot.lane.b32.xlu0 %v3865, 64
      %v4140 = vpop.permute.xlu0 %4139
      %4141 = vrot.lane.b32.xlu0 %v3866, 64
      %v4142 = vpop.permute.xlu0 %4141
      %4143 = vrot.lane.b32.xlu0 %v3867, 64
      %v4144 = vpop.permute.xlu0 %4143
      %4145 = vrot.lane.b32.xlu0 %v3868, 64
      %v4146 = vpop.permute.xlu0 %4145
      %4147 = vrot.lane.b32.xlu0 %v3869, 64
      %v4148 = vpop.permute.xlu0 %4147
      %4149 = vrot.lane.b32.xlu0 %v3870, 64
      %v4150 = vpop.permute.xlu0 %4149
      %4151 = vrot.lane.b32.xlu0 %v3871, 64
      %v4152 = vpop.permute.xlu0 %4151
      %4153 = vrot.lane.b32.xlu0 %v3872, 64
      %v4154 = vpop.permute.xlu0 %4153
      %4155 = vrot.lane.b32.xlu0 %v3873, 64
      %v4156 = vpop.permute.xlu0 %4155
      %4157 = vrot.lane.b32.xlu0 %v3874, 64
      %v4158 = vpop.permute.xlu0 %4157
      %4159 = vrot.lane.b32.xlu0 %v3875, 64
      %v4160 = vpop.permute.xlu0 %4159
      %4161 = vrot.lane.b32.xlu0 %v3876, 64
      %v4162 = vpop.permute.xlu0 %4161
      %4163 = vrot.lane.b32.xlu0 %v3877, 64
      %v4164 = vpop.permute.xlu0 %4163
      %4165 = vrot.lane.b32.xlu0 %v3878, 64
      %v4166 = vpop.permute.xlu0 %4165
      %v4199 = vmul.f32 %v3349, %v4104
      %v4200 = vmul.f32 %v3364, %v4106
      %v4201 = vmul.f32 %v3379, %v4108
      %v4202 = vmul.f32 %v3394, %v4110
      %v4203 = vmul.f32 %v3409, %v4112
      %v4204 = vmul.f32 %v3424, %v4114
      %v4205 = vmul.f32 %v3439, %v4116
      %v4206 = vmul.f32 %v3454, %v4118
      %v4207 = vmul.f32 %v3469, %v4120
      %v4208 = vmul.f32 %v3484, %v4122
      %v4209 = vmul.f32 %v3499, %v4124
      %v4210 = vmul.f32 %v3514, %v4126
      %v4211 = vmul.f32 %v3529, %v4128
      %v4212 = vmul.f32 %v3544, %v4130
      %v4213 = vmul.f32 %v3559, %v4132
      %v4214 = vmul.f32 %v3574, %v4134
      %v4215 = vmul.f32 %v3589, %v4136
      %v4216 = vmul.f32 %v3604, %v4138
      %v4217 = vmul.f32 %v3619, %v4140
      %v4218 = vmul.f32 %v3634, %v4142
      %v4219 = vmul.f32 %v3649, %v4144
      %v4220 = vmul.f32 %v3664, %v4146
      %v4221 = vmul.f32 %v3679, %v4148
      %v4222 = vmul.f32 %v3694, %v4150
      %v4223 = vmul.f32 %v3709, %v4152
      %v4224 = vmul.f32 %v3724, %v4154
      %v4225 = vmul.f32 %v3739, %v4156
      %v4226 = vmul.f32 %v3754, %v4158
      %v4227 = vmul.f32 %v3769, %v4160
      %v4228 = vmul.f32 %v3784, %v4162
      %v4229 = vmul.f32 %v3799, %v4164
      %v4230 = vmul.f32 %v3814, %v4166
      %4263 = vrot.lane.b32.xlu0 %v4199, 32
      %v4264 = vpop.permute.xlu0 %4263
      %4265 = vrot.lane.b32.xlu0 %v4200, 32
      %v4266 = vpop.permute.xlu0 %4265
      %4267 = vrot.lane.b32.xlu0 %v4201, 32
      %v4268 = vpop.permute.xlu0 %4267
      %4269 = vrot.lane.b32.xlu0 %v4202, 32
      %v4270 = vpop.permute.xlu0 %4269
      %4271 = vrot.lane.b32.xlu0 %v4203, 32
      %v4272 = vpop.permute.xlu0 %4271
      %4273 = vrot.lane.b32.xlu0 %v4204, 32
      %v4274 = vpop.permute.xlu0 %4273
      %4275 = vrot.lane.b32.xlu0 %v4205, 32
      %v4276 = vpop.permute.xlu0 %4275
      %4277 = vrot.lane.b32.xlu0 %v4206, 32
      %v4278 = vpop.permute.xlu0 %4277
      %4279 = vrot.lane.b32.xlu0 %v4207, 32
      %v4280 = vpop.permute.xlu0 %4279
      %4281 = vrot.lane.b32.xlu0 %v4208, 32
      %v4282 = vpop.permute.xlu0 %4281
      %4283 = vrot.lane.b32.xlu0 %v4209, 32
      %v4284 = vpop.permute.xlu0 %4283
      %4285 = vrot.lane.b32.xlu0 %v4210, 32
      %v4286 = vpop.permute.xlu0 %4285
      %4287 = vrot.lane.b32.xlu0 %v4211, 32
      %v4288 = vpop.permute.xlu0 %4287
      %4289 = vrot.lane.b32.xlu0 %v4212, 32
      %v4290 = vpop.permute.xlu0 %4289
      %4291 = vrot.lane.b32.xlu0 %v4213, 32
      %v4292 = vpop.permute.xlu0 %4291
      %4293 = vrot.lane.b32.xlu0 %v4214, 32
      %v4294 = vpop.permute.xlu0 %4293
      %4295 = vrot.lane.b32.xlu0 %v4215, 32
      %v4296 = vpop.permute.xlu0 %4295
      %4297 = vrot.lane.b32.xlu0 %v4216, 32
      %v4298 = vpop.permute.xlu0 %4297
      %4299 = vrot.lane.b32.xlu0 %v4217, 32
      %v4300 = vpop.permute.xlu0 %4299
      %4301 = vrot.lane.b32.xlu0 %v4218, 32
      %v4302 = vpop.permute.xlu0 %4301
      %4303 = vrot.lane.b32.xlu0 %v4219, 32
      %v4304 = vpop.permute.xlu0 %4303
      %4305 = vrot.lane.b32.xlu0 %v4220, 32
      %v4306 = vpop.permute.xlu0 %4305
      %4307 = vrot.lane.b32.xlu0 %v4221, 32
      %v4308 = vpop.permute.xlu0 %4307
      %4309 = vrot.lane.b32.xlu0 %v4222, 32
      %v4310 = vpop.permute.xlu0 %4309
      %4311 = vrot.lane.b32.xlu0 %v4223, 32
      %v4312 = vpop.permute.xlu0 %4311
      %4313 = vrot.lane.b32.xlu0 %v4224, 32
      %v4314 = vpop.permute.xlu0 %4313
      %4315 = vrot.lane.b32.xlu0 %v4225, 32
      %v4316 = vpop.permute.xlu0 %4315
      %4317 = vrot.lane.b32.xlu0 %v4226, 32
      %v4318 = vpop.permute.xlu0 %4317
      %4319 = vrot.lane.b32.xlu0 %v4227, 32
      %v4320 = vpop.permute.xlu0 %4319
      %4321 = vrot.lane.b32.xlu0 %v4228, 32
      %v4322 = vpop.permute.xlu0 %4321
      %4323 = vrot.lane.b32.xlu0 %v4229, 32
      %v4324 = vpop.permute.xlu0 %4323
      %4325 = vrot.lane.b32.xlu0 %v4230, 32
      %v4326 = vpop.permute.xlu0 %4325
      %v4359 = vadd.f32 %v4039, %v4264
      %v4360 = vadd.f32 %v4040, %v4266
      %v4361 = vadd.f32 %v4041, %v4268
      %v4362 = vadd.f32 %v4042, %v4270
      %v4363 = vadd.f32 %v4043, %v4272
      %v4364 = vadd.f32 %v4044, %v4274
      %v4365 = vadd.f32 %v4045, %v4276
      %v4366 = vadd.f32 %v4046, %v4278
      %v4367 = vadd.f32 %v4047, %v4280
      %v4368 = vadd.f32 %v4048, %v4282
      %v4369 = vadd.f32 %v4049, %v4284
      %v4370 = vadd.f32 %v4050, %v4286
      %v4371 = vadd.f32 %v4051, %v4288
      %v4372 = vadd.f32 %v4052, %v4290
      %v4373 = vadd.f32 %v4053, %v4292
      %v4374 = vadd.f32 %v4054, %v4294
      %v4375 = vadd.f32 %v4055, %v4296
      %v4376 = vadd.f32 %v4056, %v4298
      %v4377 = vadd.f32 %v4057, %v4300
      %v4378 = vadd.f32 %v4058, %v4302
      %v4379 = vadd.f32 %v4059, %v4304
      %v4380 = vadd.f32 %v4060, %v4306
      %v4381 = vadd.f32 %v4061, %v4308
      %v4382 = vadd.f32 %v4062, %v4310
      %v4383 = vadd.f32 %v4063, %v4312
      %v4384 = vadd.f32 %v4064, %v4314
      %v4385 = vadd.f32 %v4065, %v4316
      %v4386 = vadd.f32 %v4066, %v4318
      %v4387 = vadd.f32 %v4067, %v4320
      %v4388 = vadd.f32 %v4068, %v4322
      %v4389 = vadd.f32 %v4069, %v4324
      %v4390 = vadd.f32 %v4070, %v4326
      %4391 = vrot.lane.b32.xlu0 %v3847, 32
      %v4392 = vpop.permute.xlu0 %4391
      %4393 = vrot.lane.b32.xlu0 %v3848, 32
      %v4394 = vpop.permute.xlu0 %4393
      %4395 = vrot.lane.b32.xlu0 %v3849, 32
      %v4396 = vpop.permute.xlu0 %4395
      %4397 = vrot.lane.b32.xlu0 %v3850, 32
      %v4398 = vpop.permute.xlu0 %4397
      %4399 = vrot.lane.b32.xlu0 %v3851, 32
      %v4400 = vpop.permute.xlu0 %4399
      %4401 = vrot.lane.b32.xlu0 %v3852, 32
      %v4402 = vpop.permute.xlu0 %4401
      %4403 = vrot.lane.b32.xlu0 %v3853, 32
      %v4404 = vpop.permute.xlu0 %4403
      %4405 = vrot.lane.b32.xlu0 %v3854, 32
      %v4406 = vpop.permute.xlu0 %4405
      %4407 = vrot.lane.b32.xlu0 %v3855, 32
      %v4408 = vpop.permute.xlu0 %4407
      %4409 = vrot.lane.b32.xlu0 %v3856, 32
      %v4410 = vpop.permute.xlu0 %4409
      %4411 = vrot.lane.b32.xlu0 %v3857, 32
      %v4412 = vpop.permute.xlu0 %4411
      %4413 = vrot.lane.b32.xlu0 %v3858, 32
      %v4414 = vpop.permute.xlu0 %4413
      %4415 = vrot.lane.b32.xlu0 %v3859, 32
      %v4416 = vpop.permute.xlu0 %4415
      %4417 = vrot.lane.b32.xlu0 %v3860, 32
      %v4418 = vpop.permute.xlu0 %4417
      %4419 = vrot.lane.b32.xlu0 %v3861, 32
      %v4420 = vpop.permute.xlu0 %4419
      %4421 = vrot.lane.b32.xlu0 %v3862, 32
      %v4422 = vpop.permute.xlu0 %4421
      %4423 = vrot.lane.b32.xlu0 %v3863, 32
      %v4424 = vpop.permute.xlu0 %4423
      %4425 = vrot.lane.b32.xlu0 %v3864, 32
      %v4426 = vpop.permute.xlu0 %4425
      %4427 = vrot.lane.b32.xlu0 %v3865, 32
      %v4428 = vpop.permute.xlu0 %4427
      %4429 = vrot.lane.b32.xlu0 %v3866, 32
      %v4430 = vpop.permute.xlu0 %4429
      %4431 = vrot.lane.b32.xlu0 %v3867, 32
      %v4432 = vpop.permute.xlu0 %4431
      %4433 = vrot.lane.b32.xlu0 %v3868, 32
      %v4434 = vpop.permute.xlu0 %4433
      %4435 = vrot.lane.b32.xlu0 %v3869, 32
      %v4436 = vpop.permute.xlu0 %4435
      %4437 = vrot.lane.b32.xlu0 %v3870, 32
      %v4438 = vpop.permute.xlu0 %4437
      %4439 = vrot.lane.b32.xlu0 %v3871, 32
      %v4440 = vpop.permute.xlu0 %4439
      %4441 = vrot.lane.b32.xlu0 %v3872, 32
      %v4442 = vpop.permute.xlu0 %4441
      %4443 = vrot.lane.b32.xlu0 %v3873, 32
      %v4444 = vpop.permute.xlu0 %4443
      %4445 = vrot.lane.b32.xlu0 %v3874, 32
      %v4446 = vpop.permute.xlu0 %4445
      %4447 = vrot.lane.b32.xlu0 %v3875, 32
      %v4448 = vpop.permute.xlu0 %4447
      %4449 = vrot.lane.b32.xlu0 %v3876, 32
      %v4450 = vpop.permute.xlu0 %4449
      %4451 = vrot.lane.b32.xlu0 %v3877, 32
      %v4452 = vpop.permute.xlu0 %4451
      %4453 = vrot.lane.b32.xlu0 %v3878, 32
      %v4454 = vpop.permute.xlu0 %4453
      %v4487 = vmul.f32 %v3349, %v4392
      %v4488 = vmul.f32 %v3364, %v4394
      %v4489 = vmul.f32 %v3379, %v4396
      %v4490 = vmul.f32 %v3394, %v4398
      %v4491 = vmul.f32 %v3409, %v4400
      %v4492 = vmul.f32 %v3424, %v4402
      %v4493 = vmul.f32 %v3439, %v4404
      %v4494 = vmul.f32 %v3454, %v4406
      %v4495 = vmul.f32 %v3469, %v4408
      %v4496 = vmul.f32 %v3484, %v4410
      %v4497 = vmul.f32 %v3499, %v4412
      %v4498 = vmul.f32 %v3514, %v4414
      %v4499 = vmul.f32 %v3529, %v4416
      %v4500 = vmul.f32 %v3544, %v4418
      %v4501 = vmul.f32 %v3559, %v4420
      %v4502 = vmul.f32 %v3574, %v4422
      %v4503 = vmul.f32 %v3589, %v4424
      %v4504 = vmul.f32 %v3604, %v4426
      %v4505 = vmul.f32 %v3619, %v4428
      %v4506 = vmul.f32 %v3634, %v4430
      %v4507 = vmul.f32 %v3649, %v4432
      %v4508 = vmul.f32 %v3664, %v4434
      %v4509 = vmul.f32 %v3679, %v4436
      %v4510 = vmul.f32 %v3694, %v4438
      %v4511 = vmul.f32 %v3709, %v4440
      %v4512 = vmul.f32 %v3724, %v4442
      %v4513 = vmul.f32 %v3739, %v4444
      %v4514 = vmul.f32 %v3754, %v4446
      %v4515 = vmul.f32 %v3769, %v4448
      %v4516 = vmul.f32 %v3784, %v4450
      %v4517 = vmul.f32 %v3799, %v4452
      %v4518 = vmul.f32 %v3814, %v4454
      %4551 = vrot.lane.b32.xlu0 %v4487, 32
      %v4552 = vpop.permute.xlu0 %4551
      %4553 = vrot.lane.b32.xlu0 %v4488, 32
      %v4554 = vpop.permute.xlu0 %4553
      %4555 = vrot.lane.b32.xlu0 %v4489, 32
      %v4556 = vpop.permute.xlu0 %4555
      %4557 = vrot.lane.b32.xlu0 %v4490, 32
      %v4558 = vpop.permute.xlu0 %4557
      %4559 = vrot.lane.b32.xlu0 %v4491, 32
      %v4560 = vpop.permute.xlu0 %4559
      %4561 = vrot.lane.b32.xlu0 %v4492, 32
      %v4562 = vpop.permute.xlu0 %4561
      %4563 = vrot.lane.b32.xlu0 %v4493, 32
      %v4564 = vpop.permute.xlu0 %4563
      %4565 = vrot.lane.b32.xlu0 %v4494, 32
      %v4566 = vpop.permute.xlu0 %4565
      %4567 = vrot.lane.b32.xlu0 %v4495, 32
      %v4568 = vpop.permute.xlu0 %4567
      %4569 = vrot.lane.b32.xlu0 %v4496, 32
      %v4570 = vpop.permute.xlu0 %4569
      %4571 = vrot.lane.b32.xlu0 %v4497, 32
      %v4572 = vpop.permute.xlu0 %4571
      %4573 = vrot.lane.b32.xlu0 %v4498, 32
      %v4574 = vpop.permute.xlu0 %4573
      %4575 = vrot.lane.b32.xlu0 %v4499, 32
      %v4576 = vpop.permute.xlu0 %4575
      %4577 = vrot.lane.b32.xlu0 %v4500, 32
      %v4578 = vpop.permute.xlu0 %4577
      %4579 = vrot.lane.b32.xlu0 %v4501, 32
      %v4580 = vpop.permute.xlu0 %4579
      %4581 = vrot.lane.b32.xlu0 %v4502, 32
      %v4582 = vpop.permute.xlu0 %4581
      %4583 = vrot.lane.b32.xlu0 %v4503, 32
      %v4584 = vpop.permute.xlu0 %4583
      %4585 = vrot.lane.b32.xlu0 %v4504, 32
      %v4586 = vpop.permute.xlu0 %4585
      %4587 = vrot.lane.b32.xlu0 %v4505, 32
      %v4588 = vpop.permute.xlu0 %4587
      %4589 = vrot.lane.b32.xlu0 %v4506, 32
      %v4590 = vpop.permute.xlu0 %4589
      %4591 = vrot.lane.b32.xlu0 %v4507, 32
      %v4592 = vpop.permute.xlu0 %4591
      %4593 = vrot.lane.b32.xlu0 %v4508, 32
      %v4594 = vpop.permute.xlu0 %4593
      %4595 = vrot.lane.b32.xlu0 %v4509, 32
      %v4596 = vpop.permute.xlu0 %4595
      %4597 = vrot.lane.b32.xlu0 %v4510, 32
      %v4598 = vpop.permute.xlu0 %4597
      %4599 = vrot.lane.b32.xlu0 %v4511, 32
      %v4600 = vpop.permute.xlu0 %4599
      %4601 = vrot.lane.b32.xlu0 %v4512, 32
      %v4602 = vpop.permute.xlu0 %4601
      %4603 = vrot.lane.b32.xlu0 %v4513, 32
      %v4604 = vpop.permute.xlu0 %4603
      %4605 = vrot.lane.b32.xlu0 %v4514, 32
      %v4606 = vpop.permute.xlu0 %4605
      %4607 = vrot.lane.b32.xlu0 %v4515, 32
      %v4608 = vpop.permute.xlu0 %4607
      %4609 = vrot.lane.b32.xlu0 %v4516, 32
      %v4610 = vpop.permute.xlu0 %4609
      %4611 = vrot.lane.b32.xlu0 %v4517, 32
      %v4612 = vpop.permute.xlu0 %4611
      %4613 = vrot.lane.b32.xlu0 %v4518, 32
      %v4614 = vpop.permute.xlu0 %4613
      %vm4647 = vcmask 261120
      %v4648 = vsel %vm4647, %v4552, %v4359
      %v4649 = vsel %vm4647, %v4554, %v4360
      %v4650 = vsel %vm4647, %v4556, %v4361
      %v4651 = vsel %vm4647, %v4558, %v4362
      %v4652 = vsel %vm4647, %v4560, %v4363
      %v4653 = vsel %vm4647, %v4562, %v4364
      %v4654 = vsel %vm4647, %v4564, %v4365
      %v4655 = vsel %vm4647, %v4566, %v4366
      %v4656 = vsel %vm4647, %v4568, %v4367
      %v4657 = vsel %vm4647, %v4570, %v4368
      %v4658 = vsel %vm4647, %v4572, %v4369
      %v4659 = vsel %vm4647, %v4574, %v4370
      %v4660 = vsel %vm4647, %v4576, %v4371
      %v4661 = vsel %vm4647, %v4578, %v4372
      %v4662 = vsel %vm4647, %v4580, %v4373
      %v4663 = vsel %vm4647, %v4582, %v4374
      %v4664 = vsel %vm4647, %v4584, %v4375
      %v4665 = vsel %vm4647, %v4586, %v4376
      %v4666 = vsel %vm4647, %v4588, %v4377
      %v4667 = vsel %vm4647, %v4590, %v4378
      %v4668 = vsel %vm4647, %v4592, %v4379
      %v4669 = vsel %vm4647, %v4594, %v4380
      %v4670 = vsel %vm4647, %v4596, %v4381
      %v4671 = vsel %vm4647, %v4598, %v4382
      %v4672 = vsel %vm4647, %v4600, %v4383
      %v4673 = vsel %vm4647, %v4602, %v4384
      %v4674 = vsel %vm4647, %v4604, %v4385
      %v4675 = vsel %vm4647, %v4606, %v4386
      %v4676 = vsel %vm4647, %v4608, %v4387
      %v4677 = vsel %vm4647, %v4610, %v4388
      %v4678 = vsel %vm4647, %v4612, %v4389
      %v4679 = vsel %vm4647, %v4614, %v4390
      %vm4680 = vcmask 523264
      %4681 = vst.msk [vmem:[%s228] sm:$0xff] %vm4680, %v4648
      %4682 = vst.msk [vmem:[%s228 + $0x8] sm:$0xff] %vm4680, %v4649
      %4683 = vst.msk [vmem:[%s228 + $0x10] sm:$0xff] %vm4680, %v4650
      %4684 = vst.msk [vmem:[%s228 + $0x18] sm:$0xff] %vm4680, %v4651
      %4685 = vst.msk [vmem:[%s228 + $0x20] sm:$0xff] %vm4680, %v4652
      %4686 = vst.msk [vmem:[%s228 + $0x28] sm:$0xff] %vm4680, %v4653
      %4687 = vst.msk [vmem:[%s228 + $0x30] sm:$0xff] %vm4680, %v4654
      %4688 = vst.msk [vmem:[%s228 + $0x38] sm:$0xff] %vm4680, %v4655
      %4689 = vst.msk [vmem:[%s228 + $0x40] sm:$0xff] %vm4680, %v4656
      %4690 = vst.msk [vmem:[%s228 + $0x48] sm:$0xff] %vm4680, %v4657
      %4691 = vst.msk [vmem:[%s228 + $0x50] sm:$0xff] %vm4680, %v4658
      %4692 = vst.msk [vmem:[%s228 + $0x58] sm:$0xff] %vm4680, %v4659
      %4693 = vst.msk [vmem:[%s228 + $0x60] sm:$0xff] %vm4680, %v4660
      %4694 = vst.msk [vmem:[%s228 + $0x68] sm:$0xff] %vm4680, %v4661
      %4695 = vst.msk [vmem:[%s228 + $0x70] sm:$0xff] %vm4680, %v4662
      %4696 = vst.msk [vmem:[%s228 + $0x78] sm:$0xff] %vm4680, %v4663
      %4697 = vst.msk [vmem:[%s228 + $0x80] sm:$0xff] %vm4680, %v4664
      %4698 = vst.msk [vmem:[%s228 + $0x88] sm:$0xff] %vm4680, %v4665
      %4699 = vst.msk [vmem:[%s228 + $0x90] sm:$0xff] %vm4680, %v4666
      %4700 = vst.msk [vmem:[%s228 + $0x98] sm:$0xff] %vm4680, %v4667
      %4701 = vst.msk [vmem:[%s228 + $0xa0] sm:$0xff] %vm4680, %v4668
      %4702 = vst.msk [vmem:[%s228 + $0xa8] sm:$0xff] %vm4680, %v4669
      %4703 = vst.msk [vmem:[%s228 + $0xb0] sm:$0xff] %vm4680, %v4670
      %4704 = vst.msk [vmem:[%s228 + $0xb8] sm:$0xff] %vm4680, %v4671
      %4705 = vst.msk [vmem:[%s228 + $0xc0] sm:$0xff] %vm4680, %v4672
      %4706 = vst.msk [vmem:[%s228 + $0xc8] sm:$0xff] %vm4680, %v4673
      %4707 = vst.msk [vmem:[%s228 + $0xd0] sm:$0xff] %vm4680, %v4674
      %4708 = vst.msk [vmem:[%s228 + $0xd8] sm:$0xff] %vm4680, %v4675
      %4709 = vst.msk [vmem:[%s228 + $0xe0] sm:$0xff] %vm4680, %v4676
      %4710 = vst.msk [vmem:[%s228 + $0xe8] sm:$0xff] %vm4680, %v4677
      %4711 = vst.msk [vmem:[%s228 + $0xf0] sm:$0xff] %vm4680, %v4678
      %4712 = vst.msk [vmem:[%s228 + $0xf8] sm:$0xff] %vm4680, %v4679
      %s4713 = smul.u32 32, %s19
      %p4714 = scmp.lt.s32.totalorder %s18, 1
      %s4715 = scalar_select %p4714, %s18, 1
      %p4716 = scmp.lt.s32.totalorder %s4713, 31
      %s4717 = scalar_select %p4716, %s4713, 31
      %s4718 = smul.addr %s4715, 32
      %s4719 = sadd.s32 %s4717, %s4718
      %s4720 = smul.addr %s4719, 8
      %s4721 = scalar_lea.vmem %s3, %s4720
      // Predicated region
      $region33: #{convlstm_cell_forward.1} parent=31 // pred_check
        %p4722 = pneg %p121
      $region34: #{convlstm_cell_forward.1} parent=31 // pred_check_branch
        %4724 = sbr.rel (%p4722) target = $region36
      $region35: #{convlstm_cell_forward.1} parent=31 // pred_region
        %s4725 = smul.u32 32, %s19
      $region36: #{convlstm_cell_forward.1} parent=31 // pred_fallthru
        _
    $region32: #{convlstm_cell_forward.1} parent=5 // pred_fallthru
      _
    %p4726 = scmp.le.s32.totalorder 2, %s9
    // Predicated region
    $region37: #{convlstm_cell_forward.1} parent=5 // pred_check
      %p4727 = pneg %p4726
    $region38: #{convlstm_cell_forward.1} parent=5 // pred_check_branch
      %4729 = sbr.rel (%p4727) target = $region40
    $region39: #{convlstm_cell_forward.1} parent=5 // pred_region
      %s4730 = ssub.s32 %s9, 2
      // Predicated region
      $region41: #{convlstm_cell_forward.1} parent=39 // pred_check
        %p4731 = pneg %p127
      $region42: #{convlstm_cell_forward.1} parent=39 // pred_check_branch
        %4733 = sbr.rel (%p4731) target = $region44
      $region43: #{convlstm_cell_forward.1} parent=39 // pred_region
        %s4734 = smul.u32 32, %s21
        %p4735 = scmp.lt.s32.totalorder %s20, 1
        %s4736 = scalar_select %p4735, %s20, 1
        %p4737 = scmp.lt.s32.totalorder %s4734, 31
        %s4738 = scalar_select %p4737, %s4734, 31
        %s4739 = smul.addr %s4736, 32
        %s4740 = sadd.s32 %s4738, %s4739
        %s4741 = smul.addr %s4740, 8
        %s4742 = scalar_lea.vmem %s3, %s4741
      $region44: #{convlstm_cell_forward.1} parent=39 // pred_fallthru
        _
    $region40: #{convlstm_cell_forward.1} parent=5 // pred_fallthru
      _
  $region6: #{convlstm_cell_forward.1} parent=0 // loop_footer
    %s13 = sadd.s32 1, %s9
  $region7: #{convlstm_cell_forward.1} parent=0 // loop_footer_branch
    %8 = sbr.rel target = $region3
  $region8: #{convlstm_cell_forward.1} parent=0 // loop_exit
    _

</llo_original>
